<compile_context>
chip_gen: v7x
topology: tpu7x:2x2x1
jax: 0.10.0
libtpu: 0.0.40
codegen_flags: <defaults>
</compile_context>

<pallas_src>
import numpy as np
import jax
import jax.numpy as jnp
from jax import lax
from jax.experimental import pallas as pl
from jax.experimental.pallas import tpu as pltpu

F32 = jnp.float32
BF16 = jnp.bfloat16
EPS = 1e-5  # torch.nn.InstanceNorm2d default (affine=False, biased variance)


# ----------------------------------------------------------------------------
# Stacked 0/1 tap-selection matrices for a 3x3 conv with padding 1.
# Row t*HWo + o selects, for output position o, the input element of tap
# t = dy*3 + dx (zero row where the tap falls in the zero padding).
# ----------------------------------------------------------------------------
def _conv3x3_tap_matrices(H, W, stride):
    Ho, Wo = H // stride, W // stride
    mats = np.zeros((9, Ho * Wo, H * W), np.float32)
    for dy in range(3):
        for dx in range(3):
            t = dy * 3 + dx
            for i in range(Ho):
                for j in range(Wo):
                    r = stride * i + dy - 1
                    c = stride * j + dx - 1
                    if 0 <= r < H and 0 <= c < W:
                        mats[t, i * Wo + j, r * W + c] = 1.0
    return mats.reshape(9 * Ho * Wo, H * W)


def _instance_norm(y):
    # y: (HWo, BT*C) f32.  Each lane is one (sample, channel) pair -> per-lane stats over
    # the spatial (sublane) axis == InstanceNorm2d with biased variance, eps=1e-5.
    m = jnp.mean(y, axis=0, keepdims=True)
    v = jnp.mean(jnp.square(y - m), axis=0, keepdims=True)
    return (y - m) * lax.rsqrt(v + EPS)


def _tap_combine(d_all, w, hwo):
    """d_all: (9*hwo, C) f32 stacked per-tap selections; w: (9, C) f32 depthwise weights.
    Returns (sum_t d[t]*w[t], center tap d[4]).  Uses a tile-aligned reshape when hwo is a
    multiple of 8 (blocks 1-2), per-tap static slices otherwise (block 3, hwo=4)."""
    if hwo % 8 == 0:
        d = d_all.reshape(9, hwo, d_all.shape[-1])
        return jnp.sum(d * w[:, None, :], axis=0), d[4]
    acc = d_all[0:hwo] * w[0]
    center = None
    for t in range(1, 9):
        sl = d_all[t * hwo:(t + 1) * hwo]
        if t == 4:
            center = sl
        acc = acc + sl * w[t]
    return acc, center


# ----------------------------------------------------------------------------
# One SeparableResidualDownBlock (+ the SoftSensor-level ReLU) on a batch tile.
# feat: (HW, BT*Cin); everything stays in vregs/VMEM.
# ----------------------------------------------------------------------------
def _block(feat, t_ref, s_ref, dw1_ref, pw1_ref, dw2_ref, pw2_ref, dn_ref):
    hwo = t_ref.shape[0] // 9

    # dconv1: depthwise 3x3, stride 2, pad 1  == ONE (9*HWo, HW) matmul + VPU tap reduction
    d_all = jnp.dot(t_ref[...], feat.astype(BF16), preferred_element_type=F32)
    d1, center = _tap_combine(d_all, dw1_ref[...], hwo)   # center tap == stride-2 subsample

    # pconv1 + InstanceNorm + ReLU   (block-diagonal weight covers the whole batch tile)
    y = jnp.dot(d1.astype(BF16), pw1_ref[...], preferred_element_type=F32)
    y = jnp.maximum(_instance_norm(y), 0.0)

    # dconv2: depthwise 3x3, stride 1, pad 1  == ONE (9*HWo, HWo) matmul + VPU tap reduction
    s_all = jnp.dot(s_ref[...], y.astype(BF16), preferred_element_type=F32)
    d2, _ = _tap_combine(s_all, dw2_ref[...], hwo)

    # shortcut: 1x1 stride-2 conv on the (reused) center-tap subsample of the block input
    ident = jnp.dot(center.astype(BF16), dn_ref[...], preferred_element_type=F32)

    # pconv2 + InstanceNorm + residual add + SoftSensor-level ReLU
    z = jnp.dot(d2.astype(BF16), pw2_ref[...], preferred_element_type=F32)
    return jnp.maximum(_instance_norm(z) + ident, 0.0)


def _soft_sensor_kernel(x_ref, *refs):
    o_ref = refs[-1]
    hw_ref, hb_ref = refs[-3], refs[-2]

    feat = x_ref[...]                                   # (HW, BT*cin_p), bf16
    for i in range(3):
        feat = _block(feat, *refs[7 * i: 7 * i + 7])

    # AdaptiveAvgPool2d((1,1)) + flatten + fc1/fc2 (fused block-diagonal head matmul)
    pooled = jnp.mean(feat, axis=0, keepdims=True)      # (1, BT*4F), f32
    o_ref[...] = (jnp.dot(pooled.astype(BF16), hw_ref[...],
                          preferred_element_type=F32) + hb_ref[...])


def _block_diag(w, bt):
    # diag(w, w, ..., w)  -- maps lane segment b*Cin.. -> b*Cout.. independently per sample
    return jnp.kron(jnp.eye(bt, dtype=w.dtype), w)


# ----------------------------------------------------------------------------
# Forward pass
# ----------------------------------------------------------------------------
def soft_sensor_forward(x, params, batch_tile=2):
    # x: (B, n_frames, channels, H, W)  -- the PyTorch .view() merges frames & channels.
    B, Fr, C, H, W = x.shape
    assert H % 8 == 0 and W % 8 == 0, "three stride-2 stages need H, W divisible by 8"
    assert B % batch_tile == 0, "B must be a multiple of batch_tile"
    # TODO(synk): tap matrices are O((H*W)^2); beyond ~32x32 switch the depthwise convs to a
    # pltpu.roll + boundary-mask formulation (O(H*W) footprint) to avoid a VMEM blow-up.
    assert H * W <= 32 * 32, "tap-matrix depthwise formulation capped at 32x32 inputs"

    BT, G = batch_tile, B // batch_tile
    cin = Fr * C
    cin_p = ((cin + 7) // 8) * 8                        # 15 -> 16 (lane-friendly)

    # JAX-side layout glue: merge frames/channels, zero-pad cin, fold the batch tile into
    # the lane axis: per grid step the input is (H*W, BT*cin_p).
    xr = x.reshape(B, cin, H, W)
    xr = jnp.pad(xr, ((0, 0), (0, cin_p - cin), (0, 0), (0, 0)))
    xr = jnp.transpose(xr, (0, 2, 3, 1)).reshape(G, BT, H * W, cin_p)
    xr = jnp.transpose(xr, (0, 2, 1, 3)).reshape(G, H * W, BT * cin_p).astype(BF16)

    n1 = params["fc1_w"].shape[1]
    n2 = params["fc2_w"].shape[1]
    a_raw = n1 + n2
    a_pad = ((a_raw + 7) // 8) * 8                      # 29 -> 32 (unmasked head store)

    args = [xr]
    in_specs = [pl.BlockSpec((None, H * W, BT * cin_p), lambda g: (g, 0, 0))]

    def add_const(arr, dtype):
        arr = jnp.asarray(arr, dtype)
        nd = arr.ndim
        # Constant index_map -> fetched once; < 1 MiB total in bf16 so default buffering
        # is kept (pl.Buffered(1) would remove the duplicate buffer on newer JAX).
        in_specs.append(pl.BlockSpec(arr.shape, lambda g, nd=nd: (0,) * nd))
        args.append(arr)

    flops = 0
    h, w = H, W
    ci_p = cin_p
    for i in range(3):
        p = params[f"block{i + 1}"]
        ci, co = p["pw1"].shape
        ho, wo = h // 2, w // 2
        pad_ci = ci_p - ci

        add_const(_conv3x3_tap_matrices(h, w, 2), BF16)                        # T_all
        add_const(_conv3x3_tap_matrices(ho, wo, 1), BF16)                      # S_all
        add_const(jnp.tile(jnp.pad(p["dw1"], ((0, 0), (0, pad_ci))), (1, BT)), F32)
        add_const(_block_diag(jnp.pad(p["pw1"], ((0, pad_ci), (0, 0))), BT), BF16)
        add_const(jnp.tile(p["dw2"], (1, BT)), F32)
        add_const(_block_diag(p["pw2"], BT), BF16)
        add_const(_block_diag(jnp.pad(p["down"], ((0, pad_ci), (0, 0))), BT), BF16)

        hwo, hw = ho * wo, h * w
        flops += 2 * 9 * hwo * hw * BT * ci_p               # dconv1 tap matmul
        flops += 2 * 9 * hwo * hwo * BT * co                # dconv2 tap matmul
        flops += 2 * hwo * (BT * ci_p) * (BT * co) * 2      # pconv1 + downsample
        flops += 2 * hwo * (BT * co) * (BT * co)            # pconv2
        h, w, ci_p = ho, wo, co

    cf = ci_p
    head_w = jnp.pad(jnp.concatenate([params["fc1_w"], params["fc2_w"]], axis=1),
                     ((0, 0), (0, a_pad - a_raw)))
    head_b = jnp.pad(jnp.concatenate([params["fc1_b"], params["fc2_b"]], axis=1),
                     ((0, 0), (0, a_pad - a_raw)))
    add_const(_block_diag(head_w, BT), BF16)
    add_const(jnp.tile(head_b, (1, BT)), F32)
    flops += 2 * (BT * cf) * (BT * a_pad)
    flops *= G

    bytes_accessed = int(sum(int(np.prod(a.shape)) * jnp.dtype(a.dtype).itemsize
                             for a in args) + G * BT * a_pad * 4)
    cost = pl.CostEstimate(flops=int(flops),
                           transcendentals=int(G * 6 * BT * 4 * 32),
                           bytes_accessed=bytes_accessed)

    out = pl.pallas_call(
        _soft_sensor_kernel,
        out_shape=jax.ShapeDtypeStruct((G, 1, BT * a_pad), F32),
        grid=(G,),
        in_specs=in_specs,
        out_specs=pl.BlockSpec((None, 1, BT * a_pad), lambda g: (g, 0, 0)),
        compiler_params=pltpu.CompilerParams(dimension_semantics=("parallel",)),
        cost_estimate=cost,
    )(*args)

    head = out.reshape(B, a_pad)
    return head[:, :n1], head[:, n1:n1 + n2]


# ----------------------------------------------------------------------------
# Parameters (same layout as the PyTorch module; dw* are the 3x3 kernels flattened
# row-major per channel, pw*/down/fc* are (in, out) matrices).
# ----------------------------------------------------------------------------
def init_params(key, channels=3, features=32, n_frames=5, n_actions=27):
    cin = channels * n_frames
    dims = [(cin, features), (features, 2 * features), (2 * features, 4 * features)]
    params = {}
    for i, (ci, co) in enumerate(dims, start=1):
        key, k0, k1, k2, k3, k4 = jax.random.split(key, 6)
        params[f"block{i}"] = {
            "dw1": 0.2 * jax.random.normal(k0, (9, ci), F32),
            "pw1": jax.random.normal(k1, (ci, co), F32) / jnp.sqrt(ci),
            "dw2": 0.2 * jax.random.normal(k2, (9, co), F32),
            "pw2": jax.random.normal(k3, (co, co), F32) / jnp.sqrt(co),
            "down": jax.random.normal(k4, (ci, co), F32) / jnp.sqrt(ci),
        }
    Cf = 4 * features
    key, k1, k2, k3, k4 = jax.random.split(key, 5)
    params["fc1_w"] = jax.random.normal(k1, (Cf, n_actions), F32) / jnp.sqrt(Cf)
    params["fc1_b"] = 0.01 * jax.random.normal(k2, (1, n_actions), F32)
    params["fc2_w"] = jax.random.normal(k3, (Cf, 2), F32) / jnp.sqrt(Cf)
    params["fc2_b"] = 0.01 * jax.random.normal(k4, (1, 2), F32)
    return params


if __name__ == "__main__":
    key = jax.random.PRNGKey(0)
    pkey, xkey = jax.random.split(key)
    params = init_params(pkey, channels=3, features=32, n_frames=5, n_actions=27)
    # (batch=4, n_frames=5, channels=3, H=16, W=16); batch_tile=2 -> grid=(2,) parallel steps
    x = jax.random.normal(xkey, (4, 5, 3, 16, 16), F32)
    out1, out2 = jax.jit(soft_sensor_forward)(x, params)
    jax.block_until_ready((out1, out2))
    assert out1.shape == (4, 27) and out2.shape == (4, 2)
    assert jnp.all(jnp.isfinite(out1)) and jnp.all(jnp.isfinite(out2))
    print("KERNEL_OK")
</pallas_src>

<mosaic_0001>
module attributes {stable_mosaic.version = 11 : i64} {
  func.func @_soft_sensor_kernel(%arg0: i32, %arg1: memref<1x256x32xbf16, #tpu.memory_space<vmem>>, %arg2: memref<576x256xbf16, #tpu.memory_space<vmem>>, %arg3: memref<576x64xbf16, #tpu.memory_space<vmem>>, %arg4: memref<9x32xf32, #tpu.memory_space<vmem>>, %arg5: memref<32x64xbf16, #tpu.memory_space<vmem>>, %arg6: memref<9x64xf32, #tpu.memory_space<vmem>>, %arg7: memref<64x64xbf16, #tpu.memory_space<vmem>>, %arg8: memref<32x64xbf16, #tpu.memory_space<vmem>>, %arg9: memref<144x64xbf16, #tpu.memory_space<vmem>>, %arg10: memref<144x16xbf16, #tpu.memory_space<vmem>>, %arg11: memref<9x64xf32, #tpu.memory_space<vmem>>, %arg12: memref<64x128xbf16, #tpu.memory_space<vmem>>, %arg13: memref<9x128xf32, #tpu.memory_space<vmem>>, %arg14: memref<128x128xbf16, #tpu.memory_space<vmem>>, %arg15: memref<64x128xbf16, #tpu.memory_space<vmem>>, %arg16: memref<36x16xbf16, #tpu.memory_space<vmem>>, %arg17: memref<36x4xbf16, #tpu.memory_space<vmem>>, %arg18: memref<9x128xf32, #tpu.memory_space<vmem>>, %arg19: memref<128x256xbf16, #tpu.memory_space<vmem>>, %arg20: memref<9x256xf32, #tpu.memory_space<vmem>>, %arg21: memref<256x256xbf16, #tpu.memory_space<vmem>>, %arg22: memref<128x256xbf16, #tpu.memory_space<vmem>>, %arg23: memref<256x64xbf16, #tpu.memory_space<vmem>>, %arg24: memref<1x64xf32, #tpu.memory_space<vmem>>, %arg25: memref<1x1x64xf32, #tpu.memory_space<vmem>>) attributes {dimension_semantics = [#tpu.dimension_semantics<parallel>], iteration_bounds = array<i64: 2>, scalar_prefetch = 0 : i64, scratch_operands = 0 : i64, tpu.core_type = #tpu.core_type<tc>, window_params = [{transform_indices = @transform_0, window_bounds = array<i64: 1, 256, 32>}, {pipeline_mode = #tpu.pipeline_mode<synchronous>, transform_indices = @transform_1, window_bounds = array<i64: 576, 256>}, {pipeline_mode = #tpu.pipeline_mode<synchronous>, transform_indices = @transform_2, window_bounds = array<i64: 576, 64>}, {pipeline_mode = #tpu.pipeline_mode<synchronous>, transform_indices = @transform_3, window_bounds = array<i64: 9, 32>}, {pipeline_mode = #tpu.pipeline_mode<synchronous>, transform_indices = @transform_4, window_bounds = array<i64: 32, 64>}, {pipeline_mode = #tpu.pipeline_mode<synchronous>, transform_indices = @transform_5, window_bounds = array<i64: 9, 64>}, {pipeline_mode = #tpu.pipeline_mode<synchronous>, transform_indices = @transform_6, window_bounds = array<i64: 64, 64>}, {pipeline_mode = #tpu.pipeline_mode<synchronous>, transform_indices = @transform_7, window_bounds = array<i64: 32, 64>}, {pipeline_mode = #tpu.pipeline_mode<synchronous>, transform_indices = @transform_8, window_bounds = array<i64: 144, 64>}, {pipeline_mode = #tpu.pipeline_mode<synchronous>, transform_indices = @transform_9, window_bounds = array<i64: 144, 16>}, {pipeline_mode = #tpu.pipeline_mode<synchronous>, transform_indices = @transform_10, window_bounds = array<i64: 9, 64>}, {pipeline_mode = #tpu.pipeline_mode<synchronous>, transform_indices = @transform_11, window_bounds = array<i64: 64, 128>}, {pipeline_mode = #tpu.pipeline_mode<synchronous>, transform_indices = @transform_12, window_bounds = array<i64: 9, 128>}, {pipeline_mode = #tpu.pipeline_mode<synchronous>, transform_indices = @transform_13, window_bounds = array<i64: 128, 128>}, {pipeline_mode = #tpu.pipeline_mode<synchronous>, transform_indices = @transform_14, window_bounds = array<i64: 64, 128>}, {pipeline_mode = #tpu.pipeline_mode<synchronous>, transform_indices = @transform_15, window_bounds = array<i64: 36, 16>}, {pipeline_mode = #tpu.pipeline_mode<synchronous>, transform_indices = @transform_16, window_bounds = array<i64: 36, 4>}, {pipeline_mode = #tpu.pipeline_mode<synchronous>, transform_indices = @transform_17, window_bounds = array<i64: 9, 128>}, {pipeline_mode = #tpu.pipeline_mode<synchronous>, transform_indices = @transform_18, window_bounds = array<i64: 128, 256>}, {pipeline_mode = #tpu.pipeline_mode<synchronous>, transform_indices = @transform_19, window_bounds = array<i64: 9, 256>}, {pipeline_mode = #tpu.pipeline_mode<synchronous>, transform_indices = @transform_20, window_bounds = array<i64: 256, 256>}, {pipeline_mode = #tpu.pipeline_mode<synchronous>, transform_indices = @transform_21, window_bounds = array<i64: 128, 256>}, {pipeline_mode = #tpu.pipeline_mode<synchronous>, transform_indices = @transform_22, window_bounds = array<i64: 256, 64>}, {pipeline_mode = #tpu.pipeline_mode<synchronous>, transform_indices = @transform_23, window_bounds = array<i64: 1, 64>}, {transform_indices = @transform_24, window_bounds = array<i64: 1, 1, 64>}]} {
    %c0 = arith.constant 0 : index
    %c0_0 = arith.constant 0 : index
    %c0_1 = arith.constant 0 : index
    %0 = vector.load %arg1[%c0, %c0_0, %c0_1] : memref<1x256x32xbf16, #tpu.memory_space<vmem>>, vector<1x256x32xbf16>
    %1 = vector.shape_cast %0 : vector<1x256x32xbf16> to vector<256x32xbf16>
    %c0_2 = arith.constant 0 : index
    %c0_3 = arith.constant 0 : index
    %2 = vector.load %arg2[%c0_2, %c0_3] : memref<576x256xbf16, #tpu.memory_space<vmem>>, vector<576x256xbf16>
    %cst = arith.constant dense<0.000000e+00> : vector<576x32xf32>
    %3 = tpu.matmul %2, %1, %cst {dimension_numbers = #tpu.dot_dimension_numbers<[1], [0], [0], [1], [0, 0, 1, 1], [], []>} : vector<576x256xbf16>, vector<256x32xbf16>, vector<576x32xf32> -> vector<576x32xf32>
    %c0_4 = arith.constant 0 : index
    %c0_5 = arith.constant 0 : index
    %4 = vector.load %arg4[%c0_4, %c0_5] : memref<9x32xf32, #tpu.memory_space<vmem>>, vector<9x32xf32>
    %5 = vector.shape_cast %3 : vector<576x32xf32> to vector<9x64x32xf32>
    %6 = vector.shape_cast %4 : vector<9x32xf32> to vector<9x1x32xf32>
    %7 = vector.broadcast %6 : vector<9x1x32xf32> to vector<9x64x32xf32>
    %8 = arith.mulf %5, %7 : vector<9x64x32xf32>
    %cst_6 = arith.constant dense<0.000000e+00> : vector<64x32xf32>
    %9 = vector.multi_reduction <add>, %8, %cst_6 [0] : vector<9x64x32xf32> to vector<64x32xf32>
    %10 = vector.extract_strided_slice %5 {offsets = [4, 0, 0], sizes = [1, 64, 32], strides = [1, 1, 1]} : vector<9x64x32xf32> to vector<1x64x32xf32>
    %11 = vector.shape_cast %10 : vector<1x64x32xf32> to vector<64x32xf32>
    %12 = arith.truncf %9 : vector<64x32xf32> to vector<64x32xbf16>
    %c0_7 = arith.constant 0 : index
    %c0_8 = arith.constant 0 : index
    %13 = vector.load %arg5[%c0_7, %c0_8] : memref<32x64xbf16, #tpu.memory_space<vmem>>, vector<32x64xbf16>
    %cst_9 = arith.constant dense<0.000000e+00> : vector<64x64xf32>
    %14 = tpu.matmul %12, %13, %cst_9 {dimension_numbers = #tpu.dot_dimension_numbers<[1], [0], [0], [1], [0, 0, 1, 1], [], []>} : vector<64x32xbf16>, vector<32x64xbf16>, vector<64x64xf32> -> vector<64x64xf32>
    %cst_10 = arith.constant dense<0.000000e+00> : vector<64xf32>
    %15 = vector.multi_reduction <add>, %14, %cst_10 [0] : vector<64x64xf32> to vector<64xf32>
    %16 = vector.shape_cast %15 : vector<64xf32> to vector<1x64xf32>
    %cst_11 = arith.constant 6.400000e+01 : f32
    %17 = vector.broadcast %cst_11 : f32 to vector<1x64xf32>
    %18 = arith.divf %16, %17 : vector<1x64xf32>
    %19 = vector.broadcast %18 : vector<1x64xf32> to vector<64x64xf32>
    %20 = arith.subf %14, %19 : vector<64x64xf32>
    %21 = arith.mulf %20, %20 : vector<64x64xf32>
    %cst_12 = arith.constant dense<0.000000e+00> : vector<64xf32>
    %22 = vector.multi_reduction <add>, %21, %cst_12 [0] : vector<64x64xf32> to vector<64xf32>
    %23 = vector.shape_cast %22 : vector<64xf32> to vector<1x64xf32>
    %cst_13 = arith.constant 6.400000e+01 : f32
    %24 = vector.broadcast %cst_13 : f32 to vector<1x64xf32>
    %25 = arith.divf %23, %24 : vector<1x64xf32>
    %26 = vector.broadcast %18 : vector<1x64xf32> to vector<64x64xf32>
    %27 = arith.subf %14, %26 : vector<64x64xf32>
    %cst_14 = arith.constant 9.99999974E-6 : f32
    %28 = vector.broadcast %cst_14 : f32 to vector<1x64xf32>
    %29 = arith.addf %25, %28 : vector<1x64xf32>
    %30 = math.rsqrt %29 : vector<1x64xf32>
    %31 = vector.broadcast %30 : vector<1x64xf32> to vector<64x64xf32>
    %32 = arith.mulf %27, %31 : vector<64x64xf32>
    %cst_15 = arith.constant 0.000000e+00 : f32
    %33 = vector.broadcast %cst_15 : f32 to vector<64x64xf32>
    %34 = arith.maximumf %32, %33 : vector<64x64xf32>
    %c0_16 = arith.constant 0 : index
    %c0_17 = arith.constant 0 : index
    %35 = vector.load %arg3[%c0_16, %c0_17] : memref<576x64xbf16, #tpu.memory_space<vmem>>, vector<576x64xbf16>
    %36 = arith.truncf %34 : vector<64x64xf32> to vector<64x64xbf16>
    %cst_18 = arith.constant dense<0.000000e+00> : vector<576x64xf32>
    %37 = tpu.matmul %35, %36, %cst_18 {dimension_numbers = #tpu.dot_dimension_numbers<[1], [0], [0], [1], [0, 0, 1, 1], [], []>} : vector<576x64xbf16>, vector<64x64xbf16>, vector<576x64xf32> -> vector<576x64xf32>
    %c0_19 = arith.constant 0 : index
    %c0_20 = arith.constant 0 : index
    %38 = vector.load %arg6[%c0_19, %c0_20] : memref<9x64xf32, #tpu.memory_space<vmem>>, vector<9x64xf32>
    %39 = vector.shape_cast %37 : vector<576x64xf32> to vector<9x64x64xf32>
    %40 = vector.shape_cast %38 : vector<9x64xf32> to vector<9x1x64xf32>
    %41 = vector.broadcast %40 : vector<9x1x64xf32> to vector<9x64x64xf32>
    %42 = arith.mulf %39, %41 : vector<9x64x64xf32>
    %cst_21 = arith.constant dense<0.000000e+00> : vector<64x64xf32>
    %43 = vector.multi_reduction <add>, %42, %cst_21 [0] : vector<9x64x64xf32> to vector<64x64xf32>
    %44 = arith.truncf %11 : vector<64x32xf32> to vector<64x32xbf16>
    %c0_22 = arith.constant 0 : index
    %c0_23 = arith.constant 0 : index
    %45 = vector.load %arg8[%c0_22, %c0_23] : memref<32x64xbf16, #tpu.memory_space<vmem>>, vector<32x64xbf16>
    %cst_24 = arith.constant dense<0.000000e+00> : vector<64x64xf32>
    %46 = tpu.matmul %44, %45, %cst_24 {dimension_numbers = #tpu.dot_dimension_numbers<[1], [0], [0], [1], [0, 0, 1, 1], [], []>} : vector<64x32xbf16>, vector<32x64xbf16>, vector<64x64xf32> -> vector<64x64xf32>
    %47 = arith.truncf %43 : vector<64x64xf32> to vector<64x64xbf16>
    %c0_25 = arith.constant 0 : index
    %c0_26 = arith.constant 0 : index
    %48 = vector.load %arg7[%c0_25, %c0_26] : memref<64x64xbf16, #tpu.memory_space<vmem>>, vector<64x64xbf16>
    %cst_27 = arith.constant dense<0.000000e+00> : vector<64x64xf32>
    %49 = tpu.matmul %47, %48, %cst_27 {dimension_numbers = #tpu.dot_dimension_numbers<[1], [0], [0], [1], [0, 0, 1, 1], [], []>} : vector<64x64xbf16>, vector<64x64xbf16>, vector<64x64xf32> -> vector<64x64xf32>
    %cst_28 = arith.constant dense<0.000000e+00> : vector<64xf32>
    %50 = vector.multi_reduction <add>, %49, %cst_28 [0] : vector<64x64xf32> to vector<64xf32>
    %51 = vector.shape_cast %50 : vector<64xf32> to vector<1x64xf32>
    %cst_29 = arith.constant 6.400000e+01 : f32
    %52 = vector.broadcast %cst_29 : f32 to vector<1x64xf32>
    %53 = arith.divf %51, %52 : vector<1x64xf32>
    %54 = vector.broadcast %53 : vector<1x64xf32> to vector<64x64xf32>
    %55 = arith.subf %49, %54 : vector<64x64xf32>
    %56 = arith.mulf %55, %55 : vector<64x64xf32>
    %cst_30 = arith.constant dense<0.000000e+00> : vector<64xf32>
    %57 = vector.multi_reduction <add>, %56, %cst_30 [0] : vector<64x64xf32> to vector<64xf32>
    %58 = vector.shape_cast %57 : vector<64xf32> to vector<1x64xf32>
    %cst_31 = arith.constant 6.400000e+01 : f32
    %59 = vector.broadcast %cst_31 : f32 to vector<1x64xf32>
    %60 = arith.divf %58, %59 : vector<1x64xf32>
    %61 = vector.broadcast %53 : vector<1x64xf32> to vector<64x64xf32>
    %62 = arith.subf %49, %61 : vector<64x64xf32>
    %cst_32 = arith.constant 9.99999974E-6 : f32
    %63 = vector.broadcast %cst_32 : f32 to vector<1x64xf32>
    %64 = arith.addf %60, %63 : vector<1x64xf32>
    %65 = math.rsqrt %64 : vector<1x64xf32>
    %66 = vector.broadcast %65 : vector<1x64xf32> to vector<64x64xf32>
    %67 = arith.mulf %62, %66 : vector<64x64xf32>
    %68 = arith.addf %67, %46 : vector<64x64xf32>
    %cst_33 = arith.constant 0.000000e+00 : f32
    %69 = vector.broadcast %cst_33 : f32 to vector<64x64xf32>
    %70 = arith.maximumf %68, %69 : vector<64x64xf32>
    %c0_34 = arith.constant 0 : index
    %c0_35 = arith.constant 0 : index
    %71 = vector.load %arg9[%c0_34, %c0_35] : memref<144x64xbf16, #tpu.memory_space<vmem>>, vector<144x64xbf16>
    %72 = arith.truncf %70 : vector<64x64xf32> to vector<64x64xbf16>
    %cst_36 = arith.constant dense<0.000000e+00> : vector<144x64xf32>
    %73 = tpu.matmul %71, %72, %cst_36 {dimension_numbers = #tpu.dot_dimension_numbers<[1], [0], [0], [1], [0, 0, 1, 1], [], []>} : vector<144x64xbf16>, vector<64x64xbf16>, vector<144x64xf32> -> vector<144x64xf32>
    %c0_37 = arith.constant 0 : index
    %c0_38 = arith.constant 0 : index
    %74 = vector.load %arg11[%c0_37, %c0_38] : memref<9x64xf32, #tpu.memory_space<vmem>>, vector<9x64xf32>
    %75 = vector.shape_cast %73 : vector<144x64xf32> to vector<9x16x64xf32>
    %76 = vector.shape_cast %74 : vector<9x64xf32> to vector<9x1x64xf32>
    %77 = vector.broadcast %76 : vector<9x1x64xf32> to vector<9x16x64xf32>
    %78 = arith.mulf %75, %77 : vector<9x16x64xf32>
    %cst_39 = arith.constant dense<0.000000e+00> : vector<16x64xf32>
    %79 = vector.multi_reduction <add>, %78, %cst_39 [0] : vector<9x16x64xf32> to vector<16x64xf32>
    %80 = vector.extract_strided_slice %75 {offsets = [4, 0, 0], sizes = [1, 16, 64], strides = [1, 1, 1]} : vector<9x16x64xf32> to vector<1x16x64xf32>
    %81 = vector.shape_cast %80 : vector<1x16x64xf32> to vector<16x64xf32>
    %82 = arith.truncf %79 : vector<16x64xf32> to vector<16x64xbf16>
    %c0_40 = arith.constant 0 : index
    %c0_41 = arith.constant 0 : index
    %83 = vector.load %arg12[%c0_40, %c0_41] : memref<64x128xbf16, #tpu.memory_space<vmem>>, vector<64x128xbf16>
    %cst_42 = arith.constant dense<0.000000e+00> : vector<16x128xf32>
    %84 = tpu.matmul %82, %83, %cst_42 {dimension_numbers = #tpu.dot_dimension_numbers<[1], [0], [0], [1], [0, 0, 1, 1], [], []>} : vector<16x64xbf16>, vector<64x128xbf16>, vector<16x128xf32> -> vector<16x128xf32>
    %cst_43 = arith.constant dense<0.000000e+00> : vector<128xf32>
    %85 = vector.multi_reduction <add>, %84, %cst_43 [0] : vector<16x128xf32> to vector<128xf32>
    %86 = vector.shape_cast %85 : vector<128xf32> to vector<1x128xf32>
    %cst_44 = arith.constant 1.600000e+01 : f32
    %87 = vector.broadcast %cst_44 : f32 to vector<1x128xf32>
    %88 = arith.divf %86, %87 : vector<1x128xf32>
    %89 = vector.broadcast %88 : vector<1x128xf32> to vector<16x128xf32>
    %90 = arith.subf %84, %89 : vector<16x128xf32>
    %91 = arith.mulf %90, %90 : vector<16x128xf32>
    %cst_45 = arith.constant dense<0.000000e+00> : vector<128xf32>
    %92 = vector.multi_reduction <add>, %91, %cst_45 [0] : vector<16x128xf32> to vector<128xf32>
    %93 = vector.shape_cast %92 : vector<128xf32> to vector<1x128xf32>
    %cst_46 = arith.constant 1.600000e+01 : f32
    %94 = vector.broadcast %cst_46 : f32 to vector<1x128xf32>
    %95 = arith.divf %93, %94 : vector<1x128xf32>
    %96 = vector.broadcast %88 : vector<1x128xf32> to vector<16x128xf32>
    %97 = arith.subf %84, %96 : vector<16x128xf32>
    %cst_47 = arith.constant 9.99999974E-6 : f32
    %98 = vector.broadcast %cst_47 : f32 to vector<1x128xf32>
    %99 = arith.addf %95, %98 : vector<1x128xf32>
    %100 = math.rsqrt %99 : vector<1x128xf32>
    %101 = vector.broadcast %100 : vector<1x128xf32> to vector<16x128xf32>
    %102 = arith.mulf %97, %101 : vector<16x128xf32>
    %cst_48 = arith.constant 0.000000e+00 : f32
    %103 = vector.broadcast %cst_48 : f32 to vector<16x128xf32>
    %104 = arith.maximumf %102, %103 : vector<16x128xf32>
    %c0_49 = arith.constant 0 : index
    %c0_50 = arith.constant 0 : index
    %105 = vector.load %arg10[%c0_49, %c0_50] : memref<144x16xbf16, #tpu.memory_space<vmem>>, vector<144x16xbf16>
    %106 = arith.truncf %104 : vector<16x128xf32> to vector<16x128xbf16>
    %cst_51 = arith.constant dense<0.000000e+00> : vector<144x128xf32>
    %107 = tpu.matmul %105, %106, %cst_51 {dimension_numbers = #tpu.dot_dimension_numbers<[1], [0], [0], [1], [0, 0, 1, 1], [], []>} : vector<144x16xbf16>, vector<16x128xbf16>, vector<144x128xf32> -> vector<144x128xf32>
    %c0_52 = arith.constant 0 : index
    %c0_53 = arith.constant 0 : index
    %108 = vector.load %arg13[%c0_52, %c0_53] : memref<9x128xf32, #tpu.memory_space<vmem>>, vector<9x128xf32>
    %109 = vector.shape_cast %107 : vector<144x128xf32> to vector<9x16x128xf32>
    %110 = vector.shape_cast %108 : vector<9x128xf32> to vector<9x1x128xf32>
    %111 = vector.broadcast %110 : vector<9x1x128xf32> to vector<9x16x128xf32>
    %112 = arith.mulf %109, %111 : vector<9x16x128xf32>
    %cst_54 = arith.constant dense<0.000000e+00> : vector<16x128xf32>
    %113 = vector.multi_reduction <add>, %112, %cst_54 [0] : vector<9x16x128xf32> to vector<16x128xf32>
    %114 = arith.truncf %81 : vector<16x64xf32> to vector<16x64xbf16>
    %c0_55 = arith.constant 0 : index
    %c0_56 = arith.constant 0 : index
    %115 = vector.load %arg15[%c0_55, %c0_56] : memref<64x128xbf16, #tpu.memory_space<vmem>>, vector<64x128xbf16>
    %cst_57 = arith.constant dense<0.000000e+00> : vector<16x128xf32>
    %116 = tpu.matmul %114, %115, %cst_57 {dimension_numbers = #tpu.dot_dimension_numbers<[1], [0], [0], [1], [0, 0, 1, 1], [], []>} : vector<16x64xbf16>, vector<64x128xbf16>, vector<16x128xf32> -> vector<16x128xf32>
    %117 = arith.truncf %113 : vector<16x128xf32> to vector<16x128xbf16>
    %c0_58 = arith.constant 0 : index
    %c0_59 = arith.constant 0 : index
    %118 = vector.load %arg14[%c0_58, %c0_59] : memref<128x128xbf16, #tpu.memory_space<vmem>>, vector<128x128xbf16>
    %cst_60 = arith.constant dense<0.000000e+00> : vector<16x128xf32>
    %119 = tpu.matmul %117, %118, %cst_60 {dimension_numbers = #tpu.dot_dimension_numbers<[1], [0], [0], [1], [0, 0, 1, 1], [], []>} : vector<16x128xbf16>, vector<128x128xbf16>, vector<16x128xf32> -> vector<16x128xf32>
    %cst_61 = arith.constant dense<0.000000e+00> : vector<128xf32>
    %120 = vector.multi_reduction <add>, %119, %cst_61 [0] : vector<16x128xf32> to vector<128xf32>
    %121 = vector.shape_cast %120 : vector<128xf32> to vector<1x128xf32>
    %cst_62 = arith.constant 1.600000e+01 : f32
    %122 = vector.broadcast %cst_62 : f32 to vector<1x128xf32>
    %123 = arith.divf %121, %122 : vector<1x128xf32>
    %124 = vector.broadcast %123 : vector<1x128xf32> to vector<16x128xf32>
    %125 = arith.subf %119, %124 : vector<16x128xf32>
    %126 = arith.mulf %125, %125 : vector<16x128xf32>
    %cst_63 = arith.constant dense<0.000000e+00> : vector<128xf32>
    %127 = vector.multi_reduction <add>, %126, %cst_63 [0] : vector<16x128xf32> to vector<128xf32>
    %128 = vector.shape_cast %127 : vector<128xf32> to vector<1x128xf32>
    %cst_64 = arith.constant 1.600000e+01 : f32
    %129 = vector.broadcast %cst_64 : f32 to vector<1x128xf32>
    %130 = arith.divf %128, %129 : vector<1x128xf32>
    %131 = vector.broadcast %123 : vector<1x128xf32> to vector<16x128xf32>
    %132 = arith.subf %119, %131 : vector<16x128xf32>
    %cst_65 = arith.constant 9.99999974E-6 : f32
    %133 = vector.broadcast %cst_65 : f32 to vector<1x128xf32>
    %134 = arith.addf %130, %133 : vector<1x128xf32>
    %135 = math.rsqrt %134 : vector<1x128xf32>
    %136 = vector.broadcast %135 : vector<1x128xf32> to vector<16x128xf32>
    %137 = arith.mulf %132, %136 : vector<16x128xf32>
    %138 = arith.addf %137, %116 : vector<16x128xf32>
    %cst_66 = arith.constant 0.000000e+00 : f32
    %139 = vector.broadcast %cst_66 : f32 to vector<16x128xf32>
    %140 = arith.maximumf %138, %139 : vector<16x128xf32>
    %c0_67 = arith.constant 0 : index
    %c0_68 = arith.constant 0 : index
    %141 = vector.load %arg16[%c0_67, %c0_68] : memref<36x16xbf16, #tpu.memory_space<vmem>>, vector<36x16xbf16>
    %142 = arith.truncf %140 : vector<16x128xf32> to vector<16x128xbf16>
    %cst_69 = arith.constant dense<0.000000e+00> : vector<36x128xf32>
    %143 = tpu.matmul %141, %142, %cst_69 {dimension_numbers = #tpu.dot_dimension_numbers<[1], [0], [0], [1], [0, 0, 1, 1], [], []>} : vector<36x16xbf16>, vector<16x128xbf16>, vector<36x128xf32> -> vector<36x128xf32>
    %c0_70 = arith.constant 0 : index
    %c0_71 = arith.constant 0 : index
    %144 = vector.load %arg18[%c0_70, %c0_71] : memref<9x128xf32, #tpu.memory_space<vmem>>, vector<9x128xf32>
    %145 = vector.extract_strided_slice %143 {offsets = [0, 0], sizes = [4, 128], strides = [1, 1]} : vector<36x128xf32> to vector<4x128xf32>
    %146 = vector.extract_strided_slice %144 {offsets = [0, 0], sizes = [1, 128], strides = [1, 1]} : vector<9x128xf32> to vector<1x128xf32>
    %147 = vector.shape_cast %146 : vector<1x128xf32> to vector<128xf32>
    %148 = vector.shape_cast %147 : vector<128xf32> to vector<1x128xf32>
    %149 = vector.broadcast %148 : vector<1x128xf32> to vector<4x128xf32>
    %150 = arith.mulf %145, %149 : vector<4x128xf32>
    %151 = vector.extract_strided_slice %143 {offsets = [4, 0], sizes = [4, 128], strides = [1, 1]} : vector<36x128xf32> to vector<4x128xf32>
    %152 = vector.extract_strided_slice %144 {offsets = [1, 0], sizes = [1, 128], strides = [1, 1]} : vector<9x128xf32> to vector<1x128xf32>
    %153 = vector.shape_cast %152 : vector<1x128xf32> to vector<128xf32>
    %154 = vector.shape_cast %153 : vector<128xf32> to vector<1x128xf32>
    %155 = vector.broadcast %154 : vector<1x128xf32> to vector<4x128xf32>
    %156 = arith.mulf %151, %155 : vector<4x128xf32>
    %157 = arith.addf %150, %156 : vector<4x128xf32>
    %158 = vector.extract_strided_slice %143 {offsets = [8, 0], sizes = [4, 128], strides = [1, 1]} : vector<36x128xf32> to vector<4x128xf32>
    %159 = vector.extract_strided_slice %144 {offsets = [2, 0], sizes = [1, 128], strides = [1, 1]} : vector<9x128xf32> to vector<1x128xf32>
    %160 = vector.shape_cast %159 : vector<1x128xf32> to vector<128xf32>
    %161 = vector.shape_cast %160 : vector<128xf32> to vector<1x128xf32>
    %162 = vector.broadcast %161 : vector<1x128xf32> to vector<4x128xf32>
    %163 = arith.mulf %158, %162 : vector<4x128xf32>
    %164 = arith.addf %157, %163 : vector<4x128xf32>
    %165 = vector.extract_strided_slice %143 {offsets = [12, 0], sizes = [4, 128], strides = [1, 1]} : vector<36x128xf32> to vector<4x128xf32>
    %166 = vector.extract_strided_slice %144 {offsets = [3, 0], sizes = [1, 128], strides = [1, 1]} : vector<9x128xf32> to vector<1x128xf32>
    %167 = vector.shape_cast %166 : vector<1x128xf32> to vector<128xf32>
    %168 = vector.shape_cast %167 : vector<128xf32> to vector<1x128xf32>
    %169 = vector.broadcast %168 : vector<1x128xf32> to vector<4x128xf32>
    %170 = arith.mulf %165, %169 : vector<4x128xf32>
    %171 = arith.addf %164, %170 : vector<4x128xf32>
    %172 = vector.extract_strided_slice %143 {offsets = [16, 0], sizes = [4, 128], strides = [1, 1]} : vector<36x128xf32> to vector<4x128xf32>
    %173 = vector.extract_strided_slice %144 {offsets = [4, 0], sizes = [1, 128], strides = [1, 1]} : vector<9x128xf32> to vector<1x128xf32>
    %174 = vector.shape_cast %173 : vector<1x128xf32> to vector<128xf32>
    %175 = vector.shape_cast %174 : vector<128xf32> to vector<1x128xf32>
    %176 = vector.broadcast %175 : vector<1x128xf32> to vector<4x128xf32>
    %177 = arith.mulf %172, %176 : vector<4x128xf32>
    %178 = arith.addf %171, %177 : vector<4x128xf32>
    %179 = vector.extract_strided_slice %143 {offsets = [20, 0], sizes = [4, 128], strides = [1, 1]} : vector<36x128xf32> to vector<4x128xf32>
    %180 = vector.extract_strided_slice %144 {offsets = [5, 0], sizes = [1, 128], strides = [1, 1]} : vector<9x128xf32> to vector<1x128xf32>
    %181 = vector.shape_cast %180 : vector<1x128xf32> to vector<128xf32>
    %182 = vector.shape_cast %181 : vector<128xf32> to vector<1x128xf32>
    %183 = vector.broadcast %182 : vector<1x128xf32> to vector<4x128xf32>
    %184 = arith.mulf %179, %183 : vector<4x128xf32>
    %185 = arith.addf %178, %184 : vector<4x128xf32>
    %186 = vector.extract_strided_slice %143 {offsets = [24, 0], sizes = [4, 128], strides = [1, 1]} : vector<36x128xf32> to vector<4x128xf32>
    %187 = vector.extract_strided_slice %144 {offsets = [6, 0], sizes = [1, 128], strides = [1, 1]} : vector<9x128xf32> to vector<1x128xf32>
    %188 = vector.shape_cast %187 : vector<1x128xf32> to vector<128xf32>
    %189 = vector.shape_cast %188 : vector<128xf32> to vector<1x128xf32>
    %190 = vector.broadcast %189 : vector<1x128xf32> to vector<4x128xf32>
    %191 = arith.mulf %186, %190 : vector<4x128xf32>
    %192 = arith.addf %185, %191 : vector<4x128xf32>
    %193 = vector.extract_strided_slice %143 {offsets = [28, 0], sizes = [4, 128], strides = [1, 1]} : vector<36x128xf32> to vector<4x128xf32>
    %194 = vector.extract_strided_slice %144 {offsets = [7, 0], sizes = [1, 128], strides = [1, 1]} : vector<9x128xf32> to vector<1x128xf32>
    %195 = vector.shape_cast %194 : vector<1x128xf32> to vector<128xf32>
    %196 = vector.shape_cast %195 : vector<128xf32> to vector<1x128xf32>
    %197 = vector.broadcast %196 : vector<1x128xf32> to vector<4x128xf32>
    %198 = arith.mulf %193, %197 : vector<4x128xf32>
    %199 = arith.addf %192, %198 : vector<4x128xf32>
    %200 = vector.extract_strided_slice %143 {offsets = [32, 0], sizes = [4, 128], strides = [1, 1]} : vector<36x128xf32> to vector<4x128xf32>
    %201 = vector.extract_strided_slice %144 {offsets = [8, 0], sizes = [1, 128], strides = [1, 1]} : vector<9x128xf32> to vector<1x128xf32>
    %202 = vector.shape_cast %201 : vector<1x128xf32> to vector<128xf32>
    %203 = vector.shape_cast %202 : vector<128xf32> to vector<1x128xf32>
    %204 = vector.broadcast %203 : vector<1x128xf32> to vector<4x128xf32>
    %205 = arith.mulf %200, %204 : vector<4x128xf32>
    %206 = arith.addf %199, %205 : vector<4x128xf32>
    %207 = arith.truncf %206 : vector<4x128xf32> to vector<4x128xbf16>
    %c0_72 = arith.constant 0 : index
    %c0_73 = arith.constant 0 : index
    %208 = vector.load %arg19[%c0_72, %c0_73] : memref<128x256xbf16, #tpu.memory_space<vmem>>, vector<128x256xbf16>
    %cst_74 = arith.constant dense<0.000000e+00> : vector<4x256xf32>
    %209 = tpu.matmul %207, %208, %cst_74 {dimension_numbers = #tpu.dot_dimension_numbers<[1], [0], [0], [1], [0, 0, 1, 1], [], []>} : vector<4x128xbf16>, vector<128x256xbf16>, vector<4x256xf32> -> vector<4x256xf32>
    %cst_75 = arith.constant dense<0.000000e+00> : vector<256xf32>
    %210 = vector.multi_reduction <add>, %209, %cst_75 [0] : vector<4x256xf32> to vector<256xf32>
    %211 = vector.shape_cast %210 : vector<256xf32> to vector<1x256xf32>
    %cst_76 = arith.constant 4.000000e+00 : f32
    %212 = vector.broadcast %cst_76 : f32 to vector<1x256xf32>
    %213 = arith.divf %211, %212 : vector<1x256xf32>
    %214 = vector.broadcast %213 : vector<1x256xf32> to vector<4x256xf32>
    %215 = arith.subf %209, %214 : vector<4x256xf32>
    %216 = arith.mulf %215, %215 : vector<4x256xf32>
    %cst_77 = arith.constant dense<0.000000e+00> : vector<256xf32>
    %217 = vector.multi_reduction <add>, %216, %cst_77 [0] : vector<4x256xf32> to vector<256xf32>
    %218 = vector.shape_cast %217 : vector<256xf32> to vector<1x256xf32>
    %cst_78 = arith.constant 4.000000e+00 : f32
    %219 = vector.broadcast %cst_78 : f32 to vector<1x256xf32>
    %220 = arith.divf %218, %219 : vector<1x256xf32>
    %221 = vector.broadcast %213 : vector<1x256xf32> to vector<4x256xf32>
    %222 = arith.subf %209, %221 : vector<4x256xf32>
    %cst_79 = arith.constant 9.99999974E-6 : f32
    %223 = vector.broadcast %cst_79 : f32 to vector<1x256xf32>
    %224 = arith.addf %220, %223 : vector<1x256xf32>
    %225 = math.rsqrt %224 : vector<1x256xf32>
    %226 = vector.broadcast %225 : vector<1x256xf32> to vector<4x256xf32>
    %227 = arith.mulf %222, %226 : vector<4x256xf32>
    %cst_80 = arith.constant 0.000000e+00 : f32
    %228 = vector.broadcast %cst_80 : f32 to vector<4x256xf32>
    %229 = arith.maximumf %227, %228 : vector<4x256xf32>
    %c0_81 = arith.constant 0 : index
    %c0_82 = arith.constant 0 : index
    %230 = vector.load %arg17[%c0_81, %c0_82] : memref<36x4xbf16, #tpu.memory_space<vmem>>, vector<36x4xbf16>
    %231 = arith.truncf %229 : vector<4x256xf32> to vector<4x256xbf16>
    %cst_83 = arith.constant dense<0.000000e+00> : vector<36x256xf32>
    %232 = tpu.matmul %230, %231, %cst_83 {dimension_numbers = #tpu.dot_dimension_numbers<[1], [0], [0], [1], [0, 0, 1, 1], [], []>} : vector<36x4xbf16>, vector<4x256xbf16>, vector<36x256xf32> -> vector<36x256xf32>
    %c0_84 = arith.constant 0 : index
    %c0_85 = arith.constant 0 : index
    %233 = vector.load %arg20[%c0_84, %c0_85] : memref<9x256xf32, #tpu.memory_space<vmem>>, vector<9x256xf32>
    %234 = vector.extract_strided_slice %232 {offsets = [0, 0], sizes = [4, 256], strides = [1, 1]} : vector<36x256xf32> to vector<4x256xf32>
    %235 = vector.extract_strided_slice %233 {offsets = [0, 0], sizes = [1, 256], strides = [1, 1]} : vector<9x256xf32> to vector<1x256xf32>
    %236 = vector.shape_cast %235 : vector<1x256xf32> to vector<256xf32>
    %237 = vector.shape_cast %236 : vector<256xf32> to vector<1x256xf32>
    %238 = vector.broadcast %237 : vector<1x256xf32> to vector<4x256xf32>
    %239 = arith.mulf %234, %238 : vector<4x256xf32>
    %240 = vector.extract_strided_slice %232 {offsets = [4, 0], sizes = [4, 256], strides = [1, 1]} : vector<36x256xf32> to vector<4x256xf32>
    %241 = vector.extract_strided_slice %233 {offsets = [1, 0], sizes = [1, 256], strides = [1, 1]} : vector<9x256xf32> to vector<1x256xf32>
    %242 = vector.shape_cast %241 : vector<1x256xf32> to vector<256xf32>
    %243 = vector.shape_cast %242 : vector<256xf32> to vector<1x256xf32>
    %244 = vector.broadcast %243 : vector<1x256xf32> to vector<4x256xf32>
    %245 = arith.mulf %240, %244 : vector<4x256xf32>
    %246 = arith.addf %239, %245 : vector<4x256xf32>
    %247 = vector.extract_strided_slice %232 {offsets = [8, 0], sizes = [4, 256], strides = [1, 1]} : vector<36x256xf32> to vector<4x256xf32>
    %248 = vector.extract_strided_slice %233 {offsets = [2, 0], sizes = [1, 256], strides = [1, 1]} : vector<9x256xf32> to vector<1x256xf32>
    %249 = vector.shape_cast %248 : vector<1x256xf32> to vector<256xf32>
    %250 = vector.shape_cast %249 : vector<256xf32> to vector<1x256xf32>
    %251 = vector.broadcast %250 : vector<1x256xf32> to vector<4x256xf32>
    %252 = arith.mulf %247, %251 : vector<4x256xf32>
    %253 = arith.addf %246, %252 : vector<4x256xf32>
    %254 = vector.extract_strided_slice %232 {offsets = [12, 0], sizes = [4, 256], strides = [1, 1]} : vector<36x256xf32> to vector<4x256xf32>
    %255 = vector.extract_strided_slice %233 {offsets = [3, 0], sizes = [1, 256], strides = [1, 1]} : vector<9x256xf32> to vector<1x256xf32>
    %256 = vector.shape_cast %255 : vector<1x256xf32> to vector<256xf32>
    %257 = vector.shape_cast %256 : vector<256xf32> to vector<1x256xf32>
    %258 = vector.broadcast %257 : vector<1x256xf32> to vector<4x256xf32>
    %259 = arith.mulf %254, %258 : vector<4x256xf32>
    %260 = arith.addf %253, %259 : vector<4x256xf32>
    %261 = vector.extract_strided_slice %232 {offsets = [16, 0], sizes = [4, 256], strides = [1, 1]} : vector<36x256xf32> to vector<4x256xf32>
    %262 = vector.extract_strided_slice %233 {offsets = [4, 0], sizes = [1, 256], strides = [1, 1]} : vector<9x256xf32> to vector<1x256xf32>
    %263 = vector.shape_cast %262 : vector<1x256xf32> to vector<256xf32>
    %264 = vector.shape_cast %263 : vector<256xf32> to vector<1x256xf32>
    %265 = vector.broadcast %264 : vector<1x256xf32> to vector<4x256xf32>
    %266 = arith.mulf %261, %265 : vector<4x256xf32>
    %267 = arith.addf %260, %266 : vector<4x256xf32>
    %268 = vector.extract_strided_slice %232 {offsets = [20, 0], sizes = [4, 256], strides = [1, 1]} : vector<36x256xf32> to vector<4x256xf32>
    %269 = vector.extract_strided_slice %233 {offsets = [5, 0], sizes = [1, 256], strides = [1, 1]} : vector<9x256xf32> to vector<1x256xf32>
    %270 = vector.shape_cast %269 : vector<1x256xf32> to vector<256xf32>
    %271 = vector.shape_cast %270 : vector<256xf32> to vector<1x256xf32>
    %272 = vector.broadcast %271 : vector<1x256xf32> to vector<4x256xf32>
    %273 = arith.mulf %268, %272 : vector<4x256xf32>
    %274 = arith.addf %267, %273 : vector<4x256xf32>
    %275 = vector.extract_strided_slice %232 {offsets = [24, 0], sizes = [4, 256], strides = [1, 1]} : vector<36x256xf32> to vector<4x256xf32>
    %276 = vector.extract_strided_slice %233 {offsets = [6, 0], sizes = [1, 256], strides = [1, 1]} : vector<9x256xf32> to vector<1x256xf32>
    %277 = vector.shape_cast %276 : vector<1x256xf32> to vector<256xf32>
    %278 = vector.shape_cast %277 : vector<256xf32> to vector<1x256xf32>
    %279 = vector.broadcast %278 : vector<1x256xf32> to vector<4x256xf32>
    %280 = arith.mulf %275, %279 : vector<4x256xf32>
    %281 = arith.addf %274, %280 : vector<4x256xf32>
    %282 = vector.extract_strided_slice %232 {offsets = [28, 0], sizes = [4, 256], strides = [1, 1]} : vector<36x256xf32> to vector<4x256xf32>
    %283 = vector.extract_strided_slice %233 {offsets = [7, 0], sizes = [1, 256], strides = [1, 1]} : vector<9x256xf32> to vector<1x256xf32>
    %284 = vector.shape_cast %283 : vector<1x256xf32> to vector<256xf32>
    %285 = vector.shape_cast %284 : vector<256xf32> to vector<1x256xf32>
    %286 = vector.broadcast %285 : vector<1x256xf32> to vector<4x256xf32>
    %287 = arith.mulf %282, %286 : vector<4x256xf32>
    %288 = arith.addf %281, %287 : vector<4x256xf32>
    %289 = vector.extract_strided_slice %232 {offsets = [32, 0], sizes = [4, 256], strides = [1, 1]} : vector<36x256xf32> to vector<4x256xf32>
    %290 = vector.extract_strided_slice %233 {offsets = [8, 0], sizes = [1, 256], strides = [1, 1]} : vector<9x256xf32> to vector<1x256xf32>
    %291 = vector.shape_cast %290 : vector<1x256xf32> to vector<256xf32>
    %292 = vector.shape_cast %291 : vector<256xf32> to vector<1x256xf32>
    %293 = vector.broadcast %292 : vector<1x256xf32> to vector<4x256xf32>
    %294 = arith.mulf %289, %293 : vector<4x256xf32>
    %295 = arith.addf %288, %294 : vector<4x256xf32>
    %296 = arith.truncf %172 : vector<4x128xf32> to vector<4x128xbf16>
    %c0_86 = arith.constant 0 : index
    %c0_87 = arith.constant 0 : index
    %297 = vector.load %arg22[%c0_86, %c0_87] : memref<128x256xbf16, #tpu.memory_space<vmem>>, vector<128x256xbf16>
    %cst_88 = arith.constant dense<0.000000e+00> : vector<4x256xf32>
    %298 = tpu.matmul %296, %297, %cst_88 {dimension_numbers = #tpu.dot_dimension_numbers<[1], [0], [0], [1], [0, 0, 1, 1], [], []>} : vector<4x128xbf16>, vector<128x256xbf16>, vector<4x256xf32> -> vector<4x256xf32>
    %299 = arith.truncf %295 : vector<4x256xf32> to vector<4x256xbf16>
    %c0_89 = arith.constant 0 : index
    %c0_90 = arith.constant 0 : index
    %300 = vector.load %arg21[%c0_89, %c0_90] : memref<256x256xbf16, #tpu.memory_space<vmem>>, vector<256x256xbf16>
    %cst_91 = arith.constant dense<0.000000e+00> : vector<4x256xf32>
    %301 = tpu.matmul %299, %300, %cst_91 {dimension_numbers = #tpu.dot_dimension_numbers<[1], [0], [0], [1], [0, 0, 1, 1], [], []>} : vector<4x256xbf16>, vector<256x256xbf16>, vector<4x256xf32> -> vector<4x256xf32>
    %cst_92 = arith.constant dense<0.000000e+00> : vector<256xf32>
    %302 = vector.multi_reduction <add>, %301, %cst_92 [0] : vector<4x256xf32> to vector<256xf32>
    %303 = vector.shape_cast %302 : vector<256xf32> to vector<1x256xf32>
    %cst_93 = arith.constant 4.000000e+00 : f32
    %304 = vector.broadcast %cst_93 : f32 to vector<1x256xf32>
    %305 = arith.divf %303, %304 : vector<1x256xf32>
    %306 = vector.broadcast %305 : vector<1x256xf32> to vector<4x256xf32>
    %307 = arith.subf %301, %306 : vector<4x256xf32>
    %308 = arith.mulf %307, %307 : vector<4x256xf32>
    %cst_94 = arith.constant dense<0.000000e+00> : vector<256xf32>
    %309 = vector.multi_reduction <add>, %308, %cst_94 [0] : vector<4x256xf32> to vector<256xf32>
    %310 = vector.shape_cast %309 : vector<256xf32> to vector<1x256xf32>
    %cst_95 = arith.constant 4.000000e+00 : f32
    %311 = vector.broadcast %cst_95 : f32 to vector<1x256xf32>
    %312 = arith.divf %310, %311 : vector<1x256xf32>
    %313 = vector.broadcast %305 : vector<1x256xf32> to vector<4x256xf32>
    %314 = arith.subf %301, %313 : vector<4x256xf32>
    %cst_96 = arith.constant 9.99999974E-6 : f32
    %315 = vector.broadcast %cst_96 : f32 to vector<1x256xf32>
    %316 = arith.addf %312, %315 : vector<1x256xf32>
    %317 = math.rsqrt %316 : vector<1x256xf32>
    %318 = vector.broadcast %317 : vector<1x256xf32> to vector<4x256xf32>
    %319 = arith.mulf %314, %318 : vector<4x256xf32>
    %320 = arith.addf %319, %298 : vector<4x256xf32>
    %cst_97 = arith.constant 0.000000e+00 : f32
    %321 = vector.broadcast %cst_97 : f32 to vector<4x256xf32>
    %322 = arith.maximumf %320, %321 : vector<4x256xf32>
    %cst_98 = arith.constant dense<0.000000e+00> : vector<256xf32>
    %323 = vector.multi_reduction <add>, %322, %cst_98 [0] : vector<4x256xf32> to vector<256xf32>
    %324 = vector.shape_cast %323 : vector<256xf32> to vector<1x256xf32>
    %cst_99 = arith.constant 4.000000e+00 : f32
    %325 = vector.broadcast %cst_99 : f32 to vector<1x256xf32>
    %326 = arith.divf %324, %325 : vector<1x256xf32>
    %327 = arith.truncf %326 : vector<1x256xf32> to vector<1x256xbf16>
    %c0_100 = arith.constant 0 : index
    %c0_101 = arith.constant 0 : index
    %328 = vector.load %arg23[%c0_100, %c0_101] : memref<256x64xbf16, #tpu.memory_space<vmem>>, vector<256x64xbf16>
    %cst_102 = arith.constant dense<0.000000e+00> : vector<1x64xf32>
    %329 = tpu.matmul %327, %328, %cst_102 {dimension_numbers = #tpu.dot_dimension_numbers<[1], [0], [0], [1], [0, 0, 1, 1], [], []>} : vector<1x256xbf16>, vector<256x64xbf16>, vector<1x64xf32> -> vector<1x64xf32>
    %c0_103 = arith.constant 0 : index
    %c0_104 = arith.constant 0 : index
    %330 = vector.load %arg24[%c0_103, %c0_104] : memref<1x64xf32, #tpu.memory_space<vmem>>, vector<1x64xf32>
    %331 = arith.addf %329, %330 : vector<1x64xf32>
    %c0_105 = arith.constant 0 : index
    %c0_106 = arith.constant 0 : index
    %c0_107 = arith.constant 0 : index
    %332 = vector.load %arg25[%c0_105, %c0_106, %c0_107] : memref<1x1x64xf32, #tpu.memory_space<vmem>>, vector<1x1x64xf32>
    %333 = vector.shape_cast %332 : vector<1x1x64xf32> to vector<1x64xf32>
    %334 = vector.shape_cast %331 : vector<1x64xf32> to vector<1x1x64xf32>
    tpu.vector_store %arg25[%c0_105, %c0_106, %c0_107], %334 {strides = array<i32>} : memref<1x1x64xf32, #tpu.memory_space<vmem>>, vector<1x1x64xf32>,
    return
  }
  func.func @transform_0(%arg0: i32) -> (i32, i32, i32) {
    %c0_i32 = arith.constant 0 : i32
    %c0_i32_0 = arith.constant 0 : i32
    %c0_i32_1 = arith.constant 0 : i32
    return %arg0, %c0_i32, %c0_i32_0 : i32, i32, i32
  }
  func.func @transform_1(%arg0: i32) -> (i32, i32) {
    %c0_i32 = arith.constant 0 : i32
    %c0_i32_0 = arith.constant 0 : i32
    %c0_i32_1 = arith.constant 0 : i32
    return %c0_i32, %c0_i32_0 : i32, i32
  }
  func.func @transform_2(%arg0: i32) -> (i32, i32) {
    %c0_i32 = arith.constant 0 : i32
    %c0_i32_0 = arith.constant 0 : i32
    %c0_i32_1 = arith.constant 0 : i32
    return %c0_i32, %c0_i32_0 : i32, i32
  }
  func.func @transform_3(%arg0: i32) -> (i32, i32) {
    %c0_i32 = arith.constant 0 : i32
    %c0_i32_0 = arith.constant 0 : i32
    %c0_i32_1 = arith.constant 0 : i32
    return %c0_i32, %c0_i32_0 : i32, i32
  }
  func.func @transform_4(%arg0: i32) -> (i32, i32) {
    %c0_i32 = arith.constant 0 : i32
    %c0_i32_0 = arith.constant 0 : i32
    %c0_i32_1 = arith.constant 0 : i32
    return %c0_i32, %c0_i32_0 : i32, i32
  }
  func.func @transform_5(%arg0: i32) -> (i32, i32) {
    %c0_i32 = arith.constant 0 : i32
    %c0_i32_0 = arith.constant 0 : i32
    %c0_i32_1 = arith.constant 0 : i32
    return %c0_i32, %c0_i32_0 : i32, i32
  }
  func.func @transform_6(%arg0: i32) -> (i32, i32) {
    %c0_i32 = arith.constant 0 : i32
    %c0_i32_0 = arith.constant 0 : i32
    %c0_i32_1 = arith.constant 0 : i32
    return %c0_i32, %c0_i32_0 : i32, i32
  }
  func.func @transform_7(%arg0: i32) -> (i32, i32) {
    %c0_i32 = arith.constant 0 : i32
    %c0_i32_0 = arith.constant 0 : i32
    %c0_i32_1 = arith.constant 0 : i32
    return %c0_i32, %c0_i32_0 : i32, i32
  }
  func.func @transform_8(%arg0: i32) -> (i32, i32) {
    %c0_i32 = arith.constant 0 : i32
    %c0_i32_0 = arith.constant 0 : i32
    %c0_i32_1 = arith.constant 0 : i32
    return %c0_i32, %c0_i32_0 : i32, i32
  }
  func.func @transform_9(%arg0: i32) -> (i32, i32) {
    %c0_i32 = arith.constant 0 : i32
    %c0_i32_0 = arith.constant 0 : i32
    %c0_i32_1 = arith.constant 0 : i32
    return %c0_i32, %c0_i32_0 : i32, i32
  }
  func.func @transform_10(%arg0: i32) -> (i32, i32) {
    %c0_i32 = arith.constant 0 : i32
    %c0_i32_0 = arith.constant 0 : i32
    %c0_i32_1 = arith.constant 0 : i32
    return %c0_i32, %c0_i32_0 : i32, i32
  }
  func.func @transform_11(%arg0: i32) -> (i32, i32) {
    %c0_i32 = arith.constant 0 : i32
    %c0_i32_0 = arith.constant 0 : i32
    %c0_i32_1 = arith.constant 0 : i32
    return %c0_i32, %c0_i32_0 : i32, i32
  }
  func.func @transform_12(%arg0: i32) -> (i32, i32) {
    %c0_i32 = arith.constant 0 : i32
    %c0_i32_0 = arith.constant 0 : i32
    %c0_i32_1 = arith.constant 0 : i32
    return %c0_i32, %c0_i32_0 : i32, i32
  }
  func.func @transform_13(%arg0: i32) -> (i32, i32) {
    %c0_i32 = arith.constant 0 : i32
    %c0_i32_0 = arith.constant 0 : i32
    %c0_i32_1 = arith.constant 0 : i32
    return %c0_i32, %c0_i32_0 : i32, i32
  }
  func.func @transform_14(%arg0: i32) -> (i32, i32) {
    %c0_i32 = arith.constant 0 : i32
    %c0_i32_0 = arith.constant 0 : i32
    %c0_i32_1 = arith.constant 0 : i32
    return %c0_i32, %c0_i32_0 : i32, i32
  }
  func.func @transform_15(%arg0: i32) -> (i32, i32) {
    %c0_i32 = arith.constant 0 : i32
    %c0_i32_0 = arith.constant 0 : i32
    %c0_i32_1 = arith.constant 0 : i32
    return %c0_i32, %c0_i32_0 : i32, i32
  }
  func.func @transform_16(%arg0: i32) -> (i32, i32) {
    %c0_i32 = arith.constant 0 : i32
    %c0_i32_0 = arith.constant 0 : i32
    %c0_i32_1 = arith.constant 0 : i32
    return %c0_i32, %c0_i32_0 : i32, i32
  }
  func.func @transform_17(%arg0: i32) -> (i32, i32) {
    %c0_i32 = arith.constant 0 : i32
    %c0_i32_0 = arith.constant 0 : i32
    %c0_i32_1 = arith.constant 0 : i32
    return %c0_i32, %c0_i32_0 : i32, i32
  }
  func.func @transform_18(%arg0: i32) -> (i32, i32) {
    %c0_i32 = arith.constant 0 : i32
    %c0_i32_0 = arith.constant 0 : i32
    %c0_i32_1 = arith.constant 0 : i32
    return %c0_i32, %c0_i32_0 : i32, i32
  }
  func.func @transform_19(%arg0: i32) -> (i32, i32) {
    %c0_i32 = arith.constant 0 : i32
    %c0_i32_0 = arith.constant 0 : i32
    %c0_i32_1 = arith.constant 0 : i32
    return %c0_i32, %c0_i32_0 : i32, i32
  }
  func.func @transform_20(%arg0: i32) -> (i32, i32) {
    %c0_i32 = arith.constant 0 : i32
    %c0_i32_0 = arith.constant 0 : i32
    %c0_i32_1 = arith.constant 0 : i32
    return %c0_i32, %c0_i32_0 : i32, i32
  }
  func.func @transform_21(%arg0: i32) -> (i32, i32) {
    %c0_i32 = arith.constant 0 : i32
    %c0_i32_0 = arith.constant 0 : i32
    %c0_i32_1 = arith.constant 0 : i32
    return %c0_i32, %c0_i32_0 : i32, i32
  }
  func.func @transform_22(%arg0: i32) -> (i32, i32) {
    %c0_i32 = arith.constant 0 : i32
    %c0_i32_0 = arith.constant 0 : i32
    %c0_i32_1 = arith.constant 0 : i32
    return %c0_i32, %c0_i32_0 : i32, i32
  }
  func.func @transform_23(%arg0: i32) -> (i32, i32) {
    %c0_i32 = arith.constant 0 : i32
    %c0_i32_0 = arith.constant 0 : i32
    %c0_i32_1 = arith.constant 0 : i32
    return %c0_i32, %c0_i32_0 : i32, i32
  }
  func.func @transform_24(%arg0: i32) -> (i32, i32, i32) {
    %c0_i32 = arith.constant 0 : i32
    %c0_i32_0 = arith.constant 0 : i32
    %c0_i32_1 = arith.constant 0 : i32
    return %arg0, %c0_i32, %c0_i32_0 : i32, i32, i32
  }
}

</mosaic_0001>

<llo_original>
// kernel: tile.39
$region0: #{tile.39}
  %s0 = inlined_call_operand.vmem [shape: f32[9,2,16], index: 0, kind: input, shape index: {}]
  %s1 = inlined_call_operand.vmem [shape: f32[9,32], index: 1, kind: output, shape index: {}]
  $region1: #{tile.39} parent=0
    #allocation0 [shape = 'u8[36864]{0}', space=vmem, size = 0x9000, scoped, tag = 'scoped mem for input reshape']
    %s3 = sshllo.u32 0, 2
    %s4 = smul.addr 2, 8
    %s5 = scalar_lea.vmem %s0, %s4
    %v6 = vld [vmem:[%s5] sm:%s3]
    %s7 = scalar_lea.vmem [#allocation0], 64
    %8 = vst [vmem:[%s7] sm:%s3] %v6
    %s9 = smul.addr 2, 7
    %s10 = scalar_lea.vmem %s0, %s9
    %v11 = vld [vmem:[%s10] sm:%s3]
    %s12 = scalar_lea.vmem [#allocation0], 56
    %13 = vst [vmem:[%s12] sm:%s3] %v11
    %s14 = smul.addr 2, 6
    %s15 = scalar_lea.vmem %s0, %s14
    %v16 = vld [vmem:[%s15] sm:%s3]
    %s17 = scalar_lea.vmem [#allocation0], 48
    %18 = vst [vmem:[%s17] sm:%s3] %v16
    %s19 = smul.addr 2, 5
    %s20 = scalar_lea.vmem %s0, %s19
    %v21 = vld [vmem:[%s20] sm:%s3]
    %s22 = scalar_lea.vmem [#allocation0], 40
    %23 = vst [vmem:[%s22] sm:%s3] %v21
    %s24 = smul.addr 2, 4
    %s25 = scalar_lea.vmem %s0, %s24
    %v26 = vld [vmem:[%s25] sm:%s3]
    %s27 = scalar_lea.vmem [#allocation0], 32
    %28 = vst [vmem:[%s27] sm:%s3] %v26
    %s29 = smul.addr 2, 3
    %s30 = scalar_lea.vmem %s0, %s29
    %v31 = vld [vmem:[%s30] sm:%s3]
    %s32 = scalar_lea.vmem [#allocation0], 24
    %33 = vst [vmem:[%s32] sm:%s3] %v31
    %s34 = smul.addr 2, 2
    %s35 = scalar_lea.vmem %s0, %s34
    %v36 = vld [vmem:[%s35] sm:%s3]
    %s37 = scalar_lea.vmem [#allocation0], 16
    %38 = vst [vmem:[%s37] sm:%s3] %v36
    %s39 = scalar_lea.vmem %s0, 2
    %v40 = vld [vmem:[%s39] sm:%s3]
    %s41 = scalar_lea.vmem [#allocation0], 8
    %42 = vst [vmem:[%s41] sm:%s3] %v40
    %v43 = vld [vmem:[%s0] sm:%s3]
    %44 = vst [vmem:[#allocation0] sm:%s3] %v43
    %v45 = vld [vmem:[#allocation0] ss:$8 sm:$0xf]
    %v46 = vld [vmem:[#allocation0] ss:$8 sm:$0xf0]
    %vm47 = vcmask 1047556
    %v48 = vsel %vm47, %v46, %v45
    %vm49 = vcmask 130048
    %50 = vst.msk [vmem:[%s1] sm:$0xff] %vm49, %v48
    %s51 = scalar_lea.vmem [#allocation0], 64
    %v52 = vld [vmem:[%s51] sm:$0x1]
    %vm53 = vcmask 130048
    %s54 = scalar_lea.vmem %s1, 8
    %55 = vst.msk [vmem:[%s54] sm:$0x1] %vm53, %v52
    %s56 = scalar_lea.vmem [#allocation0], 1
    %v57 = vld [vmem:[%s56] ss:$8 sm:$0xf]
    %s58 = scalar_lea.vmem [#allocation0], 1
    %v59 = vld [vmem:[%s58] ss:$8 sm:$0xf0]
    %vm60 = vcmask 1047556
    %v61 = vsel %vm60, %v59, %v57
    %62 = vrot.lane.b32.xlu0 %v61, 16
    %v63 = vpop.permute.xlu0 %62
    %vm64 = vcmask 261248
    %65 = vst.msk [vmem:[%s1] sm:$0xff] %vm64, %v63
    %s66 = scalar_lea.vmem [#allocation0], 65
    %v67 = vld [vmem:[%s66] sm:$0x1]
    %68 = vrot.lane.b32.xlu0 %v67, 16
    %v69 = vpop.permute.xlu0 %68
    %vm70 = vcmask 261248
    %s71 = scalar_lea.vmem %s1, 8
    %72 = vst.msk [vmem:[%s71] sm:$0x1] %vm70, %v69

// kernel: tile.44
$region0: #{tile.44}
  %s0 = inlined_call_operand.vmem [shape: f32[9,2,32], index: 0, kind: input, shape index: {}]
  %s1 = inlined_call_operand.vmem [shape: f32[9,64], index: 1, kind: output, shape index: {}]
  $region1: #{tile.44} parent=0
    #allocation0 [shape = 'u8[36864]{0}', space=vmem, size = 0x9000, scoped, tag = 'scoped mem for input reshape']
    %s3 = sshllo.u32 0, 2
    %s4 = smul.addr 2, 8
    %s5 = scalar_lea.vmem %s0, %s4
    %v6 = vld [vmem:[%s5] sm:%s3]
    %s7 = scalar_lea.vmem [#allocation0], 64
    %8 = vst [vmem:[%s7] sm:%s3] %v6
    %s9 = smul.addr 2, 7
    %s10 = scalar_lea.vmem %s0, %s9
    %v11 = vld [vmem:[%s10] sm:%s3]
    %s12 = scalar_lea.vmem [#allocation0], 56
    %13 = vst [vmem:[%s12] sm:%s3] %v11
    %s14 = smul.addr 2, 6
    %s15 = scalar_lea.vmem %s0, %s14
    %v16 = vld [vmem:[%s15] sm:%s3]
    %s17 = scalar_lea.vmem [#allocation0], 48
    %18 = vst [vmem:[%s17] sm:%s3] %v16
    %s19 = smul.addr 2, 5
    %s20 = scalar_lea.vmem %s0, %s19
    %v21 = vld [vmem:[%s20] sm:%s3]
    %s22 = scalar_lea.vmem [#allocation0], 40
    %23 = vst [vmem:[%s22] sm:%s3] %v21
    %s24 = smul.addr 2, 4
    %s25 = scalar_lea.vmem %s0, %s24
    %v26 = vld [vmem:[%s25] sm:%s3]
    %s27 = scalar_lea.vmem [#allocation0], 32
    %28 = vst [vmem:[%s27] sm:%s3] %v26
    %s29 = smul.addr 2, 3
    %s30 = scalar_lea.vmem %s0, %s29
    %v31 = vld [vmem:[%s30] sm:%s3]
    %s32 = scalar_lea.vmem [#allocation0], 24
    %33 = vst [vmem:[%s32] sm:%s3] %v31
    %s34 = smul.addr 2, 2
    %s35 = scalar_lea.vmem %s0, %s34
    %v36 = vld [vmem:[%s35] sm:%s3]
    %s37 = scalar_lea.vmem [#allocation0], 16
    %38 = vst [vmem:[%s37] sm:%s3] %v36
    %s39 = scalar_lea.vmem %s0, 2
    %v40 = vld [vmem:[%s39] sm:%s3]
    %s41 = scalar_lea.vmem [#allocation0], 8
    %42 = vst [vmem:[%s41] sm:%s3] %v40
    %v43 = vld [vmem:[%s0] sm:%s3]
    %44 = vst [vmem:[#allocation0] sm:%s3] %v43
    %v45 = vld [vmem:[#allocation0] ss:$8 sm:$0xf]
    %v46 = vld [vmem:[#allocation0] ss:$8 sm:$0xf0]
    %vm47 = vcmask 1047556
    %v48 = vsel %vm47, %v46, %v45
    %vm49 = vcmask 261120
    %50 = vst.msk [vmem:[%s1] sm:$0xff] %vm49, %v48
    %s51 = scalar_lea.vmem [#allocation0], 64
    %v52 = vld [vmem:[%s51] sm:$0x1]
    %vm53 = vcmask 261120
    %s54 = scalar_lea.vmem %s1, 8
    %55 = vst.msk [vmem:[%s54] sm:$0x1] %vm53, %v52
    %s56 = scalar_lea.vmem [#allocation0], 1
    %v57 = vld [vmem:[%s56] ss:$8 sm:$0xf]
    %s58 = scalar_lea.vmem [#allocation0], 1
    %v59 = vld [vmem:[%s58] ss:$8 sm:$0xf0]
    %vm60 = vcmask 1047556
    %v61 = vsel %vm60, %v59, %v57
    %62 = vrot.lane.b32.xlu0 %v61, 32
    %v63 = vpop.permute.xlu0 %62
    %vm64 = vcmask 523520
    %65 = vst.msk [vmem:[%s1] sm:$0xff] %vm64, %v63
    %s66 = scalar_lea.vmem [#allocation0], 65
    %v67 = vld [vmem:[%s66] sm:$0x1]
    %68 = vrot.lane.b32.xlu0 %v67, 32
    %v69 = vpop.permute.xlu0 %68
    %vm70 = vcmask 523520
    %s71 = scalar_lea.vmem %s1, 8
    %72 = vst.msk [vmem:[%s71] sm:$0x1] %vm70, %v69

// kernel: tile.54
$region0: #{tile.54}
  %s0 = inlined_call_operand.vmem [shape: f32[9,2,64], index: 0, kind: input, shape index: {}]
  %s1 = inlined_call_operand.vmem [shape: f32[9,128], index: 1, kind: output, shape index: {}]
  $region1: #{tile.54} parent=0
    #allocation0 [shape = 'u8[36864]{0}', space=vmem, size = 0x9000, scoped, tag = 'scoped mem for input reshape']
    %s3 = sshllo.u32 0, 2
    %s4 = smul.addr 2, 8
    %s5 = scalar_lea.vmem %s0, %s4
    %v6 = vld [vmem:[%s5] sm:%s3]
    %s7 = scalar_lea.vmem [#allocation0], 64
    %8 = vst [vmem:[%s7] sm:%s3] %v6
    %s9 = smul.addr 2, 7
    %s10 = scalar_lea.vmem %s0, %s9
    %v11 = vld [vmem:[%s10] sm:%s3]
    %s12 = scalar_lea.vmem [#allocation0], 56
    %13 = vst [vmem:[%s12] sm:%s3] %v11
    %s14 = smul.addr 2, 6
    %s15 = scalar_lea.vmem %s0, %s14
    %v16 = vld [vmem:[%s15] sm:%s3]
    %s17 = scalar_lea.vmem [#allocation0], 48
    %18 = vst [vmem:[%s17] sm:%s3] %v16
    %s19 = smul.addr 2, 5
    %s20 = scalar_lea.vmem %s0, %s19
    %v21 = vld [vmem:[%s20] sm:%s3]
    %s22 = scalar_lea.vmem [#allocation0], 40
    %23 = vst [vmem:[%s22] sm:%s3] %v21
    %s24 = smul.addr 2, 4
    %s25 = scalar_lea.vmem %s0, %s24
    %v26 = vld [vmem:[%s25] sm:%s3]
    %s27 = scalar_lea.vmem [#allocation0], 32
    %28 = vst [vmem:[%s27] sm:%s3] %v26
    %s29 = smul.addr 2, 3
    %s30 = scalar_lea.vmem %s0, %s29
    %v31 = vld [vmem:[%s30] sm:%s3]
    %s32 = scalar_lea.vmem [#allocation0], 24
    %33 = vst [vmem:[%s32] sm:%s3] %v31
    %s34 = smul.addr 2, 2
    %s35 = scalar_lea.vmem %s0, %s34
    %v36 = vld [vmem:[%s35] sm:%s3]
    %s37 = scalar_lea.vmem [#allocation0], 16
    %38 = vst [vmem:[%s37] sm:%s3] %v36
    %s39 = scalar_lea.vmem %s0, 2
    %v40 = vld [vmem:[%s39] sm:%s3]
    %s41 = scalar_lea.vmem [#allocation0], 8
    %42 = vst [vmem:[%s41] sm:%s3] %v40
    %v43 = vld [vmem:[%s0] sm:%s3]
    %44 = vst [vmem:[#allocation0] sm:%s3] %v43
    %v45 = vld [vmem:[#allocation0] ss:$8 sm:$0xf]
    %v46 = vld [vmem:[#allocation0] ss:$8 sm:$0xf0]
    %vm47 = vcmask 1047556
    %v48 = vsel %vm47, %v46, %v45
    %vm49 = vcmask 523264
    %50 = vst.msk [vmem:[%s1] sm:$0xff] %vm49, %v48
    %s51 = scalar_lea.vmem [#allocation0], 64
    %v52 = vld [vmem:[%s51] sm:$0x1]
    %vm53 = vcmask 523264
    %s54 = scalar_lea.vmem %s1, 8
    %55 = vst.msk [vmem:[%s54] sm:$0x1] %vm53, %v52
    %s56 = scalar_lea.vmem [#allocation0], 1
    %v57 = vld [vmem:[%s56] ss:$8 sm:$0xf]
    %s58 = scalar_lea.vmem [#allocation0], 1
    %v59 = vld [vmem:[%s58] ss:$8 sm:$0xf0]
    %vm60 = vcmask 1047556
    %v61 = vsel %vm60, %v59, %v57
    %62 = vrot.lane.b32.xlu0 %v61, 64
    %v63 = vpop.permute.xlu0 %62
    %vm64 = vcmask 1048064
    %65 = vst.msk [vmem:[%s1] sm:$0xff] %vm64, %v63
    %s66 = scalar_lea.vmem [#allocation0], 65
    %v67 = vld [vmem:[%s66] sm:$0x1]
    %68 = vrot.lane.b32.xlu0 %v67, 64
    %v69 = vpop.permute.xlu0 %68
    %vm70 = vcmask 1048064
    %s71 = scalar_lea.vmem %s1, 8
    %72 = vst.msk [vmem:[%s71] sm:$0x1] %vm70, %v69

// kernel: soft_sensor_forward.1
$region0: #{soft_sensor_forward.1}
  #allocation0 [shape = 'u32[]', space=smem, size = 0x4, offset = 0x4, fixed_abs, tag = 'smem constant byte address 0x4 - core index']
  #allocation1 [shape = 'u32[144,128]{1,0:T(1,128)}', space=vmem, size = 0x12000, scoped, tag = 'internal scratch']
  %s0 = inlined_call_operand.vmem [shape: bf16[2,256,32], index: 0, kind: input, shape index: {}]
  %s1 = inlined_call_operand.vmem [shape: bf16[576,256], index: 1, kind: input, shape index: {}]
  %s2 = inlined_call_operand.vmem [shape: bf16[576,64], index: 2, kind: input, shape index: {}]
  %s3 = inlined_call_operand.vmem [shape: f32[9,32], index: 3, kind: input, shape index: {}]
  %s4 = inlined_call_operand.vmem [shape: bf16[32,64], index: 4, kind: input, shape index: {}]
  %s5 = inlined_call_operand.vmem [shape: f32[9,64], index: 5, kind: input, shape index: {}]
  %s6 = inlined_call_operand.vmem [shape: bf16[64,64], index: 6, kind: input, shape index: {}]
  %s7 = inlined_call_operand.vmem [shape: bf16[32,64], index: 7, kind: input, shape index: {}]
  %s8 = inlined_call_operand.vmem [shape: bf16[144,64], index: 8, kind: input, shape index: {}]
  %s9 = inlined_call_operand.vmem [shape: bf16[144,16], index: 9, kind: input, shape index: {}]
  %s10 = inlined_call_operand.vmem [shape: f32[9,64], index: 10, kind: input, shape index: {}]
  %s11 = inlined_call_operand.vmem [shape: bf16[64,128], index: 11, kind: input, shape index: {}]
  %s12 = inlined_call_operand.vmem [shape: f32[9,128], index: 12, kind: input, shape index: {}]
  %s13 = inlined_call_operand.vmem [shape: bf16[128,128], index: 13, kind: input, shape index: {}]
  %s14 = inlined_call_operand.vmem [shape: bf16[64,128], index: 14, kind: input, shape index: {}]
  %s15 = inlined_call_operand.vmem [shape: bf16[36,16], index: 15, kind: input, shape index: {}]
  %s16 = inlined_call_operand.vmem [shape: bf16[36,4], index: 16, kind: input, shape index: {}]
  %s17 = inlined_call_operand.vmem [shape: f32[9,128], index: 17, kind: input, shape index: {}]
  %s18 = inlined_call_operand.vmem [shape: bf16[128,256], index: 18, kind: input, shape index: {}]
  %s19 = inlined_call_operand.vmem [shape: f32[9,256], index: 19, kind: input, shape index: {}]
  %s20 = inlined_call_operand.vmem [shape: bf16[256,256], index: 20, kind: input, shape index: {}]
  %s21 = inlined_call_operand.vmem [shape: bf16[128,256], index: 21, kind: input, shape index: {}]
  %s22 = inlined_call_operand.vmem [shape: bf16[256,64], index: 22, kind: input, shape index: {}]
  %s23 = inlined_call_operand.vmem [shape: f32[1,64], index: 23, kind: input, shape index: {}]
  %s24 = inlined_call_operand.vmem [shape: f32[2,1,64], index: 24, kind: output, shape index: {}]
  %s25 = sld [smem:[#allocation0]]
  $region129: #{soft_sensor_forward.1} parent=0
    _
  %s27 = ssub.s32 1, %s25
  %s28 = scalar_select 0, %s27, %s25
  loop: start=0, step=1, limit=4
  $region2: #{soft_sensor_forward.1} parent=0 // loop_pre_header
    _
  $region3: #{soft_sensor_forward.1} parent=0 // loop_header
    %s30 = sphi 0, %s34
    %p31 = scmp.ge.s32.totalorder %s30, 4
    %s40 = sphi 0, %s42
    %s43 = sphi 0, %s40
    %s44 = sphi 0, %s43
    %s60 = sphi 0, %s44
    %s64 = sphi 0, %s64
    %s66 = sphi 0, %s64
    %s67 = sphi 0, %s66
    %s81 = sphi 0, %s67
    %s85 = sphi 0, %s85
    %s87 = sphi 0, %s85
    %s88 = sphi 0, %s87
    %s102 = sphi 0, %s88
    %s106 = sphi 0, %s106
    %s108 = sphi 0, %s106
    %s109 = sphi 0, %s108
    %s123 = sphi 0, %s109
    %s127 = sphi 0, %s127
    %s129 = sphi 0, %s127
    %s130 = sphi 0, %s129
    %s144 = sphi 0, %s130
    %s148 = sphi 0, %s148
    %s150 = sphi 0, %s148
    %s151 = sphi 0, %s150
    %s165 = sphi 0, %s151
    %s169 = sphi 0, %s169
    %s171 = sphi 0, %s169
    %s172 = sphi 0, %s171
    %s186 = sphi 0, %s172
    %s190 = sphi 0, %s190
    %s192 = sphi 0, %s190
    %s193 = sphi 0, %s192
    %s207 = sphi 0, %s193
    %s211 = sphi 0, %s211
    %s213 = sphi 0, %s211
    %s214 = sphi 0, %s213
    %s228 = sphi 0, %s214
    %s232 = sphi 0, %s232
    %s234 = sphi 0, %s232
    %s235 = sphi 0, %s234
    %s249 = sphi 0, %s235
    %s253 = sphi 0, %s253
    %s255 = sphi 0, %s253
    %s256 = sphi 0, %s255
    %s270 = sphi 0, %s256
    %s274 = sphi 0, %s274
    %s276 = sphi 0, %s274
    %s277 = sphi 0, %s276
    %s291 = sphi 0, %s277
    %s295 = sphi 0, %s295
    %s297 = sphi 0, %s295
    %s298 = sphi 0, %s297
    %s312 = sphi 0, %s298
    %s316 = sphi 0, %s316
    %s318 = sphi 0, %s316
    %s319 = sphi 0, %s318
    %s333 = sphi 0, %s319
    %s337 = sphi 0, %s337
    %s339 = sphi 0, %s337
    %s340 = sphi 0, %s339
    %s354 = sphi 0, %s340
    %s358 = sphi 0, %s358
    %s360 = sphi 0, %s358
    %s361 = sphi 0, %s360
    %s375 = sphi 0, %s361
    %s379 = sphi 0, %s379
    %s381 = sphi 0, %s379
    %s382 = sphi 0, %s381
    %s396 = sphi 0, %s382
    %s400 = sphi 0, %s400
    %s402 = sphi 0, %s400
    %s403 = sphi 0, %s402
    %s417 = sphi 0, %s403
    %s421 = sphi 0, %s421
    %s423 = sphi 0, %s421
    %s424 = sphi 0, %s423
    %s438 = sphi 0, %s424
    %s442 = sphi 0, %s442
    %s444 = sphi 0, %s442
    %s445 = sphi 0, %s444
    %s459 = sphi 0, %s445
    %s463 = sphi 0, %s463
    %s465 = sphi 0, %s463
    %s466 = sphi 0, %s465
    %s480 = sphi 0, %s466
    %s484 = sphi 0, %s484
    %s486 = sphi 0, %s484
    %s487 = sphi 0, %s486
    %s501 = sphi 0, %s487
    %s505 = sphi 0, %s505
    %s507 = sphi 0, %s505
    %s508 = sphi 0, %s507
    %s522 = sphi 0, %s508
    %s526 = sphi 0, %s526
    %s528 = sphi 0, %s526
    %s529 = sphi 0, %s528
    %s543 = sphi 0, %s529
    %s549 = sphi 0, %s551
    %s552 = sphi 0, %s549
    %s553 = sphi 0, %s552
    %s569 = sphi 0, %s553
  $region4: #{soft_sensor_forward.1} parent=0 // loop_header_branch
    %33 = sbr.rel (%p31) target = $region8
  $region5: #{soft_sensor_forward.1} parent=0 // loop_body
    %s35 = ssub.s32 %s30, 1
    %s36 = ssub.s32 %s30, 2
    %s37 = sadd.s32 %s30, 1
    %s38 = ssub.s32 %s30, %s37
    %p39 = scmp.eq.s32.totalorder %s38, 0
    %s41 = sadd.s32 %s40, 1
    %s42 = scalar_select %p39, %s40, %s41
    %p45 = pneg %p39
    %p46 = scmp.eq.s32.totalorder %s30, 1
    %p47 = por %p45, %p46
    %p48 = scmp.ne.s32.totalorder %s40, %s43
    %p49 = scmp.eq.s32.totalorder %s30, 0
    %p50 = por %p48, %p49
    %p51 = scmp.ne.s32.totalorder %s40, %s43
    %p52 = scmp.eq.s32.totalorder %s35, 1
    %p53 = por %p51, %p52
    %p54 = scmp.ne.s32.totalorder %s43, %s44
    %p55 = scmp.eq.s32.totalorder %s35, 0
    %p56 = por %p54, %p55
    %p57 = scmp.ne.s32.totalorder %s43, %s44
    %p58 = scmp.eq.s32.totalorder %s36, 1
    %p59 = por %p57, %p58
    %p61 = scmp.ne.s32.totalorder %s44, %s60
    %p62 = scmp.eq.s32.totalorder %s36, 0
    %p63 = por %p61, %p62
    %s65 = sadd.s32 %s64, 1
    %p68 = scmp.eq.s32.totalorder %s30, 1
    %p69 = scmp.ne.s32.totalorder %s64, %s66
    %p70 = scmp.eq.s32.totalorder %s30, 0
    %p71 = por %p69, %p70
    %p72 = scmp.ne.s32.totalorder %s64, %s66
    %p73 = scmp.eq.s32.totalorder %s35, 1
    %p74 = por %p72, %p73
    %p75 = scmp.ne.s32.totalorder %s66, %s67
    %p76 = scmp.eq.s32.totalorder %s35, 0
    %p77 = por %p75, %p76
    %p78 = scmp.ne.s32.totalorder %s66, %s67
    %p79 = scmp.eq.s32.totalorder %s36, 1
    %p80 = por %p78, %p79
    %p82 = scmp.ne.s32.totalorder %s67, %s81
    %p83 = scmp.eq.s32.totalorder %s36, 0
    %p84 = por %p82, %p83
    %s86 = sadd.s32 %s85, 1
    %p89 = scmp.eq.s32.totalorder %s30, 1
    %p90 = scmp.ne.s32.totalorder %s85, %s87
    %p91 = scmp.eq.s32.totalorder %s30, 0
    %p92 = por %p90, %p91
    %p93 = scmp.ne.s32.totalorder %s85, %s87
    %p94 = scmp.eq.s32.totalorder %s35, 1
    %p95 = por %p93, %p94
    %p96 = scmp.ne.s32.totalorder %s87, %s88
    %p97 = scmp.eq.s32.totalorder %s35, 0
    %p98 = por %p96, %p97
    %p99 = scmp.ne.s32.totalorder %s87, %s88
    %p100 = scmp.eq.s32.totalorder %s36, 1
    %p101 = por %p99, %p100
    %p103 = scmp.ne.s32.totalorder %s88, %s102
    %p104 = scmp.eq.s32.totalorder %s36, 0
    %p105 = por %p103, %p104
    %s107 = sadd.s32 %s106, 1
    %p110 = scmp.eq.s32.totalorder %s30, 1
    %p111 = scmp.ne.s32.totalorder %s106, %s108
    %p112 = scmp.eq.s32.totalorder %s30, 0
    %p113 = por %p111, %p112
    %p114 = scmp.ne.s32.totalorder %s106, %s108
    %p115 = scmp.eq.s32.totalorder %s35, 1
    %p116 = por %p114, %p115
    %p117 = scmp.ne.s32.totalorder %s108, %s109
    %p118 = scmp.eq.s32.totalorder %s35, 0
    %p119 = por %p117, %p118
    %p120 = scmp.ne.s32.totalorder %s108, %s109
    %p121 = scmp.eq.s32.totalorder %s36, 1
    %p122 = por %p120, %p121
    %p124 = scmp.ne.s32.totalorder %s109, %s123
    %p125 = scmp.eq.s32.totalorder %s36, 0
    %p126 = por %p124, %p125
    %s128 = sadd.s32 %s127, 1
    %p131 = scmp.eq.s32.totalorder %s30, 1
    %p132 = scmp.ne.s32.totalorder %s127, %s129
    %p133 = scmp.eq.s32.totalorder %s30, 0
    %p134 = por %p132, %p133
    %p135 = scmp.ne.s32.totalorder %s127, %s129
    %p136 = scmp.eq.s32.totalorder %s35, 1
    %p137 = por %p135, %p136
    %p138 = scmp.ne.s32.totalorder %s129, %s130
    %p139 = scmp.eq.s32.totalorder %s35, 0
    %p140 = por %p138, %p139
    %p141 = scmp.ne.s32.totalorder %s129, %s130
    %p142 = scmp.eq.s32.totalorder %s36, 1
    %p143 = por %p141, %p142
    %p145 = scmp.ne.s32.totalorder %s130, %s144
    %p146 = scmp.eq.s32.totalorder %s36, 0
    %p147 = por %p145, %p146
    %s149 = sadd.s32 %s148, 1
    %p152 = scmp.eq.s32.totalorder %s30, 1
    %p153 = scmp.ne.s32.totalorder %s148, %s150
    %p154 = scmp.eq.s32.totalorder %s30, 0
    %p155 = por %p153, %p154
    %p156 = scmp.ne.s32.totalorder %s148, %s150
    %p157 = scmp.eq.s32.totalorder %s35, 1
    %p158 = por %p156, %p157
    %p159 = scmp.ne.s32.totalorder %s150, %s151
    %p160 = scmp.eq.s32.totalorder %s35, 0
    %p161 = por %p159, %p160
    %p162 = scmp.ne.s32.totalorder %s150, %s151
    %p163 = scmp.eq.s32.totalorder %s36, 1
    %p164 = por %p162, %p163
    %p166 = scmp.ne.s32.totalorder %s151, %s165
    %p167 = scmp.eq.s32.totalorder %s36, 0
    %p168 = por %p166, %p167
    %s170 = sadd.s32 %s169, 1
    %p173 = scmp.eq.s32.totalorder %s30, 1
    %p174 = scmp.ne.s32.totalorder %s169, %s171
    %p175 = scmp.eq.s32.totalorder %s30, 0
    %p176 = por %p174, %p175
    %p177 = scmp.ne.s32.totalorder %s169, %s171
    %p178 = scmp.eq.s32.totalorder %s35, 1
    %p179 = por %p177, %p178
    %p180 = scmp.ne.s32.totalorder %s171, %s172
    %p181 = scmp.eq.s32.totalorder %s35, 0
    %p182 = por %p180, %p181
    %p183 = scmp.ne.s32.totalorder %s171, %s172
    %p184 = scmp.eq.s32.totalorder %s36, 1
    %p185 = por %p183, %p184
    %p187 = scmp.ne.s32.totalorder %s172, %s186
    %p188 = scmp.eq.s32.totalorder %s36, 0
    %p189 = por %p187, %p188
    %s191 = sadd.s32 %s190, 1
    %p194 = scmp.eq.s32.totalorder %s30, 1
    %p195 = scmp.ne.s32.totalorder %s190, %s192
    %p196 = scmp.eq.s32.totalorder %s30, 0
    %p197 = por %p195, %p196
    %p198 = scmp.ne.s32.totalorder %s190, %s192
    %p199 = scmp.eq.s32.totalorder %s35, 1
    %p200 = por %p198, %p199
    %p201 = scmp.ne.s32.totalorder %s192, %s193
    %p202 = scmp.eq.s32.totalorder %s35, 0
    %p203 = por %p201, %p202
    %p204 = scmp.ne.s32.totalorder %s192, %s193
    %p205 = scmp.eq.s32.totalorder %s36, 1
    %p206 = por %p204, %p205
    %p208 = scmp.ne.s32.totalorder %s193, %s207
    %p209 = scmp.eq.s32.totalorder %s36, 0
    %p210 = por %p208, %p209
    %s212 = sadd.s32 %s211, 1
    %p215 = scmp.eq.s32.totalorder %s30, 1
    %p216 = scmp.ne.s32.totalorder %s211, %s213
    %p217 = scmp.eq.s32.totalorder %s30, 0
    %p218 = por %p216, %p217
    %p219 = scmp.ne.s32.totalorder %s211, %s213
    %p220 = scmp.eq.s32.totalorder %s35, 1
    %p221 = por %p219, %p220
    %p222 = scmp.ne.s32.totalorder %s213, %s214
    %p223 = scmp.eq.s32.totalorder %s35, 0
    %p224 = por %p222, %p223
    %p225 = scmp.ne.s32.totalorder %s213, %s214
    %p226 = scmp.eq.s32.totalorder %s36, 1
    %p227 = por %p225, %p226
    %p229 = scmp.ne.s32.totalorder %s214, %s228
    %p230 = scmp.eq.s32.totalorder %s36, 0
    %p231 = por %p229, %p230
    %s233 = sadd.s32 %s232, 1
    %p236 = scmp.eq.s32.totalorder %s30, 1
    %p237 = scmp.ne.s32.totalorder %s232, %s234
    %p238 = scmp.eq.s32.totalorder %s30, 0
    %p239 = por %p237, %p238
    %p240 = scmp.ne.s32.totalorder %s232, %s234
    %p241 = scmp.eq.s32.totalorder %s35, 1
    %p242 = por %p240, %p241
    %p243 = scmp.ne.s32.totalorder %s234, %s235
    %p244 = scmp.eq.s32.totalorder %s35, 0
    %p245 = por %p243, %p244
    %p246 = scmp.ne.s32.totalorder %s234, %s235
    %p247 = scmp.eq.s32.totalorder %s36, 1
    %p248 = por %p246, %p247
    %p250 = scmp.ne.s32.totalorder %s235, %s249
    %p251 = scmp.eq.s32.totalorder %s36, 0
    %p252 = por %p250, %p251
    %s254 = sadd.s32 %s253, 1
    %p257 = scmp.eq.s32.totalorder %s30, 1
    %p258 = scmp.ne.s32.totalorder %s253, %s255
    %p259 = scmp.eq.s32.totalorder %s30, 0
    %p260 = por %p258, %p259
    %p261 = scmp.ne.s32.totalorder %s253, %s255
    %p262 = scmp.eq.s32.totalorder %s35, 1
    %p263 = por %p261, %p262
    %p264 = scmp.ne.s32.totalorder %s255, %s256
    %p265 = scmp.eq.s32.totalorder %s35, 0
    %p266 = por %p264, %p265
    %p267 = scmp.ne.s32.totalorder %s255, %s256
    %p268 = scmp.eq.s32.totalorder %s36, 1
    %p269 = por %p267, %p268
    %p271 = scmp.ne.s32.totalorder %s256, %s270
    %p272 = scmp.eq.s32.totalorder %s36, 0
    %p273 = por %p271, %p272
    %s275 = sadd.s32 %s274, 1
    %p278 = scmp.eq.s32.totalorder %s30, 1
    %p279 = scmp.ne.s32.totalorder %s274, %s276
    %p280 = scmp.eq.s32.totalorder %s30, 0
    %p281 = por %p279, %p280
    %p282 = scmp.ne.s32.totalorder %s274, %s276
    %p283 = scmp.eq.s32.totalorder %s35, 1
    %p284 = por %p282, %p283
    %p285 = scmp.ne.s32.totalorder %s276, %s277
    %p286 = scmp.eq.s32.totalorder %s35, 0
    %p287 = por %p285, %p286
    %p288 = scmp.ne.s32.totalorder %s276, %s277
    %p289 = scmp.eq.s32.totalorder %s36, 1
    %p290 = por %p288, %p289
    %p292 = scmp.ne.s32.totalorder %s277, %s291
    %p293 = scmp.eq.s32.totalorder %s36, 0
    %p294 = por %p292, %p293
    %s296 = sadd.s32 %s295, 1
    %p299 = scmp.eq.s32.totalorder %s30, 1
    %p300 = scmp.ne.s32.totalorder %s295, %s297
    %p301 = scmp.eq.s32.totalorder %s30, 0
    %p302 = por %p300, %p301
    %p303 = scmp.ne.s32.totalorder %s295, %s297
    %p304 = scmp.eq.s32.totalorder %s35, 1
    %p305 = por %p303, %p304
    %p306 = scmp.ne.s32.totalorder %s297, %s298
    %p307 = scmp.eq.s32.totalorder %s35, 0
    %p308 = por %p306, %p307
    %p309 = scmp.ne.s32.totalorder %s297, %s298
    %p310 = scmp.eq.s32.totalorder %s36, 1
    %p311 = por %p309, %p310
    %p313 = scmp.ne.s32.totalorder %s298, %s312
    %p314 = scmp.eq.s32.totalorder %s36, 0
    %p315 = por %p313, %p314
    %s317 = sadd.s32 %s316, 1
    %p320 = scmp.eq.s32.totalorder %s30, 1
    %p321 = scmp.ne.s32.totalorder %s316, %s318
    %p322 = scmp.eq.s32.totalorder %s30, 0
    %p323 = por %p321, %p322
    %p324 = scmp.ne.s32.totalorder %s316, %s318
    %p325 = scmp.eq.s32.totalorder %s35, 1
    %p326 = por %p324, %p325
    %p327 = scmp.ne.s32.totalorder %s318, %s319
    %p328 = scmp.eq.s32.totalorder %s35, 0
    %p329 = por %p327, %p328
    %p330 = scmp.ne.s32.totalorder %s318, %s319
    %p331 = scmp.eq.s32.totalorder %s36, 1
    %p332 = por %p330, %p331
    %p334 = scmp.ne.s32.totalorder %s319, %s333
    %p335 = scmp.eq.s32.totalorder %s36, 0
    %p336 = por %p334, %p335
    %s338 = sadd.s32 %s337, 1
    %p341 = scmp.eq.s32.totalorder %s30, 1
    %p342 = scmp.ne.s32.totalorder %s337, %s339
    %p343 = scmp.eq.s32.totalorder %s30, 0
    %p344 = por %p342, %p343
    %p345 = scmp.ne.s32.totalorder %s337, %s339
    %p346 = scmp.eq.s32.totalorder %s35, 1
    %p347 = por %p345, %p346
    %p348 = scmp.ne.s32.totalorder %s339, %s340
    %p349 = scmp.eq.s32.totalorder %s35, 0
    %p350 = por %p348, %p349
    %p351 = scmp.ne.s32.totalorder %s339, %s340
    %p352 = scmp.eq.s32.totalorder %s36, 1
    %p353 = por %p351, %p352
    %p355 = scmp.ne.s32.totalorder %s340, %s354
    %p356 = scmp.eq.s32.totalorder %s36, 0
    %p357 = por %p355, %p356
    %s359 = sadd.s32 %s358, 1
    %p362 = scmp.eq.s32.totalorder %s30, 1
    %p363 = scmp.ne.s32.totalorder %s358, %s360
    %p364 = scmp.eq.s32.totalorder %s30, 0
    %p365 = por %p363, %p364
    %p366 = scmp.ne.s32.totalorder %s358, %s360
    %p367 = scmp.eq.s32.totalorder %s35, 1
    %p368 = por %p366, %p367
    %p369 = scmp.ne.s32.totalorder %s360, %s361
    %p370 = scmp.eq.s32.totalorder %s35, 0
    %p371 = por %p369, %p370
    %p372 = scmp.ne.s32.totalorder %s360, %s361
    %p373 = scmp.eq.s32.totalorder %s36, 1
    %p374 = por %p372, %p373
    %p376 = scmp.ne.s32.totalorder %s361, %s375
    %p377 = scmp.eq.s32.totalorder %s36, 0
    %p378 = por %p376, %p377
    %s380 = sadd.s32 %s379, 1
    %p383 = scmp.eq.s32.totalorder %s30, 1
    %p384 = scmp.ne.s32.totalorder %s379, %s381
    %p385 = scmp.eq.s32.totalorder %s30, 0
    %p386 = por %p384, %p385
    %p387 = scmp.ne.s32.totalorder %s379, %s381
    %p388 = scmp.eq.s32.totalorder %s35, 1
    %p389 = por %p387, %p388
    %p390 = scmp.ne.s32.totalorder %s381, %s382
    %p391 = scmp.eq.s32.totalorder %s35, 0
    %p392 = por %p390, %p391
    %p393 = scmp.ne.s32.totalorder %s381, %s382
    %p394 = scmp.eq.s32.totalorder %s36, 1
    %p395 = por %p393, %p394
    %p397 = scmp.ne.s32.totalorder %s382, %s396
    %p398 = scmp.eq.s32.totalorder %s36, 0
    %p399 = por %p397, %p398
    %s401 = sadd.s32 %s400, 1
    %p404 = scmp.eq.s32.totalorder %s30, 1
    %p405 = scmp.ne.s32.totalorder %s400, %s402
    %p406 = scmp.eq.s32.totalorder %s30, 0
    %p407 = por %p405, %p406
    %p408 = scmp.ne.s32.totalorder %s400, %s402
    %p409 = scmp.eq.s32.totalorder %s35, 1
    %p410 = por %p408, %p409
    %p411 = scmp.ne.s32.totalorder %s402, %s403
    %p412 = scmp.eq.s32.totalorder %s35, 0
    %p413 = por %p411, %p412
    %p414 = scmp.ne.s32.totalorder %s402, %s403
    %p415 = scmp.eq.s32.totalorder %s36, 1
    %p416 = por %p414, %p415
    %p418 = scmp.ne.s32.totalorder %s403, %s417
    %p419 = scmp.eq.s32.totalorder %s36, 0
    %p420 = por %p418, %p419
    %s422 = sadd.s32 %s421, 1
    %p425 = scmp.eq.s32.totalorder %s30, 1
    %p426 = scmp.ne.s32.totalorder %s421, %s423
    %p427 = scmp.eq.s32.totalorder %s30, 0
    %p428 = por %p426, %p427
    %p429 = scmp.ne.s32.totalorder %s421, %s423
    %p430 = scmp.eq.s32.totalorder %s35, 1
    %p431 = por %p429, %p430
    %p432 = scmp.ne.s32.totalorder %s423, %s424
    %p433 = scmp.eq.s32.totalorder %s35, 0
    %p434 = por %p432, %p433
    %p435 = scmp.ne.s32.totalorder %s423, %s424
    %p436 = scmp.eq.s32.totalorder %s36, 1
    %p437 = por %p435, %p436
    %p439 = scmp.ne.s32.totalorder %s424, %s438
    %p440 = scmp.eq.s32.totalorder %s36, 0
    %p441 = por %p439, %p440
    %s443 = sadd.s32 %s442, 1
    %p446 = scmp.eq.s32.totalorder %s30, 1
    %p447 = scmp.ne.s32.totalorder %s442, %s444
    %p448 = scmp.eq.s32.totalorder %s30, 0
    %p449 = por %p447, %p448
    %p450 = scmp.ne.s32.totalorder %s442, %s444
    %p451 = scmp.eq.s32.totalorder %s35, 1
    %p452 = por %p450, %p451
    %p453 = scmp.ne.s32.totalorder %s444, %s445
    %p454 = scmp.eq.s32.totalorder %s35, 0
    %p455 = por %p453, %p454
    %p456 = scmp.ne.s32.totalorder %s444, %s445
    %p457 = scmp.eq.s32.totalorder %s36, 1
    %p458 = por %p456, %p457
    %p460 = scmp.ne.s32.totalorder %s445, %s459
    %p461 = scmp.eq.s32.totalorder %s36, 0
    %p462 = por %p460, %p461
    %s464 = sadd.s32 %s463, 1
    %p467 = scmp.eq.s32.totalorder %s30, 1
    %p468 = scmp.ne.s32.totalorder %s463, %s465
    %p469 = scmp.eq.s32.totalorder %s30, 0
    %p470 = por %p468, %p469
    %p471 = scmp.ne.s32.totalorder %s463, %s465
    %p472 = scmp.eq.s32.totalorder %s35, 1
    %p473 = por %p471, %p472
    %p474 = scmp.ne.s32.totalorder %s465, %s466
    %p475 = scmp.eq.s32.totalorder %s35, 0
    %p476 = por %p474, %p475
    %p477 = scmp.ne.s32.totalorder %s465, %s466
    %p478 = scmp.eq.s32.totalorder %s36, 1
    %p479 = por %p477, %p478
    %p481 = scmp.ne.s32.totalorder %s466, %s480
    %p482 = scmp.eq.s32.totalorder %s36, 0
    %p483 = por %p481, %p482
    %s485 = sadd.s32 %s484, 1
    %p488 = scmp.eq.s32.totalorder %s30, 1
    %p489 = scmp.ne.s32.totalorder %s484, %s486
    %p490 = scmp.eq.s32.totalorder %s30, 0
    %p491 = por %p489, %p490
    %p492 = scmp.ne.s32.totalorder %s484, %s486
    %p493 = scmp.eq.s32.totalorder %s35, 1
    %p494 = por %p492, %p493
    %p495 = scmp.ne.s32.totalorder %s486, %s487
    %p496 = scmp.eq.s32.totalorder %s35, 0
    %p497 = por %p495, %p496
    %p498 = scmp.ne.s32.totalorder %s486, %s487
    %p499 = scmp.eq.s32.totalorder %s36, 1
    %p500 = por %p498, %p499
    %p502 = scmp.ne.s32.totalorder %s487, %s501
    %p503 = scmp.eq.s32.totalorder %s36, 0
    %p504 = por %p502, %p503
    %s506 = sadd.s32 %s505, 1
    %p509 = scmp.eq.s32.totalorder %s30, 1
    %p510 = scmp.ne.s32.totalorder %s505, %s507
    %p511 = scmp.eq.s32.totalorder %s30, 0
    %p512 = por %p510, %p511
    %p513 = scmp.ne.s32.totalorder %s505, %s507
    %p514 = scmp.eq.s32.totalorder %s35, 1
    %p515 = por %p513, %p514
    %p516 = scmp.ne.s32.totalorder %s507, %s508
    %p517 = scmp.eq.s32.totalorder %s35, 0
    %p518 = por %p516, %p517
    %p519 = scmp.ne.s32.totalorder %s507, %s508
    %p520 = scmp.eq.s32.totalorder %s36, 1
    %p521 = por %p519, %p520
    %p523 = scmp.ne.s32.totalorder %s508, %s522
    %p524 = scmp.eq.s32.totalorder %s36, 0
    %p525 = por %p523, %p524
    %s527 = sadd.s32 %s526, 1
    %p530 = scmp.eq.s32.totalorder %s30, 1
    %p531 = scmp.ne.s32.totalorder %s526, %s528
    %p532 = scmp.eq.s32.totalorder %s30, 0
    %p533 = por %p531, %p532
    %p534 = scmp.ne.s32.totalorder %s526, %s528
    %p535 = scmp.eq.s32.totalorder %s35, 1
    %p536 = por %p534, %p535
    %p537 = scmp.ne.s32.totalorder %s528, %s529
    %p538 = scmp.eq.s32.totalorder %s35, 0
    %p539 = por %p537, %p538
    %p540 = scmp.ne.s32.totalorder %s528, %s529
    %p541 = scmp.eq.s32.totalorder %s36, 1
    %p542 = por %p540, %p541
    %p544 = scmp.ne.s32.totalorder %s529, %s543
    %p545 = scmp.eq.s32.totalorder %s36, 0
    %p546 = por %p544, %p545
    %s547 = ssub.s32 %s30, %s37
    %p548 = scmp.eq.s32.totalorder %s547, 0
    %s550 = sadd.s32 %s549, 1
    %s551 = scalar_select %p548, %s549, %s550
    %p554 = pneg %p548
    %p555 = scmp.eq.s32.totalorder %s30, 1
    %p556 = por %p554, %p555
    %p557 = scmp.ne.s32.totalorder %s549, %s552
    %p558 = scmp.eq.s32.totalorder %s30, 0
    %p559 = por %p557, %p558
    %p560 = scmp.ne.s32.totalorder %s549, %s552
    %p561 = scmp.eq.s32.totalorder %s35, 1
    %p562 = por %p560, %p561
    %p563 = scmp.ne.s32.totalorder %s552, %s553
    %p564 = scmp.eq.s32.totalorder %s35, 0
    %p565 = por %p563, %p564
    %p566 = scmp.ne.s32.totalorder %s552, %s553
    %p567 = scmp.eq.s32.totalorder %s36, 1
    %p568 = por %p566, %p567
    %p570 = scmp.ne.s32.totalorder %s553, %s569
    %p571 = scmp.eq.s32.totalorder %s36, 0
    %p572 = por %p570, %p571
    %p573 = scmp.le.s32.totalorder 1, %s30
    %p574 = scmp.lt.s32.totalorder %s30, 3
    %p575 = pnand %p573, %p574
    %p576 = pneg %p575
    // Predicated region
    $region9: #{soft_sensor_forward.1} parent=5 // pred_check
      _
    $region10: #{soft_sensor_forward.1} parent=5 // pred_check_branch
      %578 = sbr.rel (%p575) target = $region12
    $region11: #{soft_sensor_forward.1} parent=5 // pred_region
      %s579 = ssub.s32 %s30, 1
      // Predicated region
      $region13: #{soft_sensor_forward.1} parent=11 // pred_check
        %p580 = pneg %p77
      $region14: #{soft_sensor_forward.1} parent=11 // pred_check_branch
        %582 = sbr.rel (%p580) target = $region16
      $region15: #{soft_sensor_forward.1} parent=11 // pred_region
        _
      $region16: #{soft_sensor_forward.1} parent=11 // pred_fallthru
        _
      // Predicated region
      $region17: #{soft_sensor_forward.1} parent=11 // pred_check
        %p583 = pneg %p98
      $region18: #{soft_sensor_forward.1} parent=11 // pred_check_branch
        %585 = sbr.rel (%p583) target = $region20
      $region19: #{soft_sensor_forward.1} parent=11 // pred_region
        _
      $region20: #{soft_sensor_forward.1} parent=11 // pred_fallthru
        _
      // Predicated region
      $region21: #{soft_sensor_forward.1} parent=11 // pred_check
        %p586 = pneg %p119
      $region22: #{soft_sensor_forward.1} parent=11 // pred_check_branch
        %588 = sbr.rel (%p586) target = $region24
      $region23: #{soft_sensor_forward.1} parent=11 // pred_region
        _
      $region24: #{soft_sensor_forward.1} parent=11 // pred_fallthru
        _
      // Predicated region
      $region25: #{soft_sensor_forward.1} parent=11 // pred_check
        %p589 = pneg %p140
      $region26: #{soft_sensor_forward.1} parent=11 // pred_check_branch
        %591 = sbr.rel (%p589) target = $region28
      $region27: #{soft_sensor_forward.1} parent=11 // pred_region
        _
      $region28: #{soft_sensor_forward.1} parent=11 // pred_fallthru
        _
      // Predicated region
      $region29: #{soft_sensor_forward.1} parent=11 // pred_check
        %p592 = pneg %p161
      $region30: #{soft_sensor_forward.1} parent=11 // pred_check_branch
        %594 = sbr.rel (%p592) target = $region32
      $region31: #{soft_sensor_forward.1} parent=11 // pred_region
        _
      $region32: #{soft_sensor_forward.1} parent=11 // pred_fallthru
        _
      // Predicated region
      $region33: #{soft_sensor_forward.1} parent=11 // pred_check
        %p595 = pneg %p182
      $region34: #{soft_sensor_forward.1} parent=11 // pred_check_branch
        %597 = sbr.rel (%p595) target = $region36
      $region35: #{soft_sensor_forward.1} parent=11 // pred_region
        _
      $region36: #{soft_sensor_forward.1} parent=11 // pred_fallthru
        _
      // Predicated region
      $region37: #{soft_sensor_forward.1} parent=11 // pred_check
        %p598 = pneg %p203
      $region38: #{soft_sensor_forward.1} parent=11 // pred_check_branch
        %600 = sbr.rel (%p598) target = $region40
      $region39: #{soft_sensor_forward.1} parent=11 // pred_region
        _
      $region40: #{soft_sensor_forward.1} parent=11 // pred_fallthru
        _
      // Predicated region
      $region41: #{soft_sensor_forward.1} parent=11 // pred_check
        %p601 = pneg %p224
      $region42: #{soft_sensor_forward.1} parent=11 // pred_check_branch
        %603 = sbr.rel (%p601) target = $region44
      $region43: #{soft_sensor_forward.1} parent=11 // pred_region
        _
      $region44: #{soft_sensor_forward.1} parent=11 // pred_fallthru
        _
      // Predicated region
      $region45: #{soft_sensor_forward.1} parent=11 // pred_check
        %p604 = pneg %p245
      $region46: #{soft_sensor_forward.1} parent=11 // pred_check_branch
        %606 = sbr.rel (%p604) target = $region48
      $region47: #{soft_sensor_forward.1} parent=11 // pred_region
        _
      $region48: #{soft_sensor_forward.1} parent=11 // pred_fallthru
        _
      // Predicated region
      $region49: #{soft_sensor_forward.1} parent=11 // pred_check
        %p607 = pneg %p266
      $region50: #{soft_sensor_forward.1} parent=11 // pred_check_branch
        %609 = sbr.rel (%p607) target = $region52
      $region51: #{soft_sensor_forward.1} parent=11 // pred_region
        _
      $region52: #{soft_sensor_forward.1} parent=11 // pred_fallthru
        _
      // Predicated region
      $region53: #{soft_sensor_forward.1} parent=11 // pred_check
        %p610 = pneg %p287
      $region54: #{soft_sensor_forward.1} parent=11 // pred_check_branch
        %612 = sbr.rel (%p610) target = $region56
      $region55: #{soft_sensor_forward.1} parent=11 // pred_region
        _
      $region56: #{soft_sensor_forward.1} parent=11 // pred_fallthru
        _
      // Predicated region
      $region57: #{soft_sensor_forward.1} parent=11 // pred_check
        %p613 = pneg %p308
      $region58: #{soft_sensor_forward.1} parent=11 // pred_check_branch
        %615 = sbr.rel (%p613) target = $region60
      $region59: #{soft_sensor_forward.1} parent=11 // pred_region
        _
      $region60: #{soft_sensor_forward.1} parent=11 // pred_fallthru
        _
      // Predicated region
      $region61: #{soft_sensor_forward.1} parent=11 // pred_check
        %p616 = pneg %p329
      $region62: #{soft_sensor_forward.1} parent=11 // pred_check_branch
        %618 = sbr.rel (%p616) target = $region64
      $region63: #{soft_sensor_forward.1} parent=11 // pred_region
        _
      $region64: #{soft_sensor_forward.1} parent=11 // pred_fallthru
        _
      // Predicated region
      $region65: #{soft_sensor_forward.1} parent=11 // pred_check
        %p619 = pneg %p350
      $region66: #{soft_sensor_forward.1} parent=11 // pred_check_branch
        %621 = sbr.rel (%p619) target = $region68
      $region67: #{soft_sensor_forward.1} parent=11 // pred_region
        _
      $region68: #{soft_sensor_forward.1} parent=11 // pred_fallthru
        _
      // Predicated region
      $region69: #{soft_sensor_forward.1} parent=11 // pred_check
        %p622 = pneg %p371
      $region70: #{soft_sensor_forward.1} parent=11 // pred_check_branch
        %624 = sbr.rel (%p622) target = $region72
      $region71: #{soft_sensor_forward.1} parent=11 // pred_region
        _
      $region72: #{soft_sensor_forward.1} parent=11 // pred_fallthru
        _
      // Predicated region
      $region73: #{soft_sensor_forward.1} parent=11 // pred_check
        %p625 = pneg %p392
      $region74: #{soft_sensor_forward.1} parent=11 // pred_check_branch
        %627 = sbr.rel (%p625) target = $region76
      $region75: #{soft_sensor_forward.1} parent=11 // pred_region
        _
      $region76: #{soft_sensor_forward.1} parent=11 // pred_fallthru
        _
      // Predicated region
      $region77: #{soft_sensor_forward.1} parent=11 // pred_check
        %p628 = pneg %p413
      $region78: #{soft_sensor_forward.1} parent=11 // pred_check_branch
        %630 = sbr.rel (%p628) target = $region80
      $region79: #{soft_sensor_forward.1} parent=11 // pred_region
        _
      $region80: #{soft_sensor_forward.1} parent=11 // pred_fallthru
        _
      // Predicated region
      $region81: #{soft_sensor_forward.1} parent=11 // pred_check
        %p631 = pneg %p434
      $region82: #{soft_sensor_forward.1} parent=11 // pred_check_branch
        %633 = sbr.rel (%p631) target = $region84
      $region83: #{soft_sensor_forward.1} parent=11 // pred_region
        _
      $region84: #{soft_sensor_forward.1} parent=11 // pred_fallthru
        _
      // Predicated region
      $region85: #{soft_sensor_forward.1} parent=11 // pred_check
        %p634 = pneg %p455
      $region86: #{soft_sensor_forward.1} parent=11 // pred_check_branch
        %636 = sbr.rel (%p634) target = $region88
      $region87: #{soft_sensor_forward.1} parent=11 // pred_region
        _
      $region88: #{soft_sensor_forward.1} parent=11 // pred_fallthru
        _
      // Predicated region
      $region89: #{soft_sensor_forward.1} parent=11 // pred_check
        %p637 = pneg %p476
      $region90: #{soft_sensor_forward.1} parent=11 // pred_check_branch
        %639 = sbr.rel (%p637) target = $region92
      $region91: #{soft_sensor_forward.1} parent=11 // pred_region
        _
      $region92: #{soft_sensor_forward.1} parent=11 // pred_fallthru
        _
      // Predicated region
      $region93: #{soft_sensor_forward.1} parent=11 // pred_check
        %p640 = pneg %p497
      $region94: #{soft_sensor_forward.1} parent=11 // pred_check_branch
        %642 = sbr.rel (%p640) target = $region96
      $region95: #{soft_sensor_forward.1} parent=11 // pred_region
        _
      $region96: #{soft_sensor_forward.1} parent=11 // pred_fallthru
        _
      // Predicated region
      $region97: #{soft_sensor_forward.1} parent=11 // pred_check
        %p643 = pneg %p518
      $region98: #{soft_sensor_forward.1} parent=11 // pred_check_branch
        %645 = sbr.rel (%p643) target = $region100
      $region99: #{soft_sensor_forward.1} parent=11 // pred_region
        _
      $region100: #{soft_sensor_forward.1} parent=11 // pred_fallthru
        _
      // Predicated region
      $region101: #{soft_sensor_forward.1} parent=11 // pred_check
        %p646 = pneg %p539
      $region102: #{soft_sensor_forward.1} parent=11 // pred_check_branch
        %648 = sbr.rel (%p646) target = $region104
      $region103: #{soft_sensor_forward.1} parent=11 // pred_region
        _
      $region104: #{soft_sensor_forward.1} parent=11 // pred_fallthru
        _
    $region12: #{soft_sensor_forward.1} parent=5 // pred_fallthru
      _
    %p649 = scmp.lt.s32.totalorder %s30, 2
    // Predicated region
    $region105: #{soft_sensor_forward.1} parent=5 // pred_check
      %p650 = pneg %p649
    $region106: #{soft_sensor_forward.1} parent=5 // pred_check_branch
      %652 = sbr.rel (%p650) target = $region108
    $region107: #{soft_sensor_forward.1} parent=5 // pred_region
      // Predicated region
      $region109: #{soft_sensor_forward.1} parent=107 // pred_check
        %p653 = pneg %p50
      $region110: #{soft_sensor_forward.1} parent=107 // pred_check_branch
        %655 = sbr.rel (%p653) target = $region112
      $region111: #{soft_sensor_forward.1} parent=107 // pred_region
        %p656 = scmp.lt.s32.totalorder %s30, 1
        %s657 = scalar_select %p656, %s30, 1
        %s658 = smul.addr %s657, 32
        %s659 = smul.addr %s658, 4
        %s660 = scalar_lea.vmem %s0, %s659
      $region112: #{soft_sensor_forward.1} parent=107 // pred_fallthru
        _
    $region108: #{soft_sensor_forward.1} parent=5 // pred_fallthru
      _
    %p661 = scmp.le.s32.totalorder 1, %s30
    %p662 = scmp.lt.s32.totalorder %s30, 3
    %p663 = pnand %p661, %p662
    %p664 = pneg %p663
    // Predicated region
    $region113: #{soft_sensor_forward.1} parent=5 // pred_check
      _
    $region114: #{soft_sensor_forward.1} parent=5 // pred_check_branch
      %666 = sbr.rel (%p663) target = $region116
    $region115: #{soft_sensor_forward.1} parent=5 // pred_region
      %s667 = ssub.s32 %s30, 1
      %p668 = scmp.lt.s32.totalorder %s35, 1
      %s669 = scalar_select %p668, %s35, 1
      %s670 = smul.addr %s669, 32
      %s671 = smul.addr %s670, 4
      %s672 = scalar_lea.vmem %s0, %s671
      %p673 = pneg %p56
      %p674 = pneg %p53
      %p675 = pneg %p77
      %p676 = pneg %p74
      %p677 = pneg %p98
      %p678 = pneg %p95
      %p679 = pneg %p119
      %p680 = pneg %p116
      %p681 = pneg %p140
      %p682 = pneg %p137
      %p683 = pneg %p161
      %p684 = pneg %p158
      %p685 = pneg %p182
      %p686 = pneg %p179
      %p687 = pneg %p203
      %p688 = pneg %p200
      %p689 = pneg %p224
      %p690 = pneg %p221
      %p691 = pneg %p245
      %p692 = pneg %p242
      %p693 = pneg %p266
      %p694 = pneg %p263
      %p695 = pneg %p287
      %p696 = pneg %p284
      %p697 = pneg %p308
      %p698 = pneg %p305
      %p699 = pneg %p329
      %p700 = pneg %p326
      %p701 = pneg %p350
      %p702 = pneg %p347
      %p703 = pneg %p371
      %p704 = pneg %p368
      %p705 = pneg %p392
      %p706 = pneg %p389
      %p707 = pneg %p413
      %p708 = pneg %p410
      %p709 = pneg %p434
      %p710 = pneg %p431
      %p711 = pneg %p455
      %p712 = pneg %p452
      %p713 = pneg %p476
      %p714 = pneg %p473
      %p715 = pneg %p497
      %p716 = pneg %p494
      %p717 = pneg %p518
      %p718 = pneg %p515
      %p719 = pneg %p539
      %p720 = pneg %p536
      %p721 = pneg %p565
      %p722 = pneg %p562
      %p723 = scmp.lt.s32.totalorder %s35, 1
      %s724 = scalar_select %p723, %s35, 1
      %s725 = scalar_lea.vmem %s24, %s724
      %p726 = scmp.lt.s32.totalorder %s35, 1
      %s727 = scalar_select %p726, %s35, 1
      %s728 = smul.addr %s727, 32
      %s729 = smul.addr %s728, 4
      %s730 = scalar_lea.vmem %s0, %s729
      %p731 = scmp.lt.s32.totalorder %s35, 1
      %s732 = scalar_select %p731, %s35, 1
      %s733 = scalar_lea.vmem %s24, %s732
      %v735 = vld [vmem:[%s730] sm:$0xf]
      %v736 = vld [vmem:[%s730 + $0x4] sm:$0xf]
      %v737 = vld [vmem:[%s730 + $0x8] sm:$0xf]
      %v738 = vld [vmem:[%s730 + $0xc] sm:$0xf]
      %v739 = vld [vmem:[%s730 + $0x10] sm:$0xf]
      %v740 = vld [vmem:[%s730 + $0x14] sm:$0xf]
      %v741 = vld [vmem:[%s730 + $0x18] sm:$0xf]
      %v742 = vld [vmem:[%s730 + $0x1c] sm:$0xf]
      %v743 = vld [vmem:[%s730 + $0x20] sm:$0xf]
      %v744 = vld [vmem:[%s730 + $0x24] sm:$0xf]
      %v745 = vld [vmem:[%s730 + $0x28] sm:$0xf]
      %v746 = vld [vmem:[%s730 + $0x2c] sm:$0xf]
      %v747 = vld [vmem:[%s730 + $0x30] sm:$0xf]
      %v748 = vld [vmem:[%s730 + $0x34] sm:$0xf]
      %v749 = vld [vmem:[%s730 + $0x38] sm:$0xf]
      %v750 = vld [vmem:[%s730 + $0x3c] sm:$0xf]
      %v751 = vld [vmem:[%s730 + $0x40] sm:$0xf]
      %v752 = vld [vmem:[%s730 + $0x44] sm:$0xf]
      %v753 = vld [vmem:[%s730 + $0x48] sm:$0xf]
      %v754 = vld [vmem:[%s730 + $0x4c] sm:$0xf]
      %v755 = vld [vmem:[%s730 + $0x50] sm:$0xf]
      %v756 = vld [vmem:[%s730 + $0x54] sm:$0xf]
      %v757 = vld [vmem:[%s730 + $0x58] sm:$0xf]
      %v758 = vld [vmem:[%s730 + $0x5c] sm:$0xf]
      %v759 = vld [vmem:[%s730 + $0x60] sm:$0xf]
      %v760 = vld [vmem:[%s730 + $0x64] sm:$0xf]
      %v761 = vld [vmem:[%s730 + $0x68] sm:$0xf]
      %v762 = vld [vmem:[%s730 + $0x6c] sm:$0xf]
      %v763 = vld [vmem:[%s730 + $0x70] sm:$0xf]
      %v764 = vld [vmem:[%s730 + $0x74] sm:$0xf]
      %v765 = vld [vmem:[%s730 + $0x78] sm:$0xf]
      %v766 = vld [vmem:[%s730 + $0x7c] sm:$0xf]
      %v767 = vld [vmem:[%s1] sm:$0xff]
      %v768 = vld [vmem:[%s1 + $0x8] sm:$0xff]
      %v769 = vld [vmem:[%s1 + $0x10] sm:$0xff]
      %v770 = vld [vmem:[%s1 + $0x18] sm:$0xff]
      %v771 = vld [vmem:[%s1 + $0x20] sm:$0xff]
      %v772 = vld [vmem:[%s1 + $0x28] sm:$0xff]
      %v773 = vld [vmem:[%s1 + $0x30] sm:$0xff]
      %v774 = vld [vmem:[%s1 + $0x38] sm:$0xff]
      %v775 = vld [vmem:[%s1 + $0x40] sm:$0xff]
      %v776 = vld [vmem:[%s1 + $0x48] sm:$0xff]
      %v777 = vld [vmem:[%s1 + $0x50] sm:$0xff]
      %v778 = vld [vmem:[%s1 + $0x58] sm:$0xff]
      %v779 = vld [vmem:[%s1 + $0x60] sm:$0xff]
      %v780 = vld [vmem:[%s1 + $0x68] sm:$0xff]
      %v781 = vld [vmem:[%s1 + $0x70] sm:$0xff]
      %v782 = vld [vmem:[%s1 + $0x78] sm:$0xff]
      %v783 = vld [vmem:[%s1 + $0x80] sm:$0xff]
      %v784 = vld [vmem:[%s1 + $0x88] sm:$0xff]
      %v785 = vld [vmem:[%s1 + $0x90] sm:$0xff]
      %v786 = vld [vmem:[%s1 + $0x98] sm:$0xff]
      %v787 = vld [vmem:[%s1 + $0xa0] sm:$0xff]
      %v788 = vld [vmem:[%s1 + $0xa8] sm:$0xff]
      %v789 = vld [vmem:[%s1 + $0xb0] sm:$0xff]
      %v790 = vld [vmem:[%s1 + $0xb8] sm:$0xff]
      %v791 = vld [vmem:[%s1 + $0xc0] sm:$0xff]
      %v792 = vld [vmem:[%s1 + $0xc8] sm:$0xff]
      %v793 = vld [vmem:[%s1 + $0xd0] sm:$0xff]
      %v794 = vld [vmem:[%s1 + $0xd8] sm:$0xff]
      %v795 = vld [vmem:[%s1 + $0xe0] sm:$0xff]
      %v796 = vld [vmem:[%s1 + $0xe8] sm:$0xff]
      %v797 = vld [vmem:[%s1 + $0xf0] sm:$0xff]
      %v798 = vld [vmem:[%s1 + $0xf8] sm:$0xff]
      %v799 = vld [vmem:[%s1 + $0x100] sm:$0xff]
      %v800 = vld [vmem:[%s1 + $0x108] sm:$0xff]
      %v801 = vld [vmem:[%s1 + $0x110] sm:$0xff]
      %v802 = vld [vmem:[%s1 + $0x118] sm:$0xff]
      %v803 = vld [vmem:[%s1 + $0x120] sm:$0xff]
      %v804 = vld [vmem:[%s1 + $0x128] sm:$0xff]
      %v805 = vld [vmem:[%s1 + $0x130] sm:$0xff]
      %v806 = vld [vmem:[%s1 + $0x138] sm:$0xff]
      %v807 = vld [vmem:[%s1 + $0x140] sm:$0xff]
      %v808 = vld [vmem:[%s1 + $0x148] sm:$0xff]
      %v809 = vld [vmem:[%s1 + $0x150] sm:$0xff]
      %v810 = vld [vmem:[%s1 + $0x158] sm:$0xff]
      %v811 = vld [vmem:[%s1 + $0x160] sm:$0xff]
      %v812 = vld [vmem:[%s1 + $0x168] sm:$0xff]
      %v813 = vld [vmem:[%s1 + $0x170] sm:$0xff]
      %v814 = vld [vmem:[%s1 + $0x178] sm:$0xff]
      %v815 = vld [vmem:[%s1 + $0x180] sm:$0xff]
      %v816 = vld [vmem:[%s1 + $0x188] sm:$0xff]
      %v817 = vld [vmem:[%s1 + $0x190] sm:$0xff]
      %v818 = vld [vmem:[%s1 + $0x198] sm:$0xff]
      %v819 = vld [vmem:[%s1 + $0x1a0] sm:$0xff]
      %v820 = vld [vmem:[%s1 + $0x1a8] sm:$0xff]
      %v821 = vld [vmem:[%s1 + $0x1b0] sm:$0xff]
      %v822 = vld [vmem:[%s1 + $0x1b8] sm:$0xff]
      %v823 = vld [vmem:[%s1 + $0x1c0] sm:$0xff]
      %v824 = vld [vmem:[%s1 + $0x1c8] sm:$0xff]
      %v825 = vld [vmem:[%s1 + $0x1d0] sm:$0xff]
      %v826 = vld [vmem:[%s1 + $0x1d8] sm:$0xff]
      %v827 = vld [vmem:[%s1 + $0x1e0] sm:$0xff]
      %v828 = vld [vmem:[%s1 + $0x1e8] sm:$0xff]
      %v829 = vld [vmem:[%s1 + $0x1f0] sm:$0xff]
      %v830 = vld [vmem:[%s1 + $0x1f8] sm:$0xff]
      %v831 = vld [vmem:[%s1 + $0x200] sm:$0xff]
      %v832 = vld [vmem:[%s1 + $0x208] sm:$0xff]
      %v833 = vld [vmem:[%s1 + $0x210] sm:$0xff]
      %v834 = vld [vmem:[%s1 + $0x218] sm:$0xff]
      %v835 = vld [vmem:[%s1 + $0x220] sm:$0xff]
      %v836 = vld [vmem:[%s1 + $0x228] sm:$0xff]
      %v837 = vld [vmem:[%s1 + $0x230] sm:$0xff]
      %v838 = vld [vmem:[%s1 + $0x238] sm:$0xff]
      %v911 = vunpack.c.l.b16 %v767
      %v912 = vunpack.c.h.b16 %v767
      %v913 = vunpack.c.l.b16 %v768
      %v914 = vunpack.c.h.b16 %v768
      %v915 = vunpack.c.l.b16 %v769
      %v916 = vunpack.c.h.b16 %v769
      %v917 = vunpack.c.l.b16 %v770
      %v918 = vunpack.c.h.b16 %v770
      %v919 = vunpack.c.l.b16 %v771
      %v920 = vunpack.c.h.b16 %v771
      %v921 = vunpack.c.l.b16 %v772
      %v922 = vunpack.c.h.b16 %v772
      %v923 = vunpack.c.l.b16 %v773
      %v924 = vunpack.c.h.b16 %v773
      %v925 = vunpack.c.l.b16 %v774
      %v926 = vunpack.c.h.b16 %v774
      %v927 = vunpack.c.l.b16 %v775
      %v928 = vunpack.c.h.b16 %v775
      %v929 = vunpack.c.l.b16 %v776
      %v930 = vunpack.c.h.b16 %v776
      %v931 = vunpack.c.l.b16 %v777
      %v932 = vunpack.c.h.b16 %v777
      %v933 = vunpack.c.l.b16 %v778
      %v934 = vunpack.c.h.b16 %v778
      %v935 = vunpack.c.l.b16 %v779
      %v936 = vunpack.c.h.b16 %v779
      %v937 = vunpack.c.l.b16 %v780
      %v938 = vunpack.c.h.b16 %v780
      %v939 = vunpack.c.l.b16 %v781
      %v940 = vunpack.c.h.b16 %v781
      %v941 = vunpack.c.l.b16 %v782
      %v942 = vunpack.c.h.b16 %v782
      %v943 = vunpack.c.l.b16 %v783
      %v944 = vunpack.c.h.b16 %v783
      %v945 = vunpack.c.l.b16 %v784
      %v946 = vunpack.c.h.b16 %v784
      %v947 = vunpack.c.l.b16 %v785
      %v948 = vunpack.c.h.b16 %v785
      %v949 = vunpack.c.l.b16 %v786
      %v950 = vunpack.c.h.b16 %v786
      %v951 = vunpack.c.l.b16 %v787
      %v952 = vunpack.c.h.b16 %v787
      %v953 = vunpack.c.l.b16 %v788
      %v954 = vunpack.c.h.b16 %v788
      %v955 = vunpack.c.l.b16 %v789
      %v956 = vunpack.c.h.b16 %v789
      %v957 = vunpack.c.l.b16 %v790
      %v958 = vunpack.c.h.b16 %v790
      %v959 = vunpack.c.l.b16 %v791
      %v960 = vunpack.c.h.b16 %v791
      %v961 = vunpack.c.l.b16 %v792
      %v962 = vunpack.c.h.b16 %v792
      %v963 = vunpack.c.l.b16 %v793
      %v964 = vunpack.c.h.b16 %v793
      %v965 = vunpack.c.l.b16 %v794
      %v966 = vunpack.c.h.b16 %v794
      %v967 = vunpack.c.l.b16 %v795
      %v968 = vunpack.c.h.b16 %v795
      %v969 = vunpack.c.l.b16 %v796
      %v970 = vunpack.c.h.b16 %v796
      %v971 = vunpack.c.l.b16 %v797
      %v972 = vunpack.c.h.b16 %v797
      %v973 = vunpack.c.l.b16 %v798
      %v974 = vunpack.c.h.b16 %v798
      %v975 = vunpack.c.l.b16 %v799
      %v976 = vunpack.c.h.b16 %v799
      %v977 = vunpack.c.l.b16 %v800
      %v978 = vunpack.c.h.b16 %v800
      %v979 = vunpack.c.l.b16 %v801
      %v980 = vunpack.c.h.b16 %v801
      %v981 = vunpack.c.l.b16 %v802
      %v982 = vunpack.c.h.b16 %v802
      %v983 = vunpack.c.l.b16 %v803
      %v984 = vunpack.c.h.b16 %v803
      %v985 = vunpack.c.l.b16 %v804
      %v986 = vunpack.c.h.b16 %v804
      %v987 = vunpack.c.l.b16 %v805
      %v988 = vunpack.c.h.b16 %v805
      %v989 = vunpack.c.l.b16 %v806
      %v990 = vunpack.c.h.b16 %v806
      %v991 = vunpack.c.l.b16 %v807
      %v992 = vunpack.c.h.b16 %v807
      %v993 = vunpack.c.l.b16 %v808
      %v994 = vunpack.c.h.b16 %v808
      %v995 = vunpack.c.l.b16 %v809
      %v996 = vunpack.c.h.b16 %v809
      %v997 = vunpack.c.l.b16 %v810
      %v998 = vunpack.c.h.b16 %v810
      %v999 = vunpack.c.l.b16 %v811
      %v1000 = vunpack.c.h.b16 %v811
      %v1001 = vunpack.c.l.b16 %v812
      %v1002 = vunpack.c.h.b16 %v812
      %v1003 = vunpack.c.l.b16 %v813
      %v1004 = vunpack.c.h.b16 %v813
      %v1005 = vunpack.c.l.b16 %v814
      %v1006 = vunpack.c.h.b16 %v814
      %v1007 = vunpack.c.l.b16 %v815
      %v1008 = vunpack.c.h.b16 %v815
      %v1009 = vunpack.c.l.b16 %v816
      %v1010 = vunpack.c.h.b16 %v816
      %v1011 = vunpack.c.l.b16 %v817
      %v1012 = vunpack.c.h.b16 %v817
      %v1013 = vunpack.c.l.b16 %v818
      %v1014 = vunpack.c.h.b16 %v818
      %v1015 = vunpack.c.l.b16 %v819
      %v1016 = vunpack.c.h.b16 %v819
      %v1017 = vunpack.c.l.b16 %v820
      %v1018 = vunpack.c.h.b16 %v820
      %v1019 = vunpack.c.l.b16 %v821
      %v1020 = vunpack.c.h.b16 %v821
      %v1021 = vunpack.c.l.b16 %v822
      %v1022 = vunpack.c.h.b16 %v822
      %v1023 = vunpack.c.l.b16 %v823
      %v1024 = vunpack.c.h.b16 %v823
      %v1025 = vunpack.c.l.b16 %v824
      %v1026 = vunpack.c.h.b16 %v824
      %v1027 = vunpack.c.l.b16 %v825
      %v1028 = vunpack.c.h.b16 %v825
      %v1029 = vunpack.c.l.b16 %v826
      %v1030 = vunpack.c.h.b16 %v826
      %v1031 = vunpack.c.l.b16 %v827
      %v1032 = vunpack.c.h.b16 %v827
      %v1033 = vunpack.c.l.b16 %v828
      %v1034 = vunpack.c.h.b16 %v828
      %v1035 = vunpack.c.l.b16 %v829
      %v1036 = vunpack.c.h.b16 %v829
      %v1037 = vunpack.c.l.b16 %v830
      %v1038 = vunpack.c.h.b16 %v830
      %v1039 = vunpack.c.l.b16 %v831
      %v1040 = vunpack.c.h.b16 %v831
      %v1041 = vunpack.c.l.b16 %v832
      %v1042 = vunpack.c.h.b16 %v832
      %v1043 = vunpack.c.l.b16 %v833
      %v1044 = vunpack.c.h.b16 %v833
      %v1045 = vunpack.c.l.b16 %v834
      %v1046 = vunpack.c.h.b16 %v834
      %v1047 = vunpack.c.l.b16 %v835
      %v1048 = vunpack.c.h.b16 %v835
      %v1049 = vunpack.c.l.b16 %v836
      %v1050 = vunpack.c.h.b16 %v836
      %v1051 = vunpack.c.l.b16 %v837
      %v1052 = vunpack.c.h.b16 %v837
      %v1053 = vunpack.c.l.b16 %v838
      %v1054 = vunpack.c.h.b16 %v838
      %v1055 = vpack.c.b16 %v913, %v911
      %v1056 = vpack.c.b16 %v914, %v912
      %v1057 = vpack.c.b16 %v917, %v915
      %v1058 = vpack.c.b16 %v918, %v916
      %v1059 = vpack.c.b16 %v921, %v919
      %v1060 = vpack.c.b16 %v922, %v920
      %v1061 = vpack.c.b16 %v925, %v923
      %v1062 = vpack.c.b16 %v926, %v924
      %v1063 = vpack.c.b16 %v929, %v927
      %v1064 = vpack.c.b16 %v930, %v928
      %v1065 = vpack.c.b16 %v933, %v931
      %v1066 = vpack.c.b16 %v934, %v932
      %v1067 = vpack.c.b16 %v937, %v935
      %v1068 = vpack.c.b16 %v938, %v936
      %v1069 = vpack.c.b16 %v941, %v939
      %v1070 = vpack.c.b16 %v942, %v940
      %v1071 = vpack.c.b16 %v945, %v943
      %v1072 = vpack.c.b16 %v946, %v944
      %v1073 = vpack.c.b16 %v949, %v947
      %v1074 = vpack.c.b16 %v950, %v948
      %v1075 = vpack.c.b16 %v953, %v951
      %v1076 = vpack.c.b16 %v954, %v952
      %v1077 = vpack.c.b16 %v957, %v955
      %v1078 = vpack.c.b16 %v958, %v956
      %v1079 = vpack.c.b16 %v961, %v959
      %v1080 = vpack.c.b16 %v962, %v960
      %v1081 = vpack.c.b16 %v965, %v963
      %v1082 = vpack.c.b16 %v966, %v964
      %v1083 = vpack.c.b16 %v969, %v967
      %v1084 = vpack.c.b16 %v970, %v968
      %v1085 = vpack.c.b16 %v973, %v971
      %v1086 = vpack.c.b16 %v974, %v972
      %v1087 = vpack.c.b16 %v977, %v975
      %v1088 = vpack.c.b16 %v978, %v976
      %v1089 = vpack.c.b16 %v981, %v979
      %v1090 = vpack.c.b16 %v982, %v980
      %v1091 = vpack.c.b16 %v985, %v983
      %v1092 = vpack.c.b16 %v986, %v984
      %v1093 = vpack.c.b16 %v989, %v987
      %v1094 = vpack.c.b16 %v990, %v988
      %v1095 = vpack.c.b16 %v993, %v991
      %v1096 = vpack.c.b16 %v994, %v992
      %v1097 = vpack.c.b16 %v997, %v995
      %v1098 = vpack.c.b16 %v998, %v996
      %v1099 = vpack.c.b16 %v1001, %v999
      %v1100 = vpack.c.b16 %v1002, %v1000
      %v1101 = vpack.c.b16 %v1005, %v1003
      %v1102 = vpack.c.b16 %v1006, %v1004
      %v1103 = vpack.c.b16 %v1009, %v1007
      %v1104 = vpack.c.b16 %v1010, %v1008
      %v1105 = vpack.c.b16 %v1013, %v1011
      %v1106 = vpack.c.b16 %v1014, %v1012
      %v1107 = vpack.c.b16 %v1017, %v1015
      %v1108 = vpack.c.b16 %v1018, %v1016
      %v1109 = vpack.c.b16 %v1021, %v1019
      %v1110 = vpack.c.b16 %v1022, %v1020
      %v1111 = vpack.c.b16 %v1025, %v1023
      %v1112 = vpack.c.b16 %v1026, %v1024
      %v1113 = vpack.c.b16 %v1029, %v1027
      %v1114 = vpack.c.b16 %v1030, %v1028
      %v1115 = vpack.c.b16 %v1033, %v1031
      %v1116 = vpack.c.b16 %v1034, %v1032
      %v1117 = vpack.c.b16 %v1037, %v1035
      %v1118 = vpack.c.b16 %v1038, %v1036
      %v1119 = vpack.c.b16 %v1041, %v1039
      %v1120 = vpack.c.b16 %v1042, %v1040
      %v1121 = vpack.c.b16 %v1045, %v1043
      %v1122 = vpack.c.b16 %v1046, %v1044
      %v1123 = vpack.c.b16 %v1049, %v1047
      %v1124 = vpack.c.b16 %v1050, %v1048
      %v1125 = vpack.c.b16 %v1053, %v1051
      %v1126 = vpack.c.b16 %v1054, %v1052
      %v1231 = vunpack.c.l.b16 %v735
      %v1232 = vunpack.c.l.b16 %v736
      %v1233 = vunpack.c.l.b16 %v737
      %v1234 = vunpack.c.l.b16 %v738
      %v1235 = vunpack.c.l.b16 %v739
      %v1236 = vunpack.c.l.b16 %v740
      %v1237 = vunpack.c.l.b16 %v741
      %v1238 = vunpack.c.l.b16 %v742
      %v1239 = vunpack.c.l.b16 %v743
      %v1240 = vunpack.c.l.b16 %v744
      %v1241 = vunpack.c.l.b16 %v745
      %v1242 = vunpack.c.l.b16 %v746
      %v1243 = vunpack.c.l.b16 %v747
      %v1244 = vunpack.c.l.b16 %v748
      %v1245 = vunpack.c.l.b16 %v749
      %v1246 = vunpack.c.l.b16 %v750
      %v1247 = vunpack.c.l.b16 %v751
      %v1248 = vunpack.c.l.b16 %v752
      %v1249 = vunpack.c.l.b16 %v753
      %v1250 = vunpack.c.l.b16 %v754
      %v1251 = vunpack.c.l.b16 %v755
      %v1252 = vunpack.c.l.b16 %v756
      %v1253 = vunpack.c.l.b16 %v757
      %v1254 = vunpack.c.l.b16 %v758
      %v1255 = vunpack.c.l.b16 %v759
      %v1256 = vunpack.c.l.b16 %v760
      %v1257 = vunpack.c.l.b16 %v761
      %v1258 = vunpack.c.l.b16 %v762
      %v1259 = vunpack.c.l.b16 %v763
      %v1260 = vunpack.c.l.b16 %v764
      %v1261 = vunpack.c.l.b16 %v765
      %v1262 = vunpack.c.l.b16 %v766
      %v1263 = vpack.c.b16 %v1232, %v1231
      %v1264 = vpack.c.b16 %v1234, %v1233
      %v1265 = vpack.c.b16 %v1236, %v1235
      %v1266 = vpack.c.b16 %v1238, %v1237
      %v1267 = vpack.c.b16 %v1240, %v1239
      %v1268 = vpack.c.b16 %v1242, %v1241
      %v1269 = vpack.c.b16 %v1244, %v1243
      %v1270 = vpack.c.b16 %v1246, %v1245
      %v1271 = vpack.c.b16 %v1248, %v1247
      %v1272 = vpack.c.b16 %v1250, %v1249
      %v1273 = vpack.c.b16 %v1252, %v1251
      %v1274 = vpack.c.b16 %v1254, %v1253
      %v1275 = vpack.c.b16 %v1256, %v1255
      %v1276 = vpack.c.b16 %v1258, %v1257
      %v1277 = vpack.c.b16 %v1260, %v1259
      %v1278 = vpack.c.b16 %v1262, %v1261
      %1295 = vmatprep.subr.bf16.mxu0 0
      %1296 = vmatpush1.bf16.msra.mxu0 %v1263
      %1297 = vmatprep.subr.bf16.mxu0 0
      %1298 = vmatpush1.bf16.msra.mxu0 %v1264
      %1299 = vmatprep.subr.bf16.mxu0 0
      %1300 = vmatpush1.bf16.msra.mxu0 %v1265
      %1301 = vmatprep.subr.bf16.mxu0 0
      %1302 = vmatpush1.bf16.msra.mxu0 %v1266
      %1303 = vmatprep.subr.bf16.mxu0 0
      %1304 = vmatpush1.bf16.msra.mxu0 %v1267
      %1305 = vmatprep.subr.bf16.mxu0 0
      %1306 = vmatpush1.bf16.msra.mxu0 %v1268
      %1307 = vmatprep.subr.bf16.mxu0 0
      %1308 = vmatpush1.bf16.msra.mxu0 %v1269
      %1309 = vmatprep.subr.bf16.mxu0 0
      %1310 = vmatpush1.bf16.msra.mxu0 %v1270
      %1311 = vmatprep.subr.bf16.mxu0 0
      %1312 = vmatpush1.bf16.msra.mxu0 %v1271
      %1313 = vmatprep.subr.bf16.mxu0 0
      %1314 = vmatpush1.bf16.msra.mxu0 %v1272
      %1315 = vmatprep.subr.bf16.mxu0 0
      %1316 = vmatpush1.bf16.msra.mxu0 %v1273
      %1317 = vmatprep.subr.bf16.mxu0 0
      %1318 = vmatpush1.bf16.msra.mxu0 %v1274
      %1319 = vmatprep.subr.bf16.mxu0 0
      %1320 = vmatpush1.bf16.msra.mxu0 %v1275
      %1321 = vmatprep.subr.bf16.mxu0 0
      %1322 = vmatpush1.bf16.msra.mxu0 %v1276
      %1323 = vmatprep.subr.bf16.mxu0 0
      %1324 = vmatpush1.bf16.msra.mxu0 %v1277
      %1325 = vmatprep.subr.bf16.mxu0 0
      %1326 = vmatpush1.bf16.msra.mxu0 %v1278
      %1327 = vmatprep.mubr.bf16.mxu0 %v1056
      %1328 = vmatmul.mubr.bf16.gmra.mrb[0].mxu0 %v1055
      %v1329 = vpop.f32.mrb[0].mxu0
      %v1330 = vadd.f32 0.0, %v1329
      %v1331 = vpop.f32.mrb[0].mxu0
      %v1332 = vpop.f32.mrb[0].mxu0
      %v1333 = vadd.f32 0.0, %v1332
      %v1334 = vpop.f32.mrb[0].mxu0
      %1335 = vmatprep.mubr.bf16.mxu0 %v1058
      %1336 = vmatmul.mubr.bf16.gmra.mrb[0].mxu0 %v1057
      %v1337 = vpop.f32.mrb[0].mxu0
      %v1338 = vadd.f32 0.0, %v1337
      %v1339 = vpop.f32.mrb[0].mxu0
      %v1340 = vpop.f32.mrb[0].mxu0
      %v1341 = vadd.f32 0.0, %v1340
      %v1342 = vpop.f32.mrb[0].mxu0
      %1343 = vmatprep.mubr.bf16.mxu0 %v1060
      %1344 = vmatmul.mubr.bf16.gmra.mrb[0].mxu0 %v1059
      %v1345 = vpop.f32.mrb[0].mxu0
      %v1346 = vadd.f32 0.0, %v1345
      %v1347 = vpop.f32.mrb[0].mxu0
      %v1348 = vpop.f32.mrb[0].mxu0
      %v1349 = vadd.f32 0.0, %v1348
      %v1350 = vpop.f32.mrb[0].mxu0
      %1351 = vmatprep.mubr.bf16.mxu0 %v1062
      %1352 = vmatmul.mubr.bf16.gmra.mrb[0].mxu0 %v1061
      %v1353 = vpop.f32.mrb[0].mxu0
      %v1354 = vadd.f32 0.0, %v1353
      %v1355 = vpop.f32.mrb[0].mxu0
      %v1356 = vpop.f32.mrb[0].mxu0
      %v1357 = vadd.f32 0.0, %v1356
      %v1358 = vpop.f32.mrb[0].mxu0
      %1359 = vmatprep.mubr.bf16.mxu0 %v1064
      %1360 = vmatmul.mubr.bf16.gmra.mrb[0].mxu0 %v1063
      %v1361 = vpop.f32.mrb[0].mxu0
      %v1362 = vadd.f32 0.0, %v1361
      %v1363 = vpop.f32.mrb[0].mxu0
      %v1364 = vpop.f32.mrb[0].mxu0
      %v1365 = vadd.f32 0.0, %v1364
      %v1366 = vpop.f32.mrb[0].mxu0
      %1367 = vmatprep.mubr.bf16.mxu0 %v1066
      %1368 = vmatmul.mubr.bf16.gmra.mrb[0].mxu0 %v1065
      %v1369 = vpop.f32.mrb[0].mxu0
      %v1370 = vadd.f32 0.0, %v1369
      %v1371 = vpop.f32.mrb[0].mxu0
      %v1372 = vpop.f32.mrb[0].mxu0
      %v1373 = vadd.f32 0.0, %v1372
      %v1374 = vpop.f32.mrb[0].mxu0
      %1375 = vmatprep.mubr.bf16.mxu0 %v1068
      %1376 = vmatmul.mubr.bf16.gmra.mrb[0].mxu0 %v1067
      %v1377 = vpop.f32.mrb[0].mxu0
      %v1378 = vadd.f32 0.0, %v1377
      %v1379 = vpop.f32.mrb[0].mxu0
      %v1380 = vpop.f32.mrb[0].mxu0
      %v1381 = vadd.f32 0.0, %v1380
      %v1382 = vpop.f32.mrb[0].mxu0
      %1383 = vmatprep.mubr.bf16.mxu0 %v1070
      %1384 = vmatmul.mubr.bf16.gmra.mrb[0].mxu0 %v1069
      %v1385 = vpop.f32.mrb[0].mxu0
      %v1386 = vadd.f32 0.0, %v1385
      %v1387 = vpop.f32.mrb[0].mxu0
      %v1388 = vpop.f32.mrb[0].mxu0
      %v1389 = vadd.f32 0.0, %v1388
      %v1390 = vpop.f32.mrb[0].mxu0
      %1391 = vmatprep.mubr.bf16.mxu0 %v1072
      %1392 = vmatmul.mubr.bf16.gmra.mrb[0].mxu0 %v1071
      %v1393 = vpop.f32.mrb[0].mxu0
      %v1394 = vadd.f32 0.0, %v1393
      %v1395 = vpop.f32.mrb[0].mxu0
      %v1396 = vpop.f32.mrb[0].mxu0
      %v1397 = vadd.f32 0.0, %v1396
      %v1398 = vpop.f32.mrb[0].mxu0
      %1399 = vmatprep.mubr.bf16.mxu0 %v1074
      %1400 = vmatmul.mubr.bf16.gmra.mrb[0].mxu0 %v1073
      %v1401 = vpop.f32.mrb[0].mxu0
      %v1402 = vadd.f32 0.0, %v1401
      %v1403 = vpop.f32.mrb[0].mxu0
      %v1404 = vpop.f32.mrb[0].mxu0
      %v1405 = vadd.f32 0.0, %v1404
      %v1406 = vpop.f32.mrb[0].mxu0
      %1407 = vmatprep.mubr.bf16.mxu0 %v1076
      %1408 = vmatmul.mubr.bf16.gmra.mrb[0].mxu0 %v1075
      %v1409 = vpop.f32.mrb[0].mxu0
      %v1410 = vadd.f32 0.0, %v1409
      %v1411 = vpop.f32.mrb[0].mxu0
      %v1412 = vpop.f32.mrb[0].mxu0
      %v1413 = vadd.f32 0.0, %v1412
      %v1414 = vpop.f32.mrb[0].mxu0
      %1415 = vmatprep.mubr.bf16.mxu0 %v1078
      %1416 = vmatmul.mubr.bf16.gmra.mrb[0].mxu0 %v1077
      %v1417 = vpop.f32.mrb[0].mxu0
      %v1418 = vadd.f32 0.0, %v1417
      %v1419 = vpop.f32.mrb[0].mxu0
      %v1420 = vpop.f32.mrb[0].mxu0
      %v1421 = vadd.f32 0.0, %v1420
      %v1422 = vpop.f32.mrb[0].mxu0
      %1423 = vmatprep.mubr.bf16.mxu0 %v1080
      %1424 = vmatmul.mubr.bf16.gmra.mrb[0].mxu0 %v1079
      %v1425 = vpop.f32.mrb[0].mxu0
      %v1426 = vadd.f32 0.0, %v1425
      %v1427 = vpop.f32.mrb[0].mxu0
      %v1428 = vpop.f32.mrb[0].mxu0
      %v1429 = vadd.f32 0.0, %v1428
      %v1430 = vpop.f32.mrb[0].mxu0
      %1431 = vmatprep.mubr.bf16.mxu0 %v1082
      %1432 = vmatmul.mubr.bf16.gmra.mrb[0].mxu0 %v1081
      %v1433 = vpop.f32.mrb[0].mxu0
      %v1434 = vadd.f32 0.0, %v1433
      %v1435 = vpop.f32.mrb[0].mxu0
      %v1436 = vpop.f32.mrb[0].mxu0
      %v1437 = vadd.f32 0.0, %v1436
      %v1438 = vpop.f32.mrb[0].mxu0
      %1439 = vmatprep.mubr.bf16.mxu0 %v1084
      %1440 = vmatmul.mubr.bf16.gmra.mrb[0].mxu0 %v1083
      %v1441 = vpop.f32.mrb[0].mxu0
      %v1442 = vadd.f32 0.0, %v1441
      %v1443 = vpop.f32.mrb[0].mxu0
      %v1444 = vpop.f32.mrb[0].mxu0
      %v1445 = vadd.f32 0.0, %v1444
      %v1446 = vpop.f32.mrb[0].mxu0
      %1447 = vmatprep.mubr.bf16.mxu0 %v1086
      %1448 = vmatmul.mubr.bf16.gmra.mrb[0].mxu0 %v1085
      %v1449 = vpop.f32.mrb[0].mxu0
      %v1450 = vadd.f32 0.0, %v1449
      %v1451 = vpop.f32.mrb[0].mxu0
      %v1452 = vpop.f32.mrb[0].mxu0
      %v1453 = vadd.f32 0.0, %v1452
      %v1454 = vpop.f32.mrb[0].mxu0
      %1455 = vmatprep.mubr.bf16.mxu0 %v1088
      %1456 = vmatmul.mubr.bf16.gmra.mrb[0].mxu0 %v1087
      %v1457 = vpop.f32.mrb[0].mxu0
      %v1458 = vadd.f32 0.0, %v1457
      %v1459 = vpop.f32.mrb[0].mxu0
      %v1460 = vpop.f32.mrb[0].mxu0
      %v1461 = vadd.f32 0.0, %v1460
      %v1462 = vpop.f32.mrb[0].mxu0
      %1463 = vmatprep.mubr.bf16.mxu0 %v1090
      %1464 = vmatmul.mubr.bf16.gmra.mrb[0].mxu0 %v1089
      %v1465 = vpop.f32.mrb[0].mxu0
      %v1466 = vadd.f32 0.0, %v1465
      %v1467 = vpop.f32.mrb[0].mxu0
      %v1468 = vpop.f32.mrb[0].mxu0
      %v1469 = vadd.f32 0.0, %v1468
      %v1470 = vpop.f32.mrb[0].mxu0
      %1471 = vmatprep.mubr.bf16.mxu0 %v1092
      %1472 = vmatmul.mubr.bf16.gmra.mrb[0].mxu0 %v1091
      %v1473 = vpop.f32.mrb[0].mxu0
      %v1474 = vadd.f32 0.0, %v1473
      %v1475 = vpop.f32.mrb[0].mxu0
      %v1476 = vpop.f32.mrb[0].mxu0
      %v1477 = vadd.f32 0.0, %v1476
      %v1478 = vpop.f32.mrb[0].mxu0
      %1479 = vmatprep.mubr.bf16.mxu0 %v1094
      %1480 = vmatmul.mubr.bf16.gmra.mrb[0].mxu0 %v1093
      %v1481 = vpop.f32.mrb[0].mxu0
      %v1482 = vadd.f32 0.0, %v1481
      %v1483 = vpop.f32.mrb[0].mxu0
      %v1484 = vpop.f32.mrb[0].mxu0
      %v1485 = vadd.f32 0.0, %v1484
      %v1486 = vpop.f32.mrb[0].mxu0
      %1487 = vmatprep.mubr.bf16.mxu0 %v1096
      %1488 = vmatmul.mubr.bf16.gmra.mrb[0].mxu0 %v1095
      %v1489 = vpop.f32.mrb[0].mxu0
      %v1490 = vadd.f32 0.0, %v1489
      %v1491 = vpop.f32.mrb[0].mxu0
      %v1492 = vpop.f32.mrb[0].mxu0
      %v1493 = vadd.f32 0.0, %v1492
      %v1494 = vpop.f32.mrb[0].mxu0
      %1495 = vmatprep.mubr.bf16.mxu0 %v1098
      %1496 = vmatmul.mubr.bf16.gmra.mrb[0].mxu0 %v1097
      %v1497 = vpop.f32.mrb[0].mxu0
      %v1498 = vadd.f32 0.0, %v1497
      %v1499 = vpop.f32.mrb[0].mxu0
      %v1500 = vpop.f32.mrb[0].mxu0
      %v1501 = vadd.f32 0.0, %v1500
      %v1502 = vpop.f32.mrb[0].mxu0
      %1503 = vmatprep.mubr.bf16.mxu0 %v1100
      %1504 = vmatmul.mubr.bf16.gmra.mrb[0].mxu0 %v1099
      %v1505 = vpop.f32.mrb[0].mxu0
      %v1506 = vadd.f32 0.0, %v1505
      %v1507 = vpop.f32.mrb[0].mxu0
      %v1508 = vpop.f32.mrb[0].mxu0
      %v1509 = vadd.f32 0.0, %v1508
      %v1510 = vpop.f32.mrb[0].mxu0
      %1511 = vmatprep.mubr.bf16.mxu0 %v1102
      %1512 = vmatmul.mubr.bf16.gmra.mrb[0].mxu0 %v1101
      %v1513 = vpop.f32.mrb[0].mxu0
      %v1514 = vadd.f32 0.0, %v1513
      %v1515 = vpop.f32.mrb[0].mxu0
      %v1516 = vpop.f32.mrb[0].mxu0
      %v1517 = vadd.f32 0.0, %v1516
      %v1518 = vpop.f32.mrb[0].mxu0
      %1519 = vmatprep.mubr.bf16.mxu0 %v1104
      %1520 = vmatmul.mubr.bf16.gmra.mrb[0].mxu0 %v1103
      %v1521 = vpop.f32.mrb[0].mxu0
      %v1522 = vadd.f32 0.0, %v1521
      %v1523 = vpop.f32.mrb[0].mxu0
      %v1524 = vpop.f32.mrb[0].mxu0
      %v1525 = vadd.f32 0.0, %v1524
      %v1526 = vpop.f32.mrb[0].mxu0
      %1527 = vmatprep.mubr.bf16.mxu0 %v1106
      %1528 = vmatmul.mubr.bf16.gmra.mrb[0].mxu0 %v1105
      %v1529 = vpop.f32.mrb[0].mxu0
      %v1530 = vadd.f32 0.0, %v1529
      %v1531 = vpop.f32.mrb[0].mxu0
      %v1532 = vpop.f32.mrb[0].mxu0
      %v1533 = vadd.f32 0.0, %v1532
      %v1534 = vpop.f32.mrb[0].mxu0
      %1535 = vmatprep.mubr.bf16.mxu0 %v1108
      %1536 = vmatmul.mubr.bf16.gmra.mrb[0].mxu0 %v1107
      %v1537 = vpop.f32.mrb[0].mxu0
      %v1538 = vadd.f32 0.0, %v1537
      %v1539 = vpop.f32.mrb[0].mxu0
      %v1540 = vpop.f32.mrb[0].mxu0
      %v1541 = vadd.f32 0.0, %v1540
      %v1542 = vpop.f32.mrb[0].mxu0
      %1543 = vmatprep.mubr.bf16.mxu0 %v1110
      %1544 = vmatmul.mubr.bf16.gmra.mrb[0].mxu0 %v1109
      %v1545 = vpop.f32.mrb[0].mxu0
      %v1546 = vadd.f32 0.0, %v1545
      %v1547 = vpop.f32.mrb[0].mxu0
      %v1548 = vpop.f32.mrb[0].mxu0
      %v1549 = vadd.f32 0.0, %v1548
      %v1550 = vpop.f32.mrb[0].mxu0
      %1551 = vmatprep.mubr.bf16.mxu0 %v1112
      %1552 = vmatmul.mubr.bf16.gmra.mrb[0].mxu0 %v1111
      %v1553 = vpop.f32.mrb[0].mxu0
      %v1554 = vadd.f32 0.0, %v1553
      %v1555 = vpop.f32.mrb[0].mxu0
      %v1556 = vpop.f32.mrb[0].mxu0
      %v1557 = vadd.f32 0.0, %v1556
      %v1558 = vpop.f32.mrb[0].mxu0
      %1559 = vmatprep.mubr.bf16.mxu0 %v1114
      %1560 = vmatmul.mubr.bf16.gmra.mrb[0].mxu0 %v1113
      %v1561 = vpop.f32.mrb[0].mxu0
      %v1562 = vadd.f32 0.0, %v1561
      %v1563 = vpop.f32.mrb[0].mxu0
      %v1564 = vpop.f32.mrb[0].mxu0
      %v1565 = vadd.f32 0.0, %v1564
      %v1566 = vpop.f32.mrb[0].mxu0
      %1567 = vmatprep.mubr.bf16.mxu0 %v1116
      %1568 = vmatmul.mubr.bf16.gmra.mrb[0].mxu0 %v1115
      %v1569 = vpop.f32.mrb[0].mxu0
      %v1570 = vadd.f32 0.0, %v1569
      %v1571 = vpop.f32.mrb[0].mxu0
      %v1572 = vpop.f32.mrb[0].mxu0
      %v1573 = vadd.f32 0.0, %v1572
      %v1574 = vpop.f32.mrb[0].mxu0
      %1575 = vmatprep.mubr.bf16.mxu0 %v1118
      %1576 = vmatmul.mubr.bf16.gmra.mrb[0].mxu0 %v1117
      %v1577 = vpop.f32.mrb[0].mxu0
      %v1578 = vadd.f32 0.0, %v1577
      %v1579 = vpop.f32.mrb[0].mxu0
      %v1580 = vpop.f32.mrb[0].mxu0
      %v1581 = vadd.f32 0.0, %v1580
      %v1582 = vpop.f32.mrb[0].mxu0
      %1583 = vmatprep.mubr.bf16.mxu0 %v1120
      %1584 = vmatmul.mubr.bf16.gmra.mrb[0].mxu0 %v1119
      %v1585 = vpop.f32.mrb[0].mxu0
      %v1586 = vadd.f32 0.0, %v1585
      %v1587 = vpop.f32.mrb[0].mxu0
      %v1588 = vpop.f32.mrb[0].mxu0
      %v1589 = vadd.f32 0.0, %v1588
      %v1590 = vpop.f32.mrb[0].mxu0
      %1591 = vmatprep.mubr.bf16.mxu0 %v1122
      %1592 = vmatmul.mubr.bf16.gmra.mrb[0].mxu0 %v1121
      %v1593 = vpop.f32.mrb[0].mxu0
      %v1594 = vadd.f32 0.0, %v1593
      %v1595 = vpop.f32.mrb[0].mxu0
      %v1596 = vpop.f32.mrb[0].mxu0
      %v1597 = vadd.f32 0.0, %v1596
      %v1598 = vpop.f32.mrb[0].mxu0
      %1599 = vmatprep.mubr.bf16.mxu0 %v1124
      %1600 = vmatmul.mubr.bf16.gmra.mrb[0].mxu0 %v1123
      %v1601 = vpop.f32.mrb[0].mxu0
      %v1602 = vadd.f32 0.0, %v1601
      %v1603 = vpop.f32.mrb[0].mxu0
      %v1604 = vpop.f32.mrb[0].mxu0
      %v1605 = vadd.f32 0.0, %v1604
      %v1606 = vpop.f32.mrb[0].mxu0
      %1607 = vmatprep.mubr.bf16.mxu0 %v1126
      %1608 = vmatmul.mubr.bf16.gmra.mrb[0].mxu0 %v1125
      %v1609 = vpop.f32.mrb[0].mxu0
      %v1610 = vadd.f32 0.0, %v1609
      %v1611 = vpop.f32.mrb[0].mxu0
      %v1612 = vpop.f32.mrb[0].mxu0
      %v1613 = vadd.f32 0.0, %v1612
      %v1614 = vpop.f32.mrb[0].mxu0
      %1615 = vdwg.mxu0
      %v1616 = vld [vmem:[%s3] sm:$0xff]
      %v1617 = vld [vmem:[%s3 + $0x8] sm:$0x1]
      %v1620 = vcombine.high %v1616, %v1616
      %v1622 = vunpack.c.l.s4 1966171168
      %v1623 = vunpack.c.0.s8 %v1622
      %v1624 = vlaneseq
      %v1625 = vshrl.u32 %v1624, 7
      %v1626 = vsub.s32 %v1623, %v1625
      %v1627 = vrot.slane %v1616, %v1626
      %v1629 = vunpack.c.l.s4 1966171168
      %v1630 = vunpack.c.0.s8 %v1629
      %v1631 = vlaneseq
      %v1632 = vshrl.u32 %v1631, 7
      %v1633 = vsub.s32 %v1630, %v1632
      %v1634 = vrot.slane %v1620, %v1633
      %v1635 = vcombine.high %v1627, %v1627
      %v1636 = vcombine.high %v1634, %v1634
      %v1638 = vunpack.c.l.s4 1966171168
      %v1639 = vunpack.c.0.s8 %v1638
      %v1640 = vlaneseq
      %v1641 = vshrl.u32 %v1640, 7
      %v1642 = vsub.s32 %v1639, %v1641
      %v1643 = vrot.slane %v1627, %v1642
      %v1645 = vunpack.c.l.s4 1966171168
      %v1646 = vunpack.c.0.s8 %v1645
      %v1647 = vlaneseq
      %v1648 = vshrl.u32 %v1647, 7
      %v1649 = vsub.s32 %v1646, %v1648
      %v1650 = vrot.slane %v1634, %v1649
      %v1652 = vunpack.c.l.s4 1966171168
      %v1653 = vunpack.c.0.s8 %v1652
      %v1654 = vlaneseq
      %v1655 = vshrl.u32 %v1654, 7
      %v1656 = vsub.s32 %v1653, %v1655
      %v1657 = vrot.slane %v1635, %v1656
      %v1659 = vunpack.c.l.s4 1966171168
      %v1660 = vunpack.c.0.s8 %v1659
      %v1661 = vlaneseq
      %v1662 = vshrl.u32 %v1661, 7
      %v1663 = vsub.s32 %v1660, %v1662
      %v1664 = vrot.slane %v1636, %v1663
      %v1665 = vcombine.high %v1643, %v1643
      %v1666 = vcombine.high %v1650, %v1650
      %v1667 = vcombine.high %v1657, %v1657
      %v1668 = vcombine.high %v1664, %v1664
      %v1670 = vunpack.c.l.s4 1966171168
      %v1671 = vunpack.c.0.s8 %v1670
      %v1672 = vlaneseq
      %v1673 = vshrl.u32 %v1672, 7
      %v1674 = vsub.s32 %v1671, %v1673
      %v1675 = vrot.slane %v1617, %v1674
      %v1677 = vunpack.c.l.s4 1966171168
      %v1678 = vunpack.c.0.s8 %v1677
      %v1679 = vlaneseq
      %v1680 = vshrl.u32 %v1679, 7
      %v1681 = vsub.s32 %v1678, %v1680
      %v1682 = vrot.slane %v1675, %v1681
      %v1683 = vlaneseq
      %v1684 = vshrl.u32 %v1683, 7
      %v1685 = vsub.s32 0, %v1684
      %v1686 = vrot.slane %v1643, %v1685
      %v1687 = vlaneseq
      %v1688 = vshrl.u32 %v1687, 7
      %v1689 = vsub.s32 0, %v1688
      %v1690 = vrot.slane %v1657, %v1689
      %v1691 = vlaneseq
      %v1692 = vshrl.u32 %v1691, 7
      %v1693 = vsub.s32 0, %v1692
      %v1694 = vrot.slane %v1665, %v1693
      %v1695 = vlaneseq
      %v1696 = vshrl.u32 %v1695, 7
      %v1697 = vsub.s32 0, %v1696
      %v1698 = vrot.slane %v1667, %v1697
      %v1699 = vlaneseq
      %v1700 = vshrl.u32 %v1699, 7
      %v1701 = vsub.s32 0, %v1700
      %v1702 = vrot.slane %v1650, %v1701
      %v1703 = vlaneseq
      %v1704 = vshrl.u32 %v1703, 7
      %v1705 = vsub.s32 0, %v1704
      %v1706 = vrot.slane %v1664, %v1705
      %v1707 = vlaneseq
      %v1708 = vshrl.u32 %v1707, 7
      %v1709 = vsub.s32 0, %v1708
      %v1710 = vrot.slane %v1666, %v1709
      %v1711 = vlaneseq
      %v1712 = vshrl.u32 %v1711, 7
      %v1713 = vsub.s32 0, %v1712
      %v1714 = vrot.slane %v1668, %v1713
      %v1715 = vlaneseq
      %v1716 = vshrl.u32 %v1715, 7
      %v1717 = vsub.s32 0, %v1716
      %v1718 = vrot.slane %v1682, %v1717
      %v1728 = vmul.f32 %v1330, %v1686
      %v1729 = vmul.f32 %v1333, %v1686
      %v1730 = vmul.f32 %v1338, %v1686
      %v1731 = vmul.f32 %v1341, %v1686
      %v1732 = vmul.f32 %v1346, %v1686
      %v1733 = vmul.f32 %v1349, %v1686
      %v1734 = vmul.f32 %v1354, %v1686
      %v1735 = vmul.f32 %v1357, %v1686
      %v1736 = vmul.f32 %v1362, %v1690
      %v1737 = vmul.f32 %v1365, %v1690
      %v1738 = vmul.f32 %v1370, %v1690
      %v1739 = vmul.f32 %v1373, %v1690
      %v1740 = vmul.f32 %v1378, %v1690
      %v1741 = vmul.f32 %v1381, %v1690
      %v1742 = vmul.f32 %v1386, %v1690
      %v1743 = vmul.f32 %v1389, %v1690
      %v1744 = vmul.f32 %v1394, %v1694
      %v1745 = vmul.f32 %v1397, %v1694
      %v1746 = vmul.f32 %v1402, %v1694
      %v1747 = vmul.f32 %v1405, %v1694
      %v1748 = vmul.f32 %v1410, %v1694
      %v1749 = vmul.f32 %v1413, %v1694
      %v1750 = vmul.f32 %v1418, %v1694
      %v1751 = vmul.f32 %v1421, %v1694
      %v1752 = vmul.f32 %v1426, %v1698
      %v1753 = vmul.f32 %v1429, %v1698
      %v1754 = vmul.f32 %v1434, %v1698
      %v1755 = vmul.f32 %v1437, %v1698
      %v1756 = vmul.f32 %v1442, %v1698
      %v1757 = vmul.f32 %v1445, %v1698
      %v1758 = vmul.f32 %v1450, %v1698
      %v1759 = vmul.f32 %v1453, %v1698
      %v1760 = vmul.f32 %v1458, %v1702
      %v1761 = vmul.f32 %v1461, %v1702
      %v1762 = vmul.f32 %v1466, %v1702
      %v1763 = vmul.f32 %v1469, %v1702
      %v1764 = vmul.f32 %v1474, %v1702
      %v1765 = vmul.f32 %v1477, %v1702
      %v1766 = vmul.f32 %v1482, %v1702
      %v1767 = vmul.f32 %v1485, %v1702
      %v1768 = vmul.f32 %v1490, %v1706
      %v1769 = vmul.f32 %v1493, %v1706
      %v1770 = vmul.f32 %v1498, %v1706
      %v1771 = vmul.f32 %v1501, %v1706
      %v1772 = vmul.f32 %v1506, %v1706
      %v1773 = vmul.f32 %v1509, %v1706
      %v1774 = vmul.f32 %v1514, %v1706
      %v1775 = vmul.f32 %v1517, %v1706
      %v1776 = vmul.f32 %v1522, %v1710
      %v1777 = vmul.f32 %v1525, %v1710
      %v1778 = vmul.f32 %v1530, %v1710
      %v1779 = vmul.f32 %v1533, %v1710
      %v1780 = vmul.f32 %v1538, %v1710
      %v1781 = vmul.f32 %v1541, %v1710
      %v1782 = vmul.f32 %v1546, %v1710
      %v1783 = vmul.f32 %v1549, %v1710
      %v1784 = vmul.f32 %v1554, %v1714
      %v1785 = vmul.f32 %v1557, %v1714
      %v1786 = vmul.f32 %v1562, %v1714
      %v1787 = vmul.f32 %v1565, %v1714
      %v1788 = vmul.f32 %v1570, %v1714
      %v1789 = vmul.f32 %v1573, %v1714
      %v1790 = vmul.f32 %v1578, %v1714
      %v1791 = vmul.f32 %v1581, %v1714
      %v1792 = vmul.f32 %v1586, %v1718
      %v1793 = vmul.f32 %v1589, %v1718
      %v1794 = vmul.f32 %v1594, %v1718
      %v1795 = vmul.f32 %v1597, %v1718
      %v1796 = vmul.f32 %v1602, %v1718
      %v1797 = vmul.f32 %v1605, %v1718
      %v1798 = vmul.f32 %v1610, %v1718
      %v1799 = vmul.f32 %v1613, %v1718
      %vm1800 = vcmask 261120
      %v1801 = vsel %vm1800, %v1728, 0.0
      %v1802 = vsel %vm1800, %v1736, 0.0
      %v1803 = vadd.f32 %v1801, %v1802
      %v1804 = vsel %vm1800, %v1744, 0.0
      %v1805 = vadd.f32 %v1803, %v1804
      %v1806 = vsel %vm1800, %v1752, 0.0
      %v1807 = vadd.f32 %v1805, %v1806
      %v1808 = vsel %vm1800, %v1760, 0.0
      %v1809 = vadd.f32 %v1807, %v1808
      %v1810 = vsel %vm1800, %v1768, 0.0
      %v1811 = vadd.f32 %v1809, %v1810
      %v1812 = vsel %vm1800, %v1776, 0.0
      %v1813 = vadd.f32 %v1811, %v1812
      %v1814 = vsel %vm1800, %v1784, 0.0
      %v1815 = vadd.f32 %v1813, %v1814
      %v1816 = vsel %vm1800, %v1792, 0.0
      %v1817 = vadd.f32 %v1815, %v1816
      %v1818 = vsel %vm1800, %v1729, 0.0
      %v1819 = vsel %vm1800, %v1737, 0.0
      %v1820 = vadd.f32 %v1818, %v1819
      %v1821 = vsel %vm1800, %v1745, 0.0
      %v1822 = vadd.f32 %v1820, %v1821
      %v1823 = vsel %vm1800, %v1753, 0.0
      %v1824 = vadd.f32 %v1822, %v1823
      %v1825 = vsel %vm1800, %v1761, 0.0
      %v1826 = vadd.f32 %v1824, %v1825
      %v1827 = vsel %vm1800, %v1769, 0.0
      %v1828 = vadd.f32 %v1826, %v1827
      %v1829 = vsel %vm1800, %v1777, 0.0
      %v1830 = vadd.f32 %v1828, %v1829
      %v1831 = vsel %vm1800, %v1785, 0.0
      %v1832 = vadd.f32 %v1830, %v1831
      %v1833 = vsel %vm1800, %v1793, 0.0
      %v1834 = vadd.f32 %v1832, %v1833
      %v1835 = vsel %vm1800, %v1730, 0.0
      %v1836 = vsel %vm1800, %v1738, 0.0
      %v1837 = vadd.f32 %v1835, %v1836
      %v1838 = vsel %vm1800, %v1746, 0.0
      %v1839 = vadd.f32 %v1837, %v1838
      %v1840 = vsel %vm1800, %v1754, 0.0
      %v1841 = vadd.f32 %v1839, %v1840
      %v1842 = vsel %vm1800, %v1762, 0.0
      %v1843 = vadd.f32 %v1841, %v1842
      %v1844 = vsel %vm1800, %v1770, 0.0
      %v1845 = vadd.f32 %v1843, %v1844
      %v1846 = vsel %vm1800, %v1778, 0.0
      %v1847 = vadd.f32 %v1845, %v1846
      %v1848 = vsel %vm1800, %v1786, 0.0
      %v1849 = vadd.f32 %v1847, %v1848
      %v1850 = vsel %vm1800, %v1794, 0.0
      %v1851 = vadd.f32 %v1849, %v1850
      %v1852 = vsel %vm1800, %v1731, 0.0
      %v1853 = vsel %vm1800, %v1739, 0.0
      %v1854 = vadd.f32 %v1852, %v1853
      %v1855 = vsel %vm1800, %v1747, 0.0
      %v1856 = vadd.f32 %v1854, %v1855
      %v1857 = vsel %vm1800, %v1755, 0.0
      %v1858 = vadd.f32 %v1856, %v1857
      %v1859 = vsel %vm1800, %v1763, 0.0
      %v1860 = vadd.f32 %v1858, %v1859
      %v1861 = vsel %vm1800, %v1771, 0.0
      %v1862 = vadd.f32 %v1860, %v1861
      %v1863 = vsel %vm1800, %v1779, 0.0
      %v1864 = vadd.f32 %v1862, %v1863
      %v1865 = vsel %vm1800, %v1787, 0.0
      %v1866 = vadd.f32 %v1864, %v1865
      %v1867 = vsel %vm1800, %v1795, 0.0
      %v1868 = vadd.f32 %v1866, %v1867
      %v1869 = vsel %vm1800, %v1732, 0.0
      %v1870 = vsel %vm1800, %v1740, 0.0
      %v1871 = vadd.f32 %v1869, %v1870
      %v1872 = vsel %vm1800, %v1748, 0.0
      %v1873 = vadd.f32 %v1871, %v1872
      %v1874 = vsel %vm1800, %v1756, 0.0
      %v1875 = vadd.f32 %v1873, %v1874
      %v1876 = vsel %vm1800, %v1764, 0.0
      %v1877 = vadd.f32 %v1875, %v1876
      %v1878 = vsel %vm1800, %v1772, 0.0
      %v1879 = vadd.f32 %v1877, %v1878
      %v1880 = vsel %vm1800, %v1780, 0.0
      %v1881 = vadd.f32 %v1879, %v1880
      %v1882 = vsel %vm1800, %v1788, 0.0
      %v1883 = vadd.f32 %v1881, %v1882
      %v1884 = vsel %vm1800, %v1796, 0.0
      %v1885 = vadd.f32 %v1883, %v1884
      %v1886 = vsel %vm1800, %v1733, 0.0
      %v1887 = vsel %vm1800, %v1741, 0.0
      %v1888 = vadd.f32 %v1886, %v1887
      %v1889 = vsel %vm1800, %v1749, 0.0
      %v1890 = vadd.f32 %v1888, %v1889
      %v1891 = vsel %vm1800, %v1757, 0.0
      %v1892 = vadd.f32 %v1890, %v1891
      %v1893 = vsel %vm1800, %v1765, 0.0
      %v1894 = vadd.f32 %v1892, %v1893
      %v1895 = vsel %vm1800, %v1773, 0.0
      %v1896 = vadd.f32 %v1894, %v1895
      %v1897 = vsel %vm1800, %v1781, 0.0
      %v1898 = vadd.f32 %v1896, %v1897
      %v1899 = vsel %vm1800, %v1789, 0.0
      %v1900 = vadd.f32 %v1898, %v1899
      %v1901 = vsel %vm1800, %v1797, 0.0
      %v1902 = vadd.f32 %v1900, %v1901
      %v1903 = vsel %vm1800, %v1734, 0.0
      %v1904 = vsel %vm1800, %v1742, 0.0
      %v1905 = vadd.f32 %v1903, %v1904
      %v1906 = vsel %vm1800, %v1750, 0.0
      %v1907 = vadd.f32 %v1905, %v1906
      %v1908 = vsel %vm1800, %v1758, 0.0
      %v1909 = vadd.f32 %v1907, %v1908
      %v1910 = vsel %vm1800, %v1766, 0.0
      %v1911 = vadd.f32 %v1909, %v1910
      %v1912 = vsel %vm1800, %v1774, 0.0
      %v1913 = vadd.f32 %v1911, %v1912
      %v1914 = vsel %vm1800, %v1782, 0.0
      %v1915 = vadd.f32 %v1913, %v1914
      %v1916 = vsel %vm1800, %v1790, 0.0
      %v1917 = vadd.f32 %v1915, %v1916
      %v1918 = vsel %vm1800, %v1798, 0.0
      %v1919 = vadd.f32 %v1917, %v1918
      %v1920 = vsel %vm1800, %v1735, 0.0
      %v1921 = vsel %vm1800, %v1743, 0.0
      %v1922 = vadd.f32 %v1920, %v1921
      %v1923 = vsel %vm1800, %v1751, 0.0
      %v1924 = vadd.f32 %v1922, %v1923
      %v1925 = vsel %vm1800, %v1759, 0.0
      %v1926 = vadd.f32 %v1924, %v1925
      %v1927 = vsel %vm1800, %v1767, 0.0
      %v1928 = vadd.f32 %v1926, %v1927
      %v1929 = vsel %vm1800, %v1775, 0.0
      %v1930 = vadd.f32 %v1928, %v1929
      %v1931 = vsel %vm1800, %v1783, 0.0
      %v1932 = vadd.f32 %v1930, %v1931
      %v1933 = vsel %vm1800, %v1791, 0.0
      %v1934 = vadd.f32 %v1932, %v1933
      %v1935 = vsel %vm1800, %v1799, 0.0
      %v1936 = vadd.f32 %v1934, %v1935
      %v1937 = vpack.c.bf16 %v1834, %v1817
      %v1938 = vpack.c.bf16 %v1868, %v1851
      %v1939 = vpack.c.bf16 %v1902, %v1885
      %v1940 = vpack.c.bf16 %v1936, %v1919
      %v1941 = vld [vmem:[%s4] sm:$0xf]
      %v1942 = vld [vmem:[%s4 + $0x4] sm:$0xf]
      %v1943 = vld [vmem:[%s4 + $0x8] sm:$0xf]
      %v1944 = vld [vmem:[%s4 + $0xc] sm:$0xf]
      %v1949 = vunpack.c.l.b16 %v1941
      %v1950 = vunpack.c.l.b16 %v1942
      %v1951 = vunpack.c.l.b16 %v1943
      %v1952 = vunpack.c.l.b16 %v1944
      %v1953 = vpack.c.b16 %v1950, %v1949
      %v1954 = vpack.c.b16 %v1952, %v1951
      %v1958 = vsel %vm1800, %v1937, 0
      %v1961 = vsel %vm1800, %v1938, 0
      %v1964 = vsel %vm1800, %v1939, 0
      %v1967 = vsel %vm1800, %v1940, 0
      %1969 = vmatprep.subr.bf16.mxu0 0
      %1970 = vmatpush1.bf16.msra.mxu0 %v1953
      %1971 = vmatprep.subr.bf16.mxu0 0
      %1972 = vmatpush1.bf16.msra.mxu0 %v1954
      %1973 = vmatprep.subr.bf16.mxu0 0
      %1974 = vmatpush1.bf16.msra.mxu0 0
      %1975 = vmatprep.subr.bf16.mxu0 0
      %1976 = vmatpush1.bf16.msra.mxu0 0
      %1977 = vmatprep.subr.bf16.mxu0 0
      %1978 = vmatpush1.bf16.msra.mxu0 0
      %1979 = vmatprep.subr.bf16.mxu0 0
      %1980 = vmatpush1.bf16.msra.mxu0 0
      %1981 = vmatprep.subr.bf16.mxu0 0
      %1982 = vmatpush1.bf16.msra.mxu0 0
      %1983 = vmatprep.subr.bf16.mxu0 0
      %1984 = vmatpush1.bf16.msra.mxu0 0
      %1985 = vmatprep.subr.bf16.mxu0 0
      %1986 = vmatpush1.bf16.msra.mxu0 0
      %1987 = vmatprep.subr.bf16.mxu0 0
      %1988 = vmatpush1.bf16.msra.mxu0 0
      %1989 = vmatprep.subr.bf16.mxu0 0
      %1990 = vmatpush1.bf16.msra.mxu0 0
      %1991 = vmatprep.subr.bf16.mxu0 0
      %1992 = vmatpush1.bf16.msra.mxu0 0
      %1993 = vmatprep.subr.bf16.mxu0 0
      %1994 = vmatpush1.bf16.msra.mxu0 0
      %1995 = vmatprep.subr.bf16.mxu0 0
      %1996 = vmatpush1.bf16.msra.mxu0 0
      %1997 = vmatprep.subr.bf16.mxu0 0
      %1998 = vmatpush1.bf16.msra.mxu0 0
      %1999 = vmatprep.subr.bf16.mxu0 0
      %2000 = vmatpush1.bf16.msra.mxu0 0
      %2001 = vmatprep.mubr.bf16.mxu0 0
      %2002 = vmatmul.mubr.bf16.gmra.mrb[0].mxu0 %v1958
      %v2003 = vpop.f32.mrb[0].mxu0
      %v2004 = vadd.f32 0.0, %v2003
      %v2005 = vpop.f32.mrb[0].mxu0
      %v2006 = vpop.f32.mrb[0].mxu0
      %v2007 = vadd.f32 0.0, %v2006
      %v2008 = vpop.f32.mrb[0].mxu0
      %2009 = vmatprep.mubr.bf16.mxu0 0
      %2010 = vmatmul.mubr.bf16.gmra.mrb[0].mxu0 %v1961
      %v2011 = vpop.f32.mrb[0].mxu0
      %v2012 = vadd.f32 0.0, %v2011
      %v2013 = vpop.f32.mrb[0].mxu0
      %v2014 = vpop.f32.mrb[0].mxu0
      %v2015 = vadd.f32 0.0, %v2014
      %v2016 = vpop.f32.mrb[0].mxu0
      %2017 = vmatprep.mubr.bf16.mxu0 0
      %2018 = vmatmul.mubr.bf16.gmra.mrb[0].mxu0 %v1964
      %v2019 = vpop.f32.mrb[0].mxu0
      %v2020 = vadd.f32 0.0, %v2019
      %v2021 = vpop.f32.mrb[0].mxu0
      %v2022 = vpop.f32.mrb[0].mxu0
      %v2023 = vadd.f32 0.0, %v2022
      %v2024 = vpop.f32.mrb[0].mxu0
      %2025 = vmatprep.mubr.bf16.mxu0 0
      %2026 = vmatmul.mubr.bf16.gmra.mrb[0].mxu0 %v1967
      %v2027 = vpop.f32.mrb[0].mxu0
      %v2028 = vadd.f32 0.0, %v2027
      %v2029 = vpop.f32.mrb[0].mxu0
      %v2030 = vpop.f32.mrb[0].mxu0
      %v2031 = vadd.f32 0.0, %v2030
      %v2032 = vpop.f32.mrb[0].mxu0
      %2033 = vdwg.mxu0
      %vm2034 = vcmask 523264
      %v2035 = vsel %vm2034, %v2004, 0.0
      %v2036 = vsel %vm2034, %v2007, 0.0
      %v2037 = vadd.f32 %v2035, %v2036
      %v2038 = vsel %vm2034, %v2012, 0.0
      %v2039 = vadd.f32 %v2037, %v2038
      %v2040 = vsel %vm2034, %v2015, 0.0
      %v2041 = vadd.f32 %v2039, %v2040
      %v2042 = vsel %vm2034, %v2020, 0.0
      %v2043 = vadd.f32 %v2041, %v2042
      %v2044 = vsel %vm2034, %v2023, 0.0
      %v2045 = vadd.f32 %v2043, %v2044
      %v2046 = vsel %vm2034, %v2028, 0.0
      %v2047 = vadd.f32 %v2045, %v2046
      %v2048 = vsel %vm2034, %v2031, 0.0
      %v2049 = vadd.f32 %v2047, %v2048
      %v2050 = vrot.slane %v2049, 4
      %v2051 = vadd.f32 %v2049, %v2050
      %v2052 = vrot.slane %v2051, 2
      %v2053 = vadd.f32 %v2051, %v2052
      %v2054 = vrot.slane %v2053, 1
      %v2055 = vadd.f32 %v2053, %v2054
      %v2056 = vrcp.pop 64.0
      %v2057 = vmul.f32 %v2055, %v2056
      %v2058 = vsub.f32 %v2004, %v2057
      %v2059 = vsub.f32 %v2007, %v2057
      %v2060 = vsub.f32 %v2012, %v2057
      %v2061 = vsub.f32 %v2015, %v2057
      %v2062 = vsub.f32 %v2020, %v2057
      %v2063 = vsub.f32 %v2023, %v2057
      %v2064 = vsub.f32 %v2028, %v2057
      %v2065 = vsub.f32 %v2031, %v2057
      %v2066 = vmul.f32 %v2058, %v2058
      %v2067 = vmul.f32 %v2059, %v2059
      %v2068 = vmul.f32 %v2060, %v2060
      %v2069 = vmul.f32 %v2061, %v2061
      %v2070 = vmul.f32 %v2062, %v2062
      %v2071 = vmul.f32 %v2063, %v2063
      %v2072 = vmul.f32 %v2064, %v2064
      %v2073 = vmul.f32 %v2065, %v2065
      %v2074 = vsel %vm2034, %v2066, 0.0
      %v2075 = vsel %vm2034, %v2067, 0.0
      %v2076 = vadd.f32 %v2074, %v2075
      %v2077 = vsel %vm2034, %v2068, 0.0
      %v2078 = vadd.f32 %v2076, %v2077
      %v2079 = vsel %vm2034, %v2069, 0.0
      %v2080 = vadd.f32 %v2078, %v2079
      %v2081 = vsel %vm2034, %v2070, 0.0
      %v2082 = vadd.f32 %v2080, %v2081
      %v2083 = vsel %vm2034, %v2071, 0.0
      %v2084 = vadd.f32 %v2082, %v2083
      %v2085 = vsel %vm2034, %v2072, 0.0
      %v2086 = vadd.f32 %v2084, %v2085
      %v2087 = vsel %vm2034, %v2073, 0.0
      %v2088 = vadd.f32 %v2086, %v2087
      %v2089 = vrot.slane %v2088, 4
      %v2090 = vadd.f32 %v2088, %v2089
      %v2091 = vrot.slane %v2090, 2
      %v2092 = vadd.f32 %v2090, %v2091
      %v2093 = vrot.slane %v2092, 1
      %v2094 = vadd.f32 %v2092, %v2093
      %v2095 = vmul.f32 %v2094, %v2056
      %v2096 = vadd.f32 %v2095, 1e-05
      %v2097 = vrsqrt.pop %v2096
      %v2098 = vmul.f32 %v2058, %v2097
      %v2099 = vmul.f32 %v2059, %v2097
      %v2100 = vmul.f32 %v2060, %v2097
      %v2101 = vmul.f32 %v2061, %v2097
      %v2102 = vmul.f32 %v2062, %v2097
      %v2103 = vmul.f32 %v2063, %v2097
      %v2104 = vmul.f32 %v2064, %v2097
      %v2105 = vmul.f32 %v2065, %v2097
      %v2106 = vmax.f32 %v2098, 0.0
      %v2107 = vmax.f32 %v2099, 0.0
      %v2108 = vmax.f32 %v2100, 0.0
      %v2109 = vmax.f32 %v2101, 0.0
      %v2110 = vmax.f32 %v2102, 0.0
      %v2111 = vmax.f32 %v2103, 0.0
      %v2112 = vmax.f32 %v2104, 0.0
      %v2113 = vmax.f32 %v2105, 0.0
      %v2114 = vld [vmem:[%s2] sm:$0xf]
      %v2115 = vld [vmem:[%s2 + $0x4] sm:$0xf]
      %v2116 = vld [vmem:[%s2 + $0x8] sm:$0xf]
      %v2117 = vld [vmem:[%s2 + $0xc] sm:$0xf]
      %v2118 = vld [vmem:[%s2 + $0x10] sm:$0xf]
      %v2119 = vld [vmem:[%s2 + $0x14] sm:$0xf]
      %v2120 = vld [vmem:[%s2 + $0x18] sm:$0xf]
      %v2121 = vld [vmem:[%s2 + $0x1c] sm:$0xf]
      %v2122 = vld [vmem:[%s2 + $0x20] sm:$0xf]
      %v2123 = vld [vmem:[%s2 + $0x24] sm:$0xf]
      %v2124 = vld [vmem:[%s2 + $0x28] sm:$0xf]
      %v2125 = vld [vmem:[%s2 + $0x2c] sm:$0xf]
      %v2126 = vld [vmem:[%s2 + $0x30] sm:$0xf]
      %v2127 = vld [vmem:[%s2 + $0x34] sm:$0xf]
      %v2128 = vld [vmem:[%s2 + $0x38] sm:$0xf]
      %v2129 = vld [vmem:[%s2 + $0x3c] sm:$0xf]
      %v2130 = vld [vmem:[%s2 + $0x40] sm:$0xf]
      %v2131 = vld [vmem:[%s2 + $0x44] sm:$0xf]
      %v2132 = vld [vmem:[%s2 + $0x48] sm:$0xf]
      %v2133 = vld [vmem:[%s2 + $0x4c] sm:$0xf]
      %v2134 = vld [vmem:[%s2 + $0x50] sm:$0xf]
      %v2135 = vld [vmem:[%s2 + $0x54] sm:$0xf]
      %v2136 = vld [vmem:[%s2 + $0x58] sm:$0xf]
      %v2137 = vld [vmem:[%s2 + $0x5c] sm:$0xf]
      %v2138 = vld [vmem:[%s2 + $0x60] sm:$0xf]
      %v2139 = vld [vmem:[%s2 + $0x64] sm:$0xf]
      %v2140 = vld [vmem:[%s2 + $0x68] sm:$0xf]
      %v2141 = vld [vmem:[%s2 + $0x6c] sm:$0xf]
      %v2142 = vld [vmem:[%s2 + $0x70] sm:$0xf]
      %v2143 = vld [vmem:[%s2 + $0x74] sm:$0xf]
      %v2144 = vld [vmem:[%s2 + $0x78] sm:$0xf]
      %v2145 = vld [vmem:[%s2 + $0x7c] sm:$0xf]
      %v2146 = vld [vmem:[%s2 + $0x80] sm:$0xf]
      %v2147 = vld [vmem:[%s2 + $0x84] sm:$0xf]
      %v2148 = vld [vmem:[%s2 + $0x88] sm:$0xf]
      %v2149 = vld [vmem:[%s2 + $0x8c] sm:$0xf]
      %v2150 = vld [vmem:[%s2 + $0x90] sm:$0xf]
      %v2151 = vld [vmem:[%s2 + $0x94] sm:$0xf]
      %v2152 = vld [vmem:[%s2 + $0x98] sm:$0xf]
      %v2153 = vld [vmem:[%s2 + $0x9c] sm:$0xf]
      %v2154 = vld [vmem:[%s2 + $0xa0] sm:$0xf]
      %v2155 = vld [vmem:[%s2 + $0xa4] sm:$0xf]
      %v2156 = vld [vmem:[%s2 + $0xa8] sm:$0xf]
      %v2157 = vld [vmem:[%s2 + $0xac] sm:$0xf]
      %v2158 = vld [vmem:[%s2 + $0xb0] sm:$0xf]
      %v2159 = vld [vmem:[%s2 + $0xb4] sm:$0xf]
      %v2160 = vld [vmem:[%s2 + $0xb8] sm:$0xf]
      %v2161 = vld [vmem:[%s2 + $0xbc] sm:$0xf]
      %v2162 = vld [vmem:[%s2 + $0xc0] sm:$0xf]
      %v2163 = vld [vmem:[%s2 + $0xc4] sm:$0xf]
      %v2164 = vld [vmem:[%s2 + $0xc8] sm:$0xf]
      %v2165 = vld [vmem:[%s2 + $0xcc] sm:$0xf]
      %v2166 = vld [vmem:[%s2 + $0xd0] sm:$0xf]
      %v2167 = vld [vmem:[%s2 + $0xd4] sm:$0xf]
      %v2168 = vld [vmem:[%s2 + $0xd8] sm:$0xf]
      %v2169 = vld [vmem:[%s2 + $0xdc] sm:$0xf]
      %v2170 = vld [vmem:[%s2 + $0xe0] sm:$0xf]
      %v2171 = vld [vmem:[%s2 + $0xe4] sm:$0xf]
      %v2172 = vld [vmem:[%s2 + $0xe8] sm:$0xf]
      %v2173 = vld [vmem:[%s2 + $0xec] sm:$0xf]
      %v2174 = vld [vmem:[%s2 + $0xf0] sm:$0xf]
      %v2175 = vld [vmem:[%s2 + $0xf4] sm:$0xf]
      %v2176 = vld [vmem:[%s2 + $0xf8] sm:$0xf]
      %v2177 = vld [vmem:[%s2 + $0xfc] sm:$0xf]
      %v2178 = vld [vmem:[%s2 + $0x100] sm:$0xf]
      %v2179 = vld [vmem:[%s2 + $0x104] sm:$0xf]
      %v2180 = vld [vmem:[%s2 + $0x108] sm:$0xf]
      %v2181 = vld [vmem:[%s2 + $0x10c] sm:$0xf]
      %v2182 = vld [vmem:[%s2 + $0x110] sm:$0xf]
      %v2183 = vld [vmem:[%s2 + $0x114] sm:$0xf]
      %v2184 = vld [vmem:[%s2 + $0x118] sm:$0xf]
      %v2185 = vld [vmem:[%s2 + $0x11c] sm:$0xf]
      %v2186 = vpack.c.bf16 %v2107, %v2106
      %v2187 = vpack.c.bf16 %v2109, %v2108
      %v2188 = vpack.c.bf16 %v2111, %v2110
      %v2189 = vpack.c.bf16 %v2113, %v2112
      %v2262 = vunpack.c.l.b16 %v2114
      %v2263 = vunpack.c.l.b16 %v2115
      %v2264 = vunpack.c.l.b16 %v2116
      %v2265 = vunpack.c.l.b16 %v2117
      %v2266 = vunpack.c.l.b16 %v2118
      %v2267 = vunpack.c.l.b16 %v2119
      %v2268 = vunpack.c.l.b16 %v2120
      %v2269 = vunpack.c.l.b16 %v2121
      %v2270 = vunpack.c.l.b16 %v2122
      %v2271 = vunpack.c.l.b16 %v2123
      %v2272 = vunpack.c.l.b16 %v2124
      %v2273 = vunpack.c.l.b16 %v2125
      %v2274 = vunpack.c.l.b16 %v2126
      %v2275 = vunpack.c.l.b16 %v2127
      %v2276 = vunpack.c.l.b16 %v2128
      %v2277 = vunpack.c.l.b16 %v2129
      %v2278 = vunpack.c.l.b16 %v2130
      %v2279 = vunpack.c.l.b16 %v2131
      %v2280 = vunpack.c.l.b16 %v2132
      %v2281 = vunpack.c.l.b16 %v2133
      %v2282 = vunpack.c.l.b16 %v2134
      %v2283 = vunpack.c.l.b16 %v2135
      %v2284 = vunpack.c.l.b16 %v2136
      %v2285 = vunpack.c.l.b16 %v2137
      %v2286 = vunpack.c.l.b16 %v2138
      %v2287 = vunpack.c.l.b16 %v2139
      %v2288 = vunpack.c.l.b16 %v2140
      %v2289 = vunpack.c.l.b16 %v2141
      %v2290 = vunpack.c.l.b16 %v2142
      %v2291 = vunpack.c.l.b16 %v2143
      %v2292 = vunpack.c.l.b16 %v2144
      %v2293 = vunpack.c.l.b16 %v2145
      %v2294 = vunpack.c.l.b16 %v2146
      %v2295 = vunpack.c.l.b16 %v2147
      %v2296 = vunpack.c.l.b16 %v2148
      %v2297 = vunpack.c.l.b16 %v2149
      %v2298 = vunpack.c.l.b16 %v2150
      %v2299 = vunpack.c.l.b16 %v2151
      %v2300 = vunpack.c.l.b16 %v2152
      %v2301 = vunpack.c.l.b16 %v2153
      %v2302 = vunpack.c.l.b16 %v2154
      %v2303 = vunpack.c.l.b16 %v2155
      %v2304 = vunpack.c.l.b16 %v2156
      %v2305 = vunpack.c.l.b16 %v2157
      %v2306 = vunpack.c.l.b16 %v2158
      %v2307 = vunpack.c.l.b16 %v2159
      %v2308 = vunpack.c.l.b16 %v2160
      %v2309 = vunpack.c.l.b16 %v2161
      %v2310 = vunpack.c.l.b16 %v2162
      %v2311 = vunpack.c.l.b16 %v2163
      %v2312 = vunpack.c.l.b16 %v2164
      %v2313 = vunpack.c.l.b16 %v2165
      %v2314 = vunpack.c.l.b16 %v2166
      %v2315 = vunpack.c.l.b16 %v2167
      %v2316 = vunpack.c.l.b16 %v2168
      %v2317 = vunpack.c.l.b16 %v2169
      %v2318 = vunpack.c.l.b16 %v2170
      %v2319 = vunpack.c.l.b16 %v2171
      %v2320 = vunpack.c.l.b16 %v2172
      %v2321 = vunpack.c.l.b16 %v2173
      %v2322 = vunpack.c.l.b16 %v2174
      %v2323 = vunpack.c.l.b16 %v2175
      %v2324 = vunpack.c.l.b16 %v2176
      %v2325 = vunpack.c.l.b16 %v2177
      %v2326 = vunpack.c.l.b16 %v2178
      %v2327 = vunpack.c.l.b16 %v2179
      %v2328 = vunpack.c.l.b16 %v2180
      %v2329 = vunpack.c.l.b16 %v2181
      %v2330 = vunpack.c.l.b16 %v2182
      %v2331 = vunpack.c.l.b16 %v2183
      %v2332 = vunpack.c.l.b16 %v2184
      %v2333 = vunpack.c.l.b16 %v2185
      %v2334 = vpack.c.b16 %v2263, %v2262
      %v2335 = vpack.c.b16 %v2265, %v2264
      %v2336 = vpack.c.b16 %v2267, %v2266
      %v2337 = vpack.c.b16 %v2269, %v2268
      %v2338 = vpack.c.b16 %v2271, %v2270
      %v2339 = vpack.c.b16 %v2273, %v2272
      %v2340 = vpack.c.b16 %v2275, %v2274
      %v2341 = vpack.c.b16 %v2277, %v2276
      %v2342 = vpack.c.b16 %v2279, %v2278
      %v2343 = vpack.c.b16 %v2281, %v2280
      %v2344 = vpack.c.b16 %v2283, %v2282
      %v2345 = vpack.c.b16 %v2285, %v2284
      %v2346 = vpack.c.b16 %v2287, %v2286
      %v2347 = vpack.c.b16 %v2289, %v2288
      %v2348 = vpack.c.b16 %v2291, %v2290
      %v2349 = vpack.c.b16 %v2293, %v2292
      %v2350 = vpack.c.b16 %v2295, %v2294
      %v2351 = vpack.c.b16 %v2297, %v2296
      %v2352 = vpack.c.b16 %v2299, %v2298
      %v2353 = vpack.c.b16 %v2301, %v2300
      %v2354 = vpack.c.b16 %v2303, %v2302
      %v2355 = vpack.c.b16 %v2305, %v2304
      %v2356 = vpack.c.b16 %v2307, %v2306
      %v2357 = vpack.c.b16 %v2309, %v2308
      %v2358 = vpack.c.b16 %v2311, %v2310
      %v2359 = vpack.c.b16 %v2313, %v2312
      %v2360 = vpack.c.b16 %v2315, %v2314
      %v2361 = vpack.c.b16 %v2317, %v2316
      %v2362 = vpack.c.b16 %v2319, %v2318
      %v2363 = vpack.c.b16 %v2321, %v2320
      %v2364 = vpack.c.b16 %v2323, %v2322
      %v2365 = vpack.c.b16 %v2325, %v2324
      %v2366 = vpack.c.b16 %v2327, %v2326
      %v2367 = vpack.c.b16 %v2329, %v2328
      %v2368 = vpack.c.b16 %v2331, %v2330
      %v2369 = vpack.c.b16 %v2333, %v2332
      %v2371 = vsel %vm2034, %v2334, 0
      %v2374 = vsel %vm2034, %v2335, 0
      %v2377 = vsel %vm2034, %v2336, 0
      %v2380 = vsel %vm2034, %v2337, 0
      %v2383 = vsel %vm2034, %v2338, 0
      %v2386 = vsel %vm2034, %v2339, 0
      %v2389 = vsel %vm2034, %v2340, 0
      %v2392 = vsel %vm2034, %v2341, 0
      %v2395 = vsel %vm2034, %v2342, 0
      %v2398 = vsel %vm2034, %v2343, 0
      %v2401 = vsel %vm2034, %v2344, 0
      %v2404 = vsel %vm2034, %v2345, 0
      %v2407 = vsel %vm2034, %v2346, 0
      %v2410 = vsel %vm2034, %v2347, 0
      %v2413 = vsel %vm2034, %v2348, 0
      %v2416 = vsel %vm2034, %v2349, 0
      %v2419 = vsel %vm2034, %v2350, 0
      %v2422 = vsel %vm2034, %v2351, 0
      %v2425 = vsel %vm2034, %v2352, 0
      %v2428 = vsel %vm2034, %v2353, 0
      %v2431 = vsel %vm2034, %v2354, 0
      %v2434 = vsel %vm2034, %v2355, 0
      %v2437 = vsel %vm2034, %v2356, 0
      %v2440 = vsel %vm2034, %v2357, 0
      %v2443 = vsel %vm2034, %v2358, 0
      %v2446 = vsel %vm2034, %v2359, 0
      %v2449 = vsel %vm2034, %v2360, 0
      %v2452 = vsel %vm2034, %v2361, 0
      %v2455 = vsel %vm2034, %v2362, 0
      %v2458 = vsel %vm2034, %v2363, 0
      %v2461 = vsel %vm2034, %v2364, 0
      %v2464 = vsel %vm2034, %v2365, 0
      %v2467 = vsel %vm2034, %v2366, 0
      %v2470 = vsel %vm2034, %v2367, 0
      %v2473 = vsel %vm2034, %v2368, 0
      %v2476 = vsel %vm2034, %v2369, 0
      %2478 = vmatprep.subr.bf16.mxu0 0
      %2479 = vmatpush1.bf16.msra.mxu0 %v2186
      %2480 = vmatprep.subr.bf16.mxu0 0
      %2481 = vmatpush1.bf16.msra.mxu0 %v2187
      %2482 = vmatprep.subr.bf16.mxu0 0
      %2483 = vmatpush1.bf16.msra.mxu0 %v2188
      %2484 = vmatprep.subr.bf16.mxu0 0
      %2485 = vmatpush1.bf16.msra.mxu0 %v2189
      %2486 = vmatprep.subr.bf16.mxu0 0
      %2487 = vmatpush1.bf16.msra.mxu0 0
      %2488 = vmatprep.subr.bf16.mxu0 0
      %2489 = vmatpush1.bf16.msra.mxu0 0
      %2490 = vmatprep.subr.bf16.mxu0 0
      %2491 = vmatpush1.bf16.msra.mxu0 0
      %2492 = vmatprep.subr.bf16.mxu0 0
      %2493 = vmatpush1.bf16.msra.mxu0 0
      %2494 = vmatprep.subr.bf16.mxu0 0
      %2495 = vmatpush1.bf16.msra.mxu0 0
      %2496 = vmatprep.subr.bf16.mxu0 0
      %2497 = vmatpush1.bf16.msra.mxu0 0
      %2498 = vmatprep.subr.bf16.mxu0 0
      %2499 = vmatpush1.bf16.msra.mxu0 0
      %2500 = vmatprep.subr.bf16.mxu0 0
      %2501 = vmatpush1.bf16.msra.mxu0 0
      %2502 = vmatprep.subr.bf16.mxu0 0
      %2503 = vmatpush1.bf16.msra.mxu0 0
      %2504 = vmatprep.subr.bf16.mxu0 0
      %2505 = vmatpush1.bf16.msra.mxu0 0
      %2506 = vmatprep.subr.bf16.mxu0 0
      %2507 = vmatpush1.bf16.msra.mxu0 0
      %2508 = vmatprep.subr.bf16.mxu0 0
      %2509 = vmatpush1.bf16.msra.mxu0 0
      %2510 = vmatprep.mubr.bf16.mxu0 0
      %2511 = vmatmul.mubr.bf16.gmra.mrb[0].mxu0 %v2371
      %v2512 = vpop.f32.mrb[0].mxu0
      %v2513 = vadd.f32 0.0, %v2512
      %v2514 = vpop.f32.mrb[0].mxu0
      %v2515 = vpop.f32.mrb[0].mxu0
      %v2516 = vadd.f32 0.0, %v2515
      %v2517 = vpop.f32.mrb[0].mxu0
      %2518 = vmatprep.mubr.bf16.mxu0 0
      %2519 = vmatmul.mubr.bf16.gmra.mrb[0].mxu0 %v2374
      %v2520 = vpop.f32.mrb[0].mxu0
      %v2521 = vadd.f32 0.0, %v2520
      %v2522 = vpop.f32.mrb[0].mxu0
      %v2523 = vpop.f32.mrb[0].mxu0
      %v2524 = vadd.f32 0.0, %v2523
      %v2525 = vpop.f32.mrb[0].mxu0
      %2526 = vmatprep.mubr.bf16.mxu0 0
      %2527 = vmatmul.mubr.bf16.gmra.mrb[0].mxu0 %v2377
      %v2528 = vpop.f32.mrb[0].mxu0
      %v2529 = vadd.f32 0.0, %v2528
      %v2530 = vpop.f32.mrb[0].mxu0
      %v2531 = vpop.f32.mrb[0].mxu0
      %v2532 = vadd.f32 0.0, %v2531
      %v2533 = vpop.f32.mrb[0].mxu0
      %2534 = vmatprep.mubr.bf16.mxu0 0
      %2535 = vmatmul.mubr.bf16.gmra.mrb[0].mxu0 %v2380
      %v2536 = vpop.f32.mrb[0].mxu0
      %v2537 = vadd.f32 0.0, %v2536
      %v2538 = vpop.f32.mrb[0].mxu0
      %v2539 = vpop.f32.mrb[0].mxu0
      %v2540 = vadd.f32 0.0, %v2539
      %v2541 = vpop.f32.mrb[0].mxu0
      %2542 = vmatprep.mubr.bf16.mxu0 0
      %2543 = vmatmul.mubr.bf16.gmra.mrb[0].mxu0 %v2383
      %v2544 = vpop.f32.mrb[0].mxu0
      %v2545 = vadd.f32 0.0, %v2544
      %v2546 = vpop.f32.mrb[0].mxu0
      %v2547 = vpop.f32.mrb[0].mxu0
      %v2548 = vadd.f32 0.0, %v2547
      %v2549 = vpop.f32.mrb[0].mxu0
      %2550 = vmatprep.mubr.bf16.mxu0 0
      %2551 = vmatmul.mubr.bf16.gmra.mrb[0].mxu0 %v2386
      %v2552 = vpop.f32.mrb[0].mxu0
      %v2553 = vadd.f32 0.0, %v2552
      %v2554 = vpop.f32.mrb[0].mxu0
      %v2555 = vpop.f32.mrb[0].mxu0
      %v2556 = vadd.f32 0.0, %v2555
      %v2557 = vpop.f32.mrb[0].mxu0
      %2558 = vmatprep.mubr.bf16.mxu0 0
      %2559 = vmatmul.mubr.bf16.gmra.mrb[0].mxu0 %v2389
      %v2560 = vpop.f32.mrb[0].mxu0
      %v2561 = vadd.f32 0.0, %v2560
      %v2562 = vpop.f32.mrb[0].mxu0
      %v2563 = vpop.f32.mrb[0].mxu0
      %v2564 = vadd.f32 0.0, %v2563
      %v2565 = vpop.f32.mrb[0].mxu0
      %2566 = vmatprep.mubr.bf16.mxu0 0
      %2567 = vmatmul.mubr.bf16.gmra.mrb[0].mxu0 %v2392
      %v2568 = vpop.f32.mrb[0].mxu0
      %v2569 = vadd.f32 0.0, %v2568
      %v2570 = vpop.f32.mrb[0].mxu0
      %v2571 = vpop.f32.mrb[0].mxu0
      %v2572 = vadd.f32 0.0, %v2571
      %v2573 = vpop.f32.mrb[0].mxu0
      %2574 = vmatprep.mubr.bf16.mxu0 0
      %2575 = vmatmul.mubr.bf16.gmra.mrb[0].mxu0 %v2395
      %v2576 = vpop.f32.mrb[0].mxu0
      %v2577 = vadd.f32 0.0, %v2576
      %v2578 = vpop.f32.mrb[0].mxu0
      %v2579 = vpop.f32.mrb[0].mxu0
      %v2580 = vadd.f32 0.0, %v2579
      %v2581 = vpop.f32.mrb[0].mxu0
      %2582 = vmatprep.mubr.bf16.mxu0 0
      %2583 = vmatmul.mubr.bf16.gmra.mrb[0].mxu0 %v2398
      %v2584 = vpop.f32.mrb[0].mxu0
      %v2585 = vadd.f32 0.0, %v2584
      %v2586 = vpop.f32.mrb[0].mxu0
      %v2587 = vpop.f32.mrb[0].mxu0
      %v2588 = vadd.f32 0.0, %v2587
      %v2589 = vpop.f32.mrb[0].mxu0
      %2590 = vmatprep.mubr.bf16.mxu0 0
      %2591 = vmatmul.mubr.bf16.gmra.mrb[0].mxu0 %v2401
      %v2592 = vpop.f32.mrb[0].mxu0
      %v2593 = vadd.f32 0.0, %v2592
      %v2594 = vpop.f32.mrb[0].mxu0
      %v2595 = vpop.f32.mrb[0].mxu0
      %v2596 = vadd.f32 0.0, %v2595
      %v2597 = vpop.f32.mrb[0].mxu0
      %2598 = vmatprep.mubr.bf16.mxu0 0
      %2599 = vmatmul.mubr.bf16.gmra.mrb[0].mxu0 %v2404
      %v2600 = vpop.f32.mrb[0].mxu0
      %v2601 = vadd.f32 0.0, %v2600
      %v2602 = vpop.f32.mrb[0].mxu0
      %v2603 = vpop.f32.mrb[0].mxu0
      %v2604 = vadd.f32 0.0, %v2603
      %v2605 = vpop.f32.mrb[0].mxu0
      %2606 = vmatprep.mubr.bf16.mxu0 0
      %2607 = vmatmul.mubr.bf16.gmra.mrb[0].mxu0 %v2407
      %v2608 = vpop.f32.mrb[0].mxu0
      %v2609 = vadd.f32 0.0, %v2608
      %v2610 = vpop.f32.mrb[0].mxu0
      %v2611 = vpop.f32.mrb[0].mxu0
      %v2612 = vadd.f32 0.0, %v2611
      %v2613 = vpop.f32.mrb[0].mxu0
      %2614 = vmatprep.mubr.bf16.mxu0 0
      %2615 = vmatmul.mubr.bf16.gmra.mrb[0].mxu0 %v2410
      %v2616 = vpop.f32.mrb[0].mxu0
      %v2617 = vadd.f32 0.0, %v2616
      %v2618 = vpop.f32.mrb[0].mxu0
      %v2619 = vpop.f32.mrb[0].mxu0
      %v2620 = vadd.f32 0.0, %v2619
      %v2621 = vpop.f32.mrb[0].mxu0
      %2622 = vmatprep.mubr.bf16.mxu0 0
      %2623 = vmatmul.mubr.bf16.gmra.mrb[0].mxu0 %v2413
      %v2624 = vpop.f32.mrb[0].mxu0
      %v2625 = vadd.f32 0.0, %v2624
      %v2626 = vpop.f32.mrb[0].mxu0
      %v2627 = vpop.f32.mrb[0].mxu0
      %v2628 = vadd.f32 0.0, %v2627
      %v2629 = vpop.f32.mrb[0].mxu0
      %2630 = vmatprep.mubr.bf16.mxu0 0
      %2631 = vmatmul.mubr.bf16.gmra.mrb[0].mxu0 %v2416
      %v2632 = vpop.f32.mrb[0].mxu0
      %v2633 = vadd.f32 0.0, %v2632
      %v2634 = vpop.f32.mrb[0].mxu0
      %v2635 = vpop.f32.mrb[0].mxu0
      %v2636 = vadd.f32 0.0, %v2635
      %v2637 = vpop.f32.mrb[0].mxu0
      %2638 = vmatprep.mubr.bf16.mxu0 0
      %2639 = vmatmul.mubr.bf16.gmra.mrb[0].mxu0 %v2419
      %v2640 = vpop.f32.mrb[0].mxu0
      %v2641 = vadd.f32 0.0, %v2640
      %v2642 = vpop.f32.mrb[0].mxu0
      %v2643 = vpop.f32.mrb[0].mxu0
      %v2644 = vadd.f32 0.0, %v2643
      %v2645 = vpop.f32.mrb[0].mxu0
      %2646 = vmatprep.mubr.bf16.mxu0 0
      %2647 = vmatmul.mubr.bf16.gmra.mrb[0].mxu0 %v2422
      %v2648 = vpop.f32.mrb[0].mxu0
      %v2649 = vadd.f32 0.0, %v2648
      %v2650 = vpop.f32.mrb[0].mxu0
      %v2651 = vpop.f32.mrb[0].mxu0
      %v2652 = vadd.f32 0.0, %v2651
      %v2653 = vpop.f32.mrb[0].mxu0
      %2654 = vmatprep.mubr.bf16.mxu0 0
      %2655 = vmatmul.mubr.bf16.gmra.mrb[0].mxu0 %v2425
      %v2656 = vpop.f32.mrb[0].mxu0
      %v2657 = vadd.f32 0.0, %v2656
      %v2658 = vpop.f32.mrb[0].mxu0
      %v2659 = vpop.f32.mrb[0].mxu0
      %v2660 = vadd.f32 0.0, %v2659
      %v2661 = vpop.f32.mrb[0].mxu0
      %2662 = vmatprep.mubr.bf16.mxu0 0
      %2663 = vmatmul.mubr.bf16.gmra.mrb[0].mxu0 %v2428
      %v2664 = vpop.f32.mrb[0].mxu0
      %v2665 = vadd.f32 0.0, %v2664
      %v2666 = vpop.f32.mrb[0].mxu0
      %v2667 = vpop.f32.mrb[0].mxu0
      %v2668 = vadd.f32 0.0, %v2667
      %v2669 = vpop.f32.mrb[0].mxu0
      %2670 = vmatprep.mubr.bf16.mxu0 0
      %2671 = vmatmul.mubr.bf16.gmra.mrb[0].mxu0 %v2431
      %v2672 = vpop.f32.mrb[0].mxu0
      %v2673 = vadd.f32 0.0, %v2672
      %v2674 = vpop.f32.mrb[0].mxu0
      %v2675 = vpop.f32.mrb[0].mxu0
      %v2676 = vadd.f32 0.0, %v2675
      %v2677 = vpop.f32.mrb[0].mxu0
      %2678 = vmatprep.mubr.bf16.mxu0 0
      %2679 = vmatmul.mubr.bf16.gmra.mrb[0].mxu0 %v2434
      %v2680 = vpop.f32.mrb[0].mxu0
      %v2681 = vadd.f32 0.0, %v2680
      %v2682 = vpop.f32.mrb[0].mxu0
      %v2683 = vpop.f32.mrb[0].mxu0
      %v2684 = vadd.f32 0.0, %v2683
      %v2685 = vpop.f32.mrb[0].mxu0
      %2686 = vmatprep.mubr.bf16.mxu0 0
      %2687 = vmatmul.mubr.bf16.gmra.mrb[0].mxu0 %v2437
      %v2688 = vpop.f32.mrb[0].mxu0
      %v2689 = vadd.f32 0.0, %v2688
      %v2690 = vpop.f32.mrb[0].mxu0
      %v2691 = vpop.f32.mrb[0].mxu0
      %v2692 = vadd.f32 0.0, %v2691
      %v2693 = vpop.f32.mrb[0].mxu0
      %2694 = vmatprep.mubr.bf16.mxu0 0
      %2695 = vmatmul.mubr.bf16.gmra.mrb[0].mxu0 %v2440
      %v2696 = vpop.f32.mrb[0].mxu0
      %v2697 = vadd.f32 0.0, %v2696
      %v2698 = vpop.f32.mrb[0].mxu0
      %v2699 = vpop.f32.mrb[0].mxu0
      %v2700 = vadd.f32 0.0, %v2699
      %v2701 = vpop.f32.mrb[0].mxu0
      %2702 = vmatprep.mubr.bf16.mxu0 0
      %2703 = vmatmul.mubr.bf16.gmra.mrb[0].mxu0 %v2443
      %v2704 = vpop.f32.mrb[0].mxu0
      %v2705 = vadd.f32 0.0, %v2704
      %v2706 = vpop.f32.mrb[0].mxu0
      %v2707 = vpop.f32.mrb[0].mxu0
      %v2708 = vadd.f32 0.0, %v2707
      %v2709 = vpop.f32.mrb[0].mxu0
      %2710 = vmatprep.mubr.bf16.mxu0 0
      %2711 = vmatmul.mubr.bf16.gmra.mrb[0].mxu0 %v2446
      %v2712 = vpop.f32.mrb[0].mxu0
      %v2713 = vadd.f32 0.0, %v2712
      %v2714 = vpop.f32.mrb[0].mxu0
      %v2715 = vpop.f32.mrb[0].mxu0
      %v2716 = vadd.f32 0.0, %v2715
      %v2717 = vpop.f32.mrb[0].mxu0
      %2718 = vmatprep.mubr.bf16.mxu0 0
      %2719 = vmatmul.mubr.bf16.gmra.mrb[0].mxu0 %v2449
      %v2720 = vpop.f32.mrb[0].mxu0
      %v2721 = vadd.f32 0.0, %v2720
      %v2722 = vpop.f32.mrb[0].mxu0
      %v2723 = vpop.f32.mrb[0].mxu0
      %v2724 = vadd.f32 0.0, %v2723
      %v2725 = vpop.f32.mrb[0].mxu0
      %2726 = vmatprep.mubr.bf16.mxu0 0
      %2727 = vmatmul.mubr.bf16.gmra.mrb[0].mxu0 %v2452
      %v2728 = vpop.f32.mrb[0].mxu0
      %v2729 = vadd.f32 0.0, %v2728
      %v2730 = vpop.f32.mrb[0].mxu0
      %v2731 = vpop.f32.mrb[0].mxu0
      %v2732 = vadd.f32 0.0, %v2731
      %v2733 = vpop.f32.mrb[0].mxu0
      %2734 = vmatprep.mubr.bf16.mxu0 0
      %2735 = vmatmul.mubr.bf16.gmra.mrb[0].mxu0 %v2455
      %v2736 = vpop.f32.mrb[0].mxu0
      %v2737 = vadd.f32 0.0, %v2736
      %v2738 = vpop.f32.mrb[0].mxu0
      %v2739 = vpop.f32.mrb[0].mxu0
      %v2740 = vadd.f32 0.0, %v2739
      %v2741 = vpop.f32.mrb[0].mxu0
      %2742 = vmatprep.mubr.bf16.mxu0 0
      %2743 = vmatmul.mubr.bf16.gmra.mrb[0].mxu0 %v2458
      %v2744 = vpop.f32.mrb[0].mxu0
      %v2745 = vadd.f32 0.0, %v2744
      %v2746 = vpop.f32.mrb[0].mxu0
      %v2747 = vpop.f32.mrb[0].mxu0
      %v2748 = vadd.f32 0.0, %v2747
      %v2749 = vpop.f32.mrb[0].mxu0
      %2750 = vmatprep.mubr.bf16.mxu0 0
      %2751 = vmatmul.mubr.bf16.gmra.mrb[0].mxu0 %v2461
      %v2752 = vpop.f32.mrb[0].mxu0
      %v2753 = vadd.f32 0.0, %v2752
      %v2754 = vpop.f32.mrb[0].mxu0
      %v2755 = vpop.f32.mrb[0].mxu0
      %v2756 = vadd.f32 0.0, %v2755
      %v2757 = vpop.f32.mrb[0].mxu0
      %2758 = vmatprep.mubr.bf16.mxu0 0
      %2759 = vmatmul.mubr.bf16.gmra.mrb[0].mxu0 %v2464
      %v2760 = vpop.f32.mrb[0].mxu0
      %v2761 = vadd.f32 0.0, %v2760
      %v2762 = vpop.f32.mrb[0].mxu0
      %v2763 = vpop.f32.mrb[0].mxu0
      %v2764 = vadd.f32 0.0, %v2763
      %v2765 = vpop.f32.mrb[0].mxu0
      %2766 = vmatprep.mubr.bf16.mxu0 0
      %2767 = vmatmul.mubr.bf16.gmra.mrb[0].mxu0 %v2467
      %v2768 = vpop.f32.mrb[0].mxu0
      %v2769 = vadd.f32 0.0, %v2768
      %v2770 = vpop.f32.mrb[0].mxu0
      %v2771 = vpop.f32.mrb[0].mxu0
      %v2772 = vadd.f32 0.0, %v2771
      %v2773 = vpop.f32.mrb[0].mxu0
      %2774 = vmatprep.mubr.bf16.mxu0 0
      %2775 = vmatmul.mubr.bf16.gmra.mrb[0].mxu0 %v2470
      %v2776 = vpop.f32.mrb[0].mxu0
      %v2777 = vadd.f32 0.0, %v2776
      %v2778 = vpop.f32.mrb[0].mxu0
      %v2779 = vpop.f32.mrb[0].mxu0
      %v2780 = vadd.f32 0.0, %v2779
      %v2781 = vpop.f32.mrb[0].mxu0
      %2782 = vmatprep.mubr.bf16.mxu0 0
      %2783 = vmatmul.mubr.bf16.gmra.mrb[0].mxu0 %v2473
      %v2784 = vpop.f32.mrb[0].mxu0
      %v2785 = vadd.f32 0.0, %v2784
      %v2786 = vpop.f32.mrb[0].mxu0
      %v2787 = vpop.f32.mrb[0].mxu0
      %v2788 = vadd.f32 0.0, %v2787
      %v2789 = vpop.f32.mrb[0].mxu0
      %2790 = vmatprep.mubr.bf16.mxu0 0
      %2791 = vmatmul.mubr.bf16.gmra.mrb[0].mxu0 %v2476
      %v2792 = vpop.f32.mrb[0].mxu0
      %v2793 = vadd.f32 0.0, %v2792
      %v2794 = vpop.f32.mrb[0].mxu0
      %v2795 = vpop.f32.mrb[0].mxu0
      %v2796 = vadd.f32 0.0, %v2795
      %v2797 = vpop.f32.mrb[0].mxu0
      %2798 = vdwg.mxu0
      %v2799 = vld [vmem:[%s5] sm:$0xff]
      %v2800 = vld [vmem:[%s5 + $0x8] sm:$0x1]
      %v2803 = vcombine.high %v2799, %v2799
      %v2805 = vunpack.c.l.s4 1966171168
      %v2806 = vunpack.c.0.s8 %v2805
      %v2807 = vlaneseq
      %v2808 = vshrl.u32 %v2807, 7
      %v2809 = vsub.s32 %v2806, %v2808
      %v2810 = vrot.slane %v2799, %v2809
      %v2812 = vunpack.c.l.s4 1966171168
      %v2813 = vunpack.c.0.s8 %v2812
      %v2814 = vlaneseq
      %v2815 = vshrl.u32 %v2814, 7
      %v2816 = vsub.s32 %v2813, %v2815
      %v2817 = vrot.slane %v2803, %v2816
      %v2818 = vcombine.high %v2810, %v2810
      %v2819 = vcombine.high %v2817, %v2817
      %v2821 = vunpack.c.l.s4 1966171168
      %v2822 = vunpack.c.0.s8 %v2821
      %v2823 = vlaneseq
      %v2824 = vshrl.u32 %v2823, 7
      %v2825 = vsub.s32 %v2822, %v2824
      %v2826 = vrot.slane %v2810, %v2825
      %v2828 = vunpack.c.l.s4 1966171168
      %v2829 = vunpack.c.0.s8 %v2828
      %v2830 = vlaneseq
      %v2831 = vshrl.u32 %v2830, 7
      %v2832 = vsub.s32 %v2829, %v2831
      %v2833 = vrot.slane %v2817, %v2832
      %v2835 = vunpack.c.l.s4 1966171168
      %v2836 = vunpack.c.0.s8 %v2835
      %v2837 = vlaneseq
      %v2838 = vshrl.u32 %v2837, 7
      %v2839 = vsub.s32 %v2836, %v2838
      %v2840 = vrot.slane %v2818, %v2839
      %v2842 = vunpack.c.l.s4 1966171168
      %v2843 = vunpack.c.0.s8 %v2842
      %v2844 = vlaneseq
      %v2845 = vshrl.u32 %v2844, 7
      %v2846 = vsub.s32 %v2843, %v2845
      %v2847 = vrot.slane %v2819, %v2846
      %v2848 = vcombine.high %v2826, %v2826
      %v2849 = vcombine.high %v2833, %v2833
      %v2850 = vcombine.high %v2840, %v2840
      %v2851 = vcombine.high %v2847, %v2847
      %v2853 = vunpack.c.l.s4 1966171168
      %v2854 = vunpack.c.0.s8 %v2853
      %v2855 = vlaneseq
      %v2856 = vshrl.u32 %v2855, 7
      %v2857 = vsub.s32 %v2854, %v2856
      %v2858 = vrot.slane %v2800, %v2857
      %v2860 = vunpack.c.l.s4 1966171168
      %v2861 = vunpack.c.0.s8 %v2860
      %v2862 = vlaneseq
      %v2863 = vshrl.u32 %v2862, 7
      %v2864 = vsub.s32 %v2861, %v2863
      %v2865 = vrot.slane %v2858, %v2864
      %v2866 = vlaneseq
      %v2867 = vshrl.u32 %v2866, 7
      %v2868 = vsub.s32 0, %v2867
      %v2869 = vrot.slane %v2826, %v2868
      %v2870 = vlaneseq
      %v2871 = vshrl.u32 %v2870, 7
      %v2872 = vsub.s32 0, %v2871
      %v2873 = vrot.slane %v2840, %v2872
      %v2874 = vlaneseq
      %v2875 = vshrl.u32 %v2874, 7
      %v2876 = vsub.s32 0, %v2875
      %v2877 = vrot.slane %v2848, %v2876
      %v2878 = vlaneseq
      %v2879 = vshrl.u32 %v2878, 7
      %v2880 = vsub.s32 0, %v2879
      %v2881 = vrot.slane %v2850, %v2880
      %v2882 = vlaneseq
      %v2883 = vshrl.u32 %v2882, 7
      %v2884 = vsub.s32 0, %v2883
      %v2885 = vrot.slane %v2833, %v2884
      %v2886 = vlaneseq
      %v2887 = vshrl.u32 %v2886, 7
      %v2888 = vsub.s32 0, %v2887
      %v2889 = vrot.slane %v2847, %v2888
      %v2890 = vlaneseq
      %v2891 = vshrl.u32 %v2890, 7
      %v2892 = vsub.s32 0, %v2891
      %v2893 = vrot.slane %v2849, %v2892
      %v2894 = vlaneseq
      %v2895 = vshrl.u32 %v2894, 7
      %v2896 = vsub.s32 0, %v2895
      %v2897 = vrot.slane %v2851, %v2896
      %v2898 = vlaneseq
      %v2899 = vshrl.u32 %v2898, 7
      %v2900 = vsub.s32 0, %v2899
      %v2901 = vrot.slane %v2865, %v2900
      %v2911 = vmul.f32 %v2513, %v2869
      %v2912 = vmul.f32 %v2516, %v2869
      %v2913 = vmul.f32 %v2521, %v2869
      %v2914 = vmul.f32 %v2524, %v2869
      %v2915 = vmul.f32 %v2529, %v2869
      %v2916 = vmul.f32 %v2532, %v2869
      %v2917 = vmul.f32 %v2537, %v2869
      %v2918 = vmul.f32 %v2540, %v2869
      %v2919 = vmul.f32 %v2545, %v2873
      %v2920 = vmul.f32 %v2548, %v2873
      %v2921 = vmul.f32 %v2553, %v2873
      %v2922 = vmul.f32 %v2556, %v2873
      %v2923 = vmul.f32 %v2561, %v2873
      %v2924 = vmul.f32 %v2564, %v2873
      %v2925 = vmul.f32 %v2569, %v2873
      %v2926 = vmul.f32 %v2572, %v2873
      %v2927 = vmul.f32 %v2577, %v2877
      %v2928 = vmul.f32 %v2580, %v2877
      %v2929 = vmul.f32 %v2585, %v2877
      %v2930 = vmul.f32 %v2588, %v2877
      %v2931 = vmul.f32 %v2593, %v2877
      %v2932 = vmul.f32 %v2596, %v2877
      %v2933 = vmul.f32 %v2601, %v2877
      %v2934 = vmul.f32 %v2604, %v2877
      %v2935 = vmul.f32 %v2609, %v2881
      %v2936 = vmul.f32 %v2612, %v2881
      %v2937 = vmul.f32 %v2617, %v2881
      %v2938 = vmul.f32 %v2620, %v2881
      %v2939 = vmul.f32 %v2625, %v2881
      %v2940 = vmul.f32 %v2628, %v2881
      %v2941 = vmul.f32 %v2633, %v2881
      %v2942 = vmul.f32 %v2636, %v2881
      %v2943 = vmul.f32 %v2641, %v2885
      %v2944 = vmul.f32 %v2644, %v2885
      %v2945 = vmul.f32 %v2649, %v2885
      %v2946 = vmul.f32 %v2652, %v2885
      %v2947 = vmul.f32 %v2657, %v2885
      %v2948 = vmul.f32 %v2660, %v2885
      %v2949 = vmul.f32 %v2665, %v2885
      %v2950 = vmul.f32 %v2668, %v2885
      %v2951 = vmul.f32 %v2673, %v2889
      %v2952 = vmul.f32 %v2676, %v2889
      %v2953 = vmul.f32 %v2681, %v2889
      %v2954 = vmul.f32 %v2684, %v2889
      %v2955 = vmul.f32 %v2689, %v2889
      %v2956 = vmul.f32 %v2692, %v2889
      %v2957 = vmul.f32 %v2697, %v2889
      %v2958 = vmul.f32 %v2700, %v2889
      %v2959 = vmul.f32 %v2705, %v2893
      %v2960 = vmul.f32 %v2708, %v2893
      %v2961 = vmul.f32 %v2713, %v2893
      %v2962 = vmul.f32 %v2716, %v2893
      %v2963 = vmul.f32 %v2721, %v2893
      %v2964 = vmul.f32 %v2724, %v2893
      %v2965 = vmul.f32 %v2729, %v2893
      %v2966 = vmul.f32 %v2732, %v2893
      %v2967 = vmul.f32 %v2737, %v2897
      %v2968 = vmul.f32 %v2740, %v2897
      %v2969 = vmul.f32 %v2745, %v2897
      %v2970 = vmul.f32 %v2748, %v2897
      %v2971 = vmul.f32 %v2753, %v2897
      %v2972 = vmul.f32 %v2756, %v2897
      %v2973 = vmul.f32 %v2761, %v2897
      %v2974 = vmul.f32 %v2764, %v2897
      %v2975 = vmul.f32 %v2769, %v2901
      %v2976 = vmul.f32 %v2772, %v2901
      %v2977 = vmul.f32 %v2777, %v2901
      %v2978 = vmul.f32 %v2780, %v2901
      %v2979 = vmul.f32 %v2785, %v2901
      %v2980 = vmul.f32 %v2788, %v2901
      %v2981 = vmul.f32 %v2793, %v2901
      %v2982 = vmul.f32 %v2796, %v2901
      %v2983 = vsel %vm2034, %v2911, 0.0
      %v2984 = vsel %vm2034, %v2919, 0.0
      %v2985 = vadd.f32 %v2983, %v2984
      %v2986 = vsel %vm2034, %v2927, 0.0
      %v2987 = vadd.f32 %v2985, %v2986
      %v2988 = vsel %vm2034, %v2935, 0.0
      %v2989 = vadd.f32 %v2987, %v2988
      %v2990 = vsel %vm2034, %v2943, 0.0
      %v2991 = vadd.f32 %v2989, %v2990
      %v2992 = vsel %vm2034, %v2951, 0.0
      %v2993 = vadd.f32 %v2991, %v2992
      %v2994 = vsel %vm2034, %v2959, 0.0
      %v2995 = vadd.f32 %v2993, %v2994
      %v2996 = vsel %vm2034, %v2967, 0.0
      %v2997 = vadd.f32 %v2995, %v2996
      %v2998 = vsel %vm2034, %v2975, 0.0
      %v2999 = vadd.f32 %v2997, %v2998
      %v3000 = vsel %vm2034, %v2912, 0.0
      %v3001 = vsel %vm2034, %v2920, 0.0
      %v3002 = vadd.f32 %v3000, %v3001
      %v3003 = vsel %vm2034, %v2928, 0.0
      %v3004 = vadd.f32 %v3002, %v3003
      %v3005 = vsel %vm2034, %v2936, 0.0
      %v3006 = vadd.f32 %v3004, %v3005
      %v3007 = vsel %vm2034, %v2944, 0.0
      %v3008 = vadd.f32 %v3006, %v3007
      %v3009 = vsel %vm2034, %v2952, 0.0
      %v3010 = vadd.f32 %v3008, %v3009
      %v3011 = vsel %vm2034, %v2960, 0.0
      %v3012 = vadd.f32 %v3010, %v3011
      %v3013 = vsel %vm2034, %v2968, 0.0
      %v3014 = vadd.f32 %v3012, %v3013
      %v3015 = vsel %vm2034, %v2976, 0.0
      %v3016 = vadd.f32 %v3014, %v3015
      %v3017 = vsel %vm2034, %v2913, 0.0
      %v3018 = vsel %vm2034, %v2921, 0.0
      %v3019 = vadd.f32 %v3017, %v3018
      %v3020 = vsel %vm2034, %v2929, 0.0
      %v3021 = vadd.f32 %v3019, %v3020
      %v3022 = vsel %vm2034, %v2937, 0.0
      %v3023 = vadd.f32 %v3021, %v3022
      %v3024 = vsel %vm2034, %v2945, 0.0
      %v3025 = vadd.f32 %v3023, %v3024
      %v3026 = vsel %vm2034, %v2953, 0.0
      %v3027 = vadd.f32 %v3025, %v3026
      %v3028 = vsel %vm2034, %v2961, 0.0
      %v3029 = vadd.f32 %v3027, %v3028
      %v3030 = vsel %vm2034, %v2969, 0.0
      %v3031 = vadd.f32 %v3029, %v3030
      %v3032 = vsel %vm2034, %v2977, 0.0
      %v3033 = vadd.f32 %v3031, %v3032
      %v3034 = vsel %vm2034, %v2914, 0.0
      %v3035 = vsel %vm2034, %v2922, 0.0
      %v3036 = vadd.f32 %v3034, %v3035
      %v3037 = vsel %vm2034, %v2930, 0.0
      %v3038 = vadd.f32 %v3036, %v3037
      %v3039 = vsel %vm2034, %v2938, 0.0
      %v3040 = vadd.f32 %v3038, %v3039
      %v3041 = vsel %vm2034, %v2946, 0.0
      %v3042 = vadd.f32 %v3040, %v3041
      %v3043 = vsel %vm2034, %v2954, 0.0
      %v3044 = vadd.f32 %v3042, %v3043
      %v3045 = vsel %vm2034, %v2962, 0.0
      %v3046 = vadd.f32 %v3044, %v3045
      %v3047 = vsel %vm2034, %v2970, 0.0
      %v3048 = vadd.f32 %v3046, %v3047
      %v3049 = vsel %vm2034, %v2978, 0.0
      %v3050 = vadd.f32 %v3048, %v3049
      %v3051 = vsel %vm2034, %v2915, 0.0
      %v3052 = vsel %vm2034, %v2923, 0.0
      %v3053 = vadd.f32 %v3051, %v3052
      %v3054 = vsel %vm2034, %v2931, 0.0
      %v3055 = vadd.f32 %v3053, %v3054
      %v3056 = vsel %vm2034, %v2939, 0.0
      %v3057 = vadd.f32 %v3055, %v3056
      %v3058 = vsel %vm2034, %v2947, 0.0
      %v3059 = vadd.f32 %v3057, %v3058
      %v3060 = vsel %vm2034, %v2955, 0.0
      %v3061 = vadd.f32 %v3059, %v3060
      %v3062 = vsel %vm2034, %v2963, 0.0
      %v3063 = vadd.f32 %v3061, %v3062
      %v3064 = vsel %vm2034, %v2971, 0.0
      %v3065 = vadd.f32 %v3063, %v3064
      %v3066 = vsel %vm2034, %v2979, 0.0
      %v3067 = vadd.f32 %v3065, %v3066
      %v3068 = vsel %vm2034, %v2916, 0.0
      %v3069 = vsel %vm2034, %v2924, 0.0
      %v3070 = vadd.f32 %v3068, %v3069
      %v3071 = vsel %vm2034, %v2932, 0.0
      %v3072 = vadd.f32 %v3070, %v3071
      %v3073 = vsel %vm2034, %v2940, 0.0
      %v3074 = vadd.f32 %v3072, %v3073
      %v3075 = vsel %vm2034, %v2948, 0.0
      %v3076 = vadd.f32 %v3074, %v3075
      %v3077 = vsel %vm2034, %v2956, 0.0
      %v3078 = vadd.f32 %v3076, %v3077
      %v3079 = vsel %vm2034, %v2964, 0.0
      %v3080 = vadd.f32 %v3078, %v3079
      %v3081 = vsel %vm2034, %v2972, 0.0
      %v3082 = vadd.f32 %v3080, %v3081
      %v3083 = vsel %vm2034, %v2980, 0.0
      %v3084 = vadd.f32 %v3082, %v3083
      %v3085 = vsel %vm2034, %v2917, 0.0
      %v3086 = vsel %vm2034, %v2925, 0.0
      %v3087 = vadd.f32 %v3085, %v3086
      %v3088 = vsel %vm2034, %v2933, 0.0
      %v3089 = vadd.f32 %v3087, %v3088
      %v3090 = vsel %vm2034, %v2941, 0.0
      %v3091 = vadd.f32 %v3089, %v3090
      %v3092 = vsel %vm2034, %v2949, 0.0
      %v3093 = vadd.f32 %v3091, %v3092
      %v3094 = vsel %vm2034, %v2957, 0.0
      %v3095 = vadd.f32 %v3093, %v3094
      %v3096 = vsel %vm2034, %v2965, 0.0
      %v3097 = vadd.f32 %v3095, %v3096
      %v3098 = vsel %vm2034, %v2973, 0.0
      %v3099 = vadd.f32 %v3097, %v3098
      %v3100 = vsel %vm2034, %v2981, 0.0
      %v3101 = vadd.f32 %v3099, %v3100
      %v3102 = vsel %vm2034, %v2918, 0.0
      %v3103 = vsel %vm2034, %v2926, 0.0
      %v3104 = vadd.f32 %v3102, %v3103
      %v3105 = vsel %vm2034, %v2934, 0.0
      %v3106 = vadd.f32 %v3104, %v3105
      %v3107 = vsel %vm2034, %v2942, 0.0
      %v3108 = vadd.f32 %v3106, %v3107
      %v3109 = vsel %vm2034, %v2950, 0.0
      %v3110 = vadd.f32 %v3108, %v3109
      %v3111 = vsel %vm2034, %v2958, 0.0
      %v3112 = vadd.f32 %v3110, %v3111
      %v3113 = vsel %vm2034, %v2966, 0.0
      %v3114 = vadd.f32 %v3112, %v3113
      %v3115 = vsel %vm2034, %v2974, 0.0
      %v3116 = vadd.f32 %v3114, %v3115
      %v3117 = vsel %vm2034, %v2982, 0.0
      %v3118 = vadd.f32 %v3116, %v3117
      %v3119 = vpack.c.bf16 %v1461, %v1458
      %v3120 = vpack.c.bf16 %v1469, %v1466
      %v3121 = vpack.c.bf16 %v1477, %v1474
      %v3122 = vpack.c.bf16 %v1485, %v1482
      %v3123 = vld [vmem:[%s7] sm:$0xf]
      %v3124 = vld [vmem:[%s7 + $0x4] sm:$0xf]
      %v3125 = vld [vmem:[%s7 + $0x8] sm:$0xf]
      %v3126 = vld [vmem:[%s7 + $0xc] sm:$0xf]
      %v3131 = vunpack.c.l.b16 %v3123
      %v3132 = vunpack.c.l.b16 %v3124
      %v3133 = vunpack.c.l.b16 %v3125
      %v3134 = vunpack.c.l.b16 %v3126
      %v3135 = vpack.c.b16 %v3132, %v3131
      %v3136 = vpack.c.b16 %v3134, %v3133
      %v3140 = vsel %vm1800, %v3119, 0
      %v3143 = vsel %vm1800, %v3120, 0
      %v3146 = vsel %vm1800, %v3121, 0
      %v3149 = vsel %vm1800, %v3122, 0
      %3151 = vmatprep.subr.bf16.mxu0 0
      %3152 = vmatpush1.bf16.msra.mxu0 %v3135
      %3153 = vmatprep.subr.bf16.mxu0 0
      %3154 = vmatpush1.bf16.msra.mxu0 %v3136
      %3155 = vmatprep.subr.bf16.mxu0 0
      %3156 = vmatpush1.bf16.msra.mxu0 0
      %3157 = vmatprep.subr.bf16.mxu0 0
      %3158 = vmatpush1.bf16.msra.mxu0 0
      %3159 = vmatprep.subr.bf16.mxu0 0
      %3160 = vmatpush1.bf16.msra.mxu0 0
      %3161 = vmatprep.subr.bf16.mxu0 0
      %3162 = vmatpush1.bf16.msra.mxu0 0
      %3163 = vmatprep.subr.bf16.mxu0 0
      %3164 = vmatpush1.bf16.msra.mxu0 0
      %3165 = vmatprep.subr.bf16.mxu0 0
      %3166 = vmatpush1.bf16.msra.mxu0 0
      %3167 = vmatprep.subr.bf16.mxu0 0
      %3168 = vmatpush1.bf16.msra.mxu0 0
      %3169 = vmatprep.subr.bf16.mxu0 0
      %3170 = vmatpush1.bf16.msra.mxu0 0
      %3171 = vmatprep.subr.bf16.mxu0 0
      %3172 = vmatpush1.bf16.msra.mxu0 0
      %3173 = vmatprep.subr.bf16.mxu0 0
      %3174 = vmatpush1.bf16.msra.mxu0 0
      %3175 = vmatprep.subr.bf16.mxu0 0
      %3176 = vmatpush1.bf16.msra.mxu0 0
      %3177 = vmatprep.subr.bf16.mxu0 0
      %3178 = vmatpush1.bf16.msra.mxu0 0
      %3179 = vmatprep.subr.bf16.mxu0 0
      %3180 = vmatpush1.bf16.msra.mxu0 0
      %3181 = vmatprep.subr.bf16.mxu0 0
      %3182 = vmatpush1.bf16.msra.mxu0 0
      %3183 = vmatprep.mubr.bf16.mxu0 0
      %3184 = vmatmul.mubr.bf16.gmra.mrb[0].mxu0 %v3140
      %v3185 = vpop.f32.mrb[0].mxu0
      %v3186 = vadd.f32 0.0, %v3185
      %v3187 = vpop.f32.mrb[0].mxu0
      %v3188 = vpop.f32.mrb[0].mxu0
      %v3189 = vadd.f32 0.0, %v3188
      %v3190 = vpop.f32.mrb[0].mxu0
      %3191 = vmatprep.mubr.bf16.mxu0 0
      %3192 = vmatmul.mubr.bf16.gmra.mrb[0].mxu0 %v3143
      %v3193 = vpop.f32.mrb[0].mxu0
      %v3194 = vadd.f32 0.0, %v3193
      %v3195 = vpop.f32.mrb[0].mxu0
      %v3196 = vpop.f32.mrb[0].mxu0
      %v3197 = vadd.f32 0.0, %v3196
      %v3198 = vpop.f32.mrb[0].mxu0
      %3199 = vmatprep.mubr.bf16.mxu0 0
      %3200 = vmatmul.mubr.bf16.gmra.mrb[0].mxu0 %v3146
      %v3201 = vpop.f32.mrb[0].mxu0
      %v3202 = vadd.f32 0.0, %v3201
      %v3203 = vpop.f32.mrb[0].mxu0
      %v3204 = vpop.f32.mrb[0].mxu0
      %v3205 = vadd.f32 0.0, %v3204
      %v3206 = vpop.f32.mrb[0].mxu0
      %3207 = vmatprep.mubr.bf16.mxu0 0
      %3208 = vmatmul.mubr.bf16.gmra.mrb[0].mxu0 %v3149
      %v3209 = vpop.f32.mrb[0].mxu0
      %v3210 = vadd.f32 0.0, %v3209
      %v3211 = vpop.f32.mrb[0].mxu0
      %v3212 = vpop.f32.mrb[0].mxu0
      %v3213 = vadd.f32 0.0, %v3212
      %v3214 = vpop.f32.mrb[0].mxu0
      %3215 = vdwg.mxu0
      %v3216 = vpack.c.bf16 %v3016, %v2999
      %v3217 = vpack.c.bf16 %v3050, %v3033
      %v3218 = vpack.c.bf16 %v3084, %v3067
      %v3219 = vpack.c.bf16 %v3118, %v3101
      %v3220 = vld [vmem:[%s6] sm:$0xf]
      %v3221 = vld [vmem:[%s6 + $0x4] sm:$0xf]
      %v3222 = vld [vmem:[%s6 + $0x8] sm:$0xf]
      %v3223 = vld [vmem:[%s6 + $0xc] sm:$0xf]
      %v3224 = vld [vmem:[%s6 + $0x10] sm:$0xf]
      %v3225 = vld [vmem:[%s6 + $0x14] sm:$0xf]
      %v3226 = vld [vmem:[%s6 + $0x18] sm:$0xf]
      %v3227 = vld [vmem:[%s6 + $0x1c] sm:$0xf]
      %v3236 = vunpack.c.l.b16 %v3220
      %v3237 = vunpack.c.l.b16 %v3221
      %v3238 = vunpack.c.l.b16 %v3222
      %v3239 = vunpack.c.l.b16 %v3223
      %v3240 = vunpack.c.l.b16 %v3224
      %v3241 = vunpack.c.l.b16 %v3225
      %v3242 = vunpack.c.l.b16 %v3226
      %v3243 = vunpack.c.l.b16 %v3227
      %v3244 = vpack.c.b16 %v3237, %v3236
      %v3245 = vpack.c.b16 %v3239, %v3238
      %v3246 = vpack.c.b16 %v3241, %v3240
      %v3247 = vpack.c.b16 %v3243, %v3242
      %v3253 = vsel %vm2034, %v3216, 0
      %v3256 = vsel %vm2034, %v3217, 0
      %v3259 = vsel %vm2034, %v3218, 0
      %v3262 = vsel %vm2034, %v3219, 0
      %3264 = vmatprep.subr.bf16.mxu0 0
      %3265 = vmatpush1.bf16.msra.mxu0 %v3244
      %3266 = vmatprep.subr.bf16.mxu0 0
      %3267 = vmatpush1.bf16.msra.mxu0 %v3245
      %3268 = vmatprep.subr.bf16.mxu0 0
      %3269 = vmatpush1.bf16.msra.mxu0 %v3246
      %3270 = vmatprep.subr.bf16.mxu0 0
      %3271 = vmatpush1.bf16.msra.mxu0 %v3247
      %3272 = vmatprep.subr.bf16.mxu0 0
      %3273 = vmatpush1.bf16.msra.mxu0 0
      %3274 = vmatprep.subr.bf16.mxu0 0
      %3275 = vmatpush1.bf16.msra.mxu0 0
      %3276 = vmatprep.subr.bf16.mxu0 0
      %3277 = vmatpush1.bf16.msra.mxu0 0
      %3278 = vmatprep.subr.bf16.mxu0 0
      %3279 = vmatpush1.bf16.msra.mxu0 0
      %3280 = vmatprep.subr.bf16.mxu0 0
      %3281 = vmatpush1.bf16.msra.mxu0 0
      %3282 = vmatprep.subr.bf16.mxu0 0
      %3283 = vmatpush1.bf16.msra.mxu0 0
      %3284 = vmatprep.subr.bf16.mxu0 0
      %3285 = vmatpush1.bf16.msra.mxu0 0
      %3286 = vmatprep.subr.bf16.mxu0 0
      %3287 = vmatpush1.bf16.msra.mxu0 0
      %3288 = vmatprep.subr.bf16.mxu0 0
      %3289 = vmatpush1.bf16.msra.mxu0 0
      %3290 = vmatprep.subr.bf16.mxu0 0
      %3291 = vmatpush1.bf16.msra.mxu0 0
      %3292 = vmatprep.subr.bf16.mxu0 0
      %3293 = vmatpush1.bf16.msra.mxu0 0
      %3294 = vmatprep.subr.bf16.mxu0 0
      %3295 = vmatpush1.bf16.msra.mxu0 0
      %3296 = vmatprep.mubr.bf16.mxu0 0
      %3297 = vmatmul.mubr.bf16.gmra.mrb[0].mxu0 %v3253
      %v3298 = vpop.f32.mrb[0].mxu0
      %v3299 = vadd.f32 0.0, %v3298
      %v3300 = vpop.f32.mrb[0].mxu0
      %v3301 = vpop.f32.mrb[0].mxu0
      %v3302 = vadd.f32 0.0, %v3301
      %v3303 = vpop.f32.mrb[0].mxu0
      %3304 = vmatprep.mubr.bf16.mxu0 0
      %3305 = vmatmul.mubr.bf16.gmra.mrb[0].mxu0 %v3256
      %v3306 = vpop.f32.mrb[0].mxu0
      %v3307 = vadd.f32 0.0, %v3306
      %v3308 = vpop.f32.mrb[0].mxu0
      %v3309 = vpop.f32.mrb[0].mxu0
      %v3310 = vadd.f32 0.0, %v3309
      %v3311 = vpop.f32.mrb[0].mxu0
      %3312 = vmatprep.mubr.bf16.mxu0 0
      %3313 = vmatmul.mubr.bf16.gmra.mrb[0].mxu0 %v3259
      %v3314 = vpop.f32.mrb[0].mxu0
      %v3315 = vadd.f32 0.0, %v3314
      %v3316 = vpop.f32.mrb[0].mxu0
      %v3317 = vpop.f32.mrb[0].mxu0
      %v3318 = vadd.f32 0.0, %v3317
      %v3319 = vpop.f32.mrb[0].mxu0
      %3320 = vmatprep.mubr.bf16.mxu0 0
      %3321 = vmatmul.mubr.bf16.gmra.mrb[0].mxu0 %v3262
      %v3322 = vpop.f32.mrb[0].mxu0
      %v3323 = vadd.f32 0.0, %v3322
      %v3324 = vpop.f32.mrb[0].mxu0
      %v3325 = vpop.f32.mrb[0].mxu0
      %v3326 = vadd.f32 0.0, %v3325
      %v3327 = vpop.f32.mrb[0].mxu0
      %3328 = vdwg.mxu0
      %v3329 = vsel %vm2034, %v3299, 0.0
      %v3330 = vsel %vm2034, %v3302, 0.0
      %v3331 = vadd.f32 %v3329, %v3330
      %v3332 = vsel %vm2034, %v3307, 0.0
      %v3333 = vadd.f32 %v3331, %v3332
      %v3334 = vsel %vm2034, %v3310, 0.0
      %v3335 = vadd.f32 %v3333, %v3334
      %v3336 = vsel %vm2034, %v3315, 0.0
      %v3337 = vadd.f32 %v3335, %v3336
      %v3338 = vsel %vm2034, %v3318, 0.0
      %v3339 = vadd.f32 %v3337, %v3338
      %v3340 = vsel %vm2034, %v3323, 0.0
      %v3341 = vadd.f32 %v3339, %v3340
      %v3342 = vsel %vm2034, %v3326, 0.0
      %v3343 = vadd.f32 %v3341, %v3342
      %v3344 = vrot.slane %v3343, 4
      %v3345 = vadd.f32 %v3343, %v3344
      %v3346 = vrot.slane %v3345, 2
      %v3347 = vadd.f32 %v3345, %v3346
      %v3348 = vrot.slane %v3347, 1
      %v3349 = vadd.f32 %v3347, %v3348
      %v3350 = vmul.f32 %v3349, %v2056
      %v3351 = vsub.f32 %v3299, %v3350
      %v3352 = vsub.f32 %v3302, %v3350
      %v3353 = vsub.f32 %v3307, %v3350
      %v3354 = vsub.f32 %v3310, %v3350
      %v3355 = vsub.f32 %v3315, %v3350
      %v3356 = vsub.f32 %v3318, %v3350
      %v3357 = vsub.f32 %v3323, %v3350
      %v3358 = vsub.f32 %v3326, %v3350
      %v3359 = vmul.f32 %v3351, %v3351
      %v3360 = vmul.f32 %v3352, %v3352
      %v3361 = vmul.f32 %v3353, %v3353
      %v3362 = vmul.f32 %v3354, %v3354
      %v3363 = vmul.f32 %v3355, %v3355
      %v3364 = vmul.f32 %v3356, %v3356
      %v3365 = vmul.f32 %v3357, %v3357
      %v3366 = vmul.f32 %v3358, %v3358
      %v3367 = vsel %vm2034, %v3359, 0.0
      %v3368 = vsel %vm2034, %v3360, 0.0
      %v3369 = vadd.f32 %v3367, %v3368
      %v3370 = vsel %vm2034, %v3361, 0.0
      %v3371 = vadd.f32 %v3369, %v3370
      %v3372 = vsel %vm2034, %v3362, 0.0
      %v3373 = vadd.f32 %v3371, %v3372
      %v3374 = vsel %vm2034, %v3363, 0.0
      %v3375 = vadd.f32 %v3373, %v3374
      %v3376 = vsel %vm2034, %v3364, 0.0
      %v3377 = vadd.f32 %v3375, %v3376
      %v3378 = vsel %vm2034, %v3365, 0.0
      %v3379 = vadd.f32 %v3377, %v3378
      %v3380 = vsel %vm2034, %v3366, 0.0
      %v3381 = vadd.f32 %v3379, %v3380
      %v3382 = vrot.slane %v3381, 4
      %v3383 = vadd.f32 %v3381, %v3382
      %v3384 = vrot.slane %v3383, 2
      %v3385 = vadd.f32 %v3383, %v3384
      %v3386 = vrot.slane %v3385, 1
      %v3387 = vadd.f32 %v3385, %v3386
      %v3388 = vmul.f32 %v3387, %v2056
      %v3389 = vadd.f32 %v3388, 1e-05
      %v3390 = vrsqrt.pop %v3389
      %v3391 = vmul.f32 %v3351, %v3390
      %v3392 = vmul.f32 %v3352, %v3390
      %v3393 = vmul.f32 %v3353, %v3390
      %v3394 = vmul.f32 %v3354, %v3390
      %v3395 = vmul.f32 %v3355, %v3390
      %v3396 = vmul.f32 %v3356, %v3390
      %v3397 = vmul.f32 %v3357, %v3390
      %v3398 = vmul.f32 %v3358, %v3390
      %v3399 = vadd.f32 %v3391, %v3186
      %v3400 = vadd.f32 %v3392, %v3189
      %v3401 = vadd.f32 %v3393, %v3194
      %v3402 = vadd.f32 %v3394, %v3197
      %v3403 = vadd.f32 %v3395, %v3202
      %v3404 = vadd.f32 %v3396, %v3205
      %v3405 = vadd.f32 %v3397, %v3210
      %v3406 = vadd.f32 %v3398, %v3213
      %v3407 = vmax.f32 %v3399, 0.0
      %v3408 = vmax.f32 %v3400, 0.0
      %v3409 = vmax.f32 %v3401, 0.0
      %v3410 = vmax.f32 %v3402, 0.0
      %v3411 = vmax.f32 %v3403, 0.0
      %v3412 = vmax.f32 %v3404, 0.0
      %v3413 = vmax.f32 %v3405, 0.0
      %v3414 = vmax.f32 %v3406, 0.0
      %v3415 = vld [vmem:[%s8] sm:$0xf]
      %v3416 = vld [vmem:[%s8 + $0x4] sm:$0xf]
      %v3417 = vld [vmem:[%s8 + $0x8] sm:$0xf]
      %v3418 = vld [vmem:[%s8 + $0xc] sm:$0xf]
      %v3419 = vld [vmem:[%s8 + $0x10] sm:$0xf]
      %v3420 = vld [vmem:[%s8 + $0x14] sm:$0xf]
      %v3421 = vld [vmem:[%s8 + $0x18] sm:$0xf]
      %v3422 = vld [vmem:[%s8 + $0x1c] sm:$0xf]
      %v3423 = vld [vmem:[%s8 + $0x20] sm:$0xf]
      %v3424 = vld [vmem:[%s8 + $0x24] sm:$0xf]
      %v3425 = vld [vmem:[%s8 + $0x28] sm:$0xf]
      %v3426 = vld [vmem:[%s8 + $0x2c] sm:$0xf]
      %v3427 = vld [vmem:[%s8 + $0x30] sm:$0xf]
      %v3428 = vld [vmem:[%s8 + $0x34] sm:$0xf]
      %v3429 = vld [vmem:[%s8 + $0x38] sm:$0xf]
      %v3430 = vld [vmem:[%s8 + $0x3c] sm:$0xf]
      %v3431 = vld [vmem:[%s8 + $0x40] sm:$0xf]
      %v3432 = vld [vmem:[%s8 + $0x44] sm:$0xf]
      %v3433 = vpack.c.bf16 %v3408, %v3407
      %v3434 = vpack.c.bf16 %v3410, %v3409
      %v3435 = vpack.c.bf16 %v3412, %v3411
      %v3436 = vpack.c.bf16 %v3414, %v3413
      %v3455 = vunpack.c.l.b16 %v3415
      %v3456 = vunpack.c.l.b16 %v3416
      %v3457 = vunpack.c.l.b16 %v3417
      %v3458 = vunpack.c.l.b16 %v3418
      %v3459 = vunpack.c.l.b16 %v3419
      %v3460 = vunpack.c.l.b16 %v3420
      %v3461 = vunpack.c.l.b16 %v3421
      %v3462 = vunpack.c.l.b16 %v3422
      %v3463 = vunpack.c.l.b16 %v3423
      %v3464 = vunpack.c.l.b16 %v3424
      %v3465 = vunpack.c.l.b16 %v3425
      %v3466 = vunpack.c.l.b16 %v3426
      %v3467 = vunpack.c.l.b16 %v3427
      %v3468 = vunpack.c.l.b16 %v3428
      %v3469 = vunpack.c.l.b16 %v3429
      %v3470 = vunpack.c.l.b16 %v3430
      %v3471 = vunpack.c.l.b16 %v3431
      %v3472 = vunpack.c.l.b16 %v3432
      %v3473 = vpack.c.b16 %v3456, %v3455
      %v3474 = vpack.c.b16 %v3458, %v3457
      %v3475 = vpack.c.b16 %v3460, %v3459
      %v3476 = vpack.c.b16 %v3462, %v3461
      %v3477 = vpack.c.b16 %v3464, %v3463
      %v3478 = vpack.c.b16 %v3466, %v3465
      %v3479 = vpack.c.b16 %v3468, %v3467
      %v3480 = vpack.c.b16 %v3470, %v3469
      %v3481 = vpack.c.b16 %v3472, %v3471
      %v3483 = vsel %vm2034, %v3473, 0
      %v3486 = vsel %vm2034, %v3474, 0
      %v3489 = vsel %vm2034, %v3475, 0
      %v3492 = vsel %vm2034, %v3476, 0
      %v3495 = vsel %vm2034, %v3477, 0
      %v3498 = vsel %vm2034, %v3478, 0
      %v3501 = vsel %vm2034, %v3479, 0
      %v3504 = vsel %vm2034, %v3480, 0
      %v3507 = vsel %vm2034, %v3481, 0
      %3509 = vmatprep.subr.bf16.mxu0 0
      %3510 = vmatpush1.bf16.msra.mxu0 %v3433
      %3511 = vmatprep.subr.bf16.mxu0 0
      %3512 = vmatpush1.bf16.msra.mxu0 %v3434
      %3513 = vmatprep.subr.bf16.mxu0 0
      %3514 = vmatpush1.bf16.msra.mxu0 %v3435
      %3515 = vmatprep.subr.bf16.mxu0 0
      %3516 = vmatpush1.bf16.msra.mxu0 %v3436
      %3517 = vmatprep.subr.bf16.mxu0 0
      %3518 = vmatpush1.bf16.msra.mxu0 0
      %3519 = vmatprep.subr.bf16.mxu0 0
      %3520 = vmatpush1.bf16.msra.mxu0 0
      %3521 = vmatprep.subr.bf16.mxu0 0
      %3522 = vmatpush1.bf16.msra.mxu0 0
      %3523 = vmatprep.subr.bf16.mxu0 0
      %3524 = vmatpush1.bf16.msra.mxu0 0
      %3525 = vmatprep.subr.bf16.mxu0 0
      %3526 = vmatpush1.bf16.msra.mxu0 0
      %3527 = vmatprep.subr.bf16.mxu0 0
      %3528 = vmatpush1.bf16.msra.mxu0 0
      %3529 = vmatprep.subr.bf16.mxu0 0
      %3530 = vmatpush1.bf16.msra.mxu0 0
      %3531 = vmatprep.subr.bf16.mxu0 0
      %3532 = vmatpush1.bf16.msra.mxu0 0
      %3533 = vmatprep.subr.bf16.mxu0 0
      %3534 = vmatpush1.bf16.msra.mxu0 0
      %3535 = vmatprep.subr.bf16.mxu0 0
      %3536 = vmatpush1.bf16.msra.mxu0 0
      %3537 = vmatprep.subr.bf16.mxu0 0
      %3538 = vmatpush1.bf16.msra.mxu0 0
      %3539 = vmatprep.subr.bf16.mxu0 0
      %3540 = vmatpush1.bf16.msra.mxu0 0
      %3541 = vmatprep.mubr.bf16.mxu0 0
      %3542 = vmatmul.mubr.bf16.gmra.mrb[0].mxu0 %v3483
      %v3543 = vpop.f32.mrb[0].mxu0
      %v3544 = vadd.f32 0.0, %v3543
      %v3545 = vpop.f32.mrb[0].mxu0
      %v3546 = vpop.f32.mrb[0].mxu0
      %v3547 = vadd.f32 0.0, %v3546
      %v3548 = vpop.f32.mrb[0].mxu0
      %3549 = vmatprep.mubr.bf16.mxu0 0
      %3550 = vmatmul.mubr.bf16.gmra.mrb[0].mxu0 %v3486
      %v3551 = vpop.f32.mrb[0].mxu0
      %v3552 = vadd.f32 0.0, %v3551
      %v3553 = vpop.f32.mrb[0].mxu0
      %v3554 = vpop.f32.mrb[0].mxu0
      %v3555 = vadd.f32 0.0, %v3554
      %v3556 = vpop.f32.mrb[0].mxu0
      %3557 = vmatprep.mubr.bf16.mxu0 0
      %3558 = vmatmul.mubr.bf16.gmra.mrb[0].mxu0 %v3489
      %v3559 = vpop.f32.mrb[0].mxu0
      %v3560 = vadd.f32 0.0, %v3559
      %v3561 = vpop.f32.mrb[0].mxu0
      %v3562 = vpop.f32.mrb[0].mxu0
      %v3563 = vadd.f32 0.0, %v3562
      %v3564 = vpop.f32.mrb[0].mxu0
      %3565 = vmatprep.mubr.bf16.mxu0 0
      %3566 = vmatmul.mubr.bf16.gmra.mrb[0].mxu0 %v3492
      %v3567 = vpop.f32.mrb[0].mxu0
      %v3568 = vadd.f32 0.0, %v3567
      %v3569 = vpop.f32.mrb[0].mxu0
      %v3570 = vpop.f32.mrb[0].mxu0
      %v3571 = vadd.f32 0.0, %v3570
      %v3572 = vpop.f32.mrb[0].mxu0
      %3573 = vmatprep.mubr.bf16.mxu0 0
      %3574 = vmatmul.mubr.bf16.gmra.mrb[0].mxu0 %v3495
      %v3575 = vpop.f32.mrb[0].mxu0
      %v3576 = vadd.f32 0.0, %v3575
      %v3577 = vpop.f32.mrb[0].mxu0
      %v3578 = vpop.f32.mrb[0].mxu0
      %v3579 = vadd.f32 0.0, %v3578
      %v3580 = vpop.f32.mrb[0].mxu0
      %3581 = vmatprep.mubr.bf16.mxu0 0
      %3582 = vmatmul.mubr.bf16.gmra.mrb[0].mxu0 %v3498
      %v3583 = vpop.f32.mrb[0].mxu0
      %v3584 = vadd.f32 0.0, %v3583
      %v3585 = vpop.f32.mrb[0].mxu0
      %v3586 = vpop.f32.mrb[0].mxu0
      %v3587 = vadd.f32 0.0, %v3586
      %v3588 = vpop.f32.mrb[0].mxu0
      %3589 = vmatprep.mubr.bf16.mxu0 0
      %3590 = vmatmul.mubr.bf16.gmra.mrb[0].mxu0 %v3501
      %v3591 = vpop.f32.mrb[0].mxu0
      %v3592 = vadd.f32 0.0, %v3591
      %v3593 = vpop.f32.mrb[0].mxu0
      %v3594 = vpop.f32.mrb[0].mxu0
      %v3595 = vadd.f32 0.0, %v3594
      %v3596 = vpop.f32.mrb[0].mxu0
      %3597 = vmatprep.mubr.bf16.mxu0 0
      %3598 = vmatmul.mubr.bf16.gmra.mrb[0].mxu0 %v3504
      %v3599 = vpop.f32.mrb[0].mxu0
      %v3600 = vadd.f32 0.0, %v3599
      %v3601 = vpop.f32.mrb[0].mxu0
      %v3602 = vpop.f32.mrb[0].mxu0
      %v3603 = vadd.f32 0.0, %v3602
      %v3604 = vpop.f32.mrb[0].mxu0
      %3605 = vmatprep.mubr.bf16.mxu0 0
      %3606 = vmatmul.mubr.bf16.gmra.mrb[0].mxu0 %v3507
      %v3607 = vpop.f32.mrb[0].mxu0
      %v3608 = vadd.f32 0.0, %v3607
      %v3609 = vpop.f32.mrb[0].mxu0
      %v3610 = vpop.f32.mrb[0].mxu0
      %v3611 = vadd.f32 0.0, %v3610
      %v3612 = vpop.f32.mrb[0].mxu0
      %3613 = vdwg.mxu0
      %v3614 = vld [vmem:[%s10] sm:$0xff]
      %v3615 = vld [vmem:[%s10 + $0x8] sm:$0x1]
      %v3618 = vcombine.high %v3614, %v3614
      %v3620 = vunpack.c.l.s4 1966171168
      %v3621 = vunpack.c.0.s8 %v3620
      %v3622 = vlaneseq
      %v3623 = vshrl.u32 %v3622, 7
      %v3624 = vsub.s32 %v3621, %v3623
      %v3625 = vrot.slane %v3614, %v3624
      %v3627 = vunpack.c.l.s4 1966171168
      %v3628 = vunpack.c.0.s8 %v3627
      %v3629 = vlaneseq
      %v3630 = vshrl.u32 %v3629, 7
      %v3631 = vsub.s32 %v3628, %v3630
      %v3632 = vrot.slane %v3618, %v3631
      %v3633 = vcombine.high %v3625, %v3625
      %v3634 = vcombine.high %v3632, %v3632
      %v3636 = vunpack.c.l.s4 1966171168
      %v3637 = vunpack.c.0.s8 %v3636
      %v3638 = vlaneseq
      %v3639 = vshrl.u32 %v3638, 7
      %v3640 = vsub.s32 %v3637, %v3639
      %v3641 = vrot.slane %v3625, %v3640
      %v3643 = vunpack.c.l.s4 1966171168
      %v3644 = vunpack.c.0.s8 %v3643
      %v3645 = vlaneseq
      %v3646 = vshrl.u32 %v3645, 7
      %v3647 = vsub.s32 %v3644, %v3646
      %v3648 = vrot.slane %v3632, %v3647
      %v3650 = vunpack.c.l.s4 1966171168
      %v3651 = vunpack.c.0.s8 %v3650
      %v3652 = vlaneseq
      %v3653 = vshrl.u32 %v3652, 7
      %v3654 = vsub.s32 %v3651, %v3653
      %v3655 = vrot.slane %v3633, %v3654
      %v3657 = vunpack.c.l.s4 1966171168
      %v3658 = vunpack.c.0.s8 %v3657
      %v3659 = vlaneseq
      %v3660 = vshrl.u32 %v3659, 7
      %v3661 = vsub.s32 %v3658, %v3660
      %v3662 = vrot.slane %v3634, %v3661
      %v3663 = vcombine.high %v3641, %v3641
      %v3664 = vcombine.high %v3648, %v3648
      %v3665 = vcombine.high %v3655, %v3655
      %v3666 = vcombine.high %v3662, %v3662
      %v3668 = vunpack.c.l.s4 1966171168
      %v3669 = vunpack.c.0.s8 %v3668
      %v3670 = vlaneseq
      %v3671 = vshrl.u32 %v3670, 7
      %v3672 = vsub.s32 %v3669, %v3671
      %v3673 = vrot.slane %v3615, %v3672
      %v3675 = vunpack.c.l.s4 1966171168
      %v3676 = vunpack.c.0.s8 %v3675
      %v3677 = vlaneseq
      %v3678 = vshrl.u32 %v3677, 7
      %v3679 = vsub.s32 %v3676, %v3678
      %v3680 = vrot.slane %v3673, %v3679
      %v3681 = vlaneseq
      %v3682 = vshrl.u32 %v3681, 7
      %v3683 = vsub.s32 0, %v3682
      %v3684 = vrot.slane %v3641, %v3683
      %v3685 = vlaneseq
      %v3686 = vshrl.u32 %v3685, 7
      %v3687 = vsub.s32 0, %v3686
      %v3688 = vrot.slane %v3655, %v3687
      %v3689 = vlaneseq
      %v3690 = vshrl.u32 %v3689, 7
      %v3691 = vsub.s32 0, %v3690
      %v3692 = vrot.slane %v3663, %v3691
      %v3693 = vlaneseq
      %v3694 = vshrl.u32 %v3693, 7
      %v3695 = vsub.s32 0, %v3694
      %v3696 = vrot.slane %v3665, %v3695
      %v3697 = vlaneseq
      %v3698 = vshrl.u32 %v3697, 7
      %v3699 = vsub.s32 0, %v3698
      %v3700 = vrot.slane %v3648, %v3699
      %v3701 = vlaneseq
      %v3702 = vshrl.u32 %v3701, 7
      %v3703 = vsub.s32 0, %v3702
      %v3704 = vrot.slane %v3662, %v3703
      %v3705 = vlaneseq
      %v3706 = vshrl.u32 %v3705, 7
      %v3707 = vsub.s32 0, %v3706
      %v3708 = vrot.slane %v3664, %v3707
      %v3709 = vlaneseq
      %v3710 = vshrl.u32 %v3709, 7
      %v3711 = vsub.s32 0, %v3710
      %v3712 = vrot.slane %v3666, %v3711
      %v3713 = vlaneseq
      %v3714 = vshrl.u32 %v3713, 7
      %v3715 = vsub.s32 0, %v3714
      %v3716 = vrot.slane %v3680, %v3715
      %v3726 = vmul.f32 %v3544, %v3684
      %v3727 = vmul.f32 %v3547, %v3684
      %v3728 = vmul.f32 %v3552, %v3688
      %v3729 = vmul.f32 %v3555, %v3688
      %v3730 = vmul.f32 %v3560, %v3692
      %v3731 = vmul.f32 %v3563, %v3692
      %v3732 = vmul.f32 %v3568, %v3696
      %v3733 = vmul.f32 %v3571, %v3696
      %v3734 = vmul.f32 %v3576, %v3700
      %v3735 = vmul.f32 %v3579, %v3700
      %v3736 = vmul.f32 %v3584, %v3704
      %v3737 = vmul.f32 %v3587, %v3704
      %v3738 = vmul.f32 %v3592, %v3708
      %v3739 = vmul.f32 %v3595, %v3708
      %v3740 = vmul.f32 %v3600, %v3712
      %v3741 = vmul.f32 %v3603, %v3712
      %v3742 = vmul.f32 %v3608, %v3716
      %v3743 = vmul.f32 %v3611, %v3716
      %v3744 = vsel %vm2034, %v3726, 0.0
      %v3745 = vsel %vm2034, %v3728, 0.0
      %v3746 = vadd.f32 %v3744, %v3745
      %v3747 = vsel %vm2034, %v3730, 0.0
      %v3748 = vadd.f32 %v3746, %v3747
      %v3749 = vsel %vm2034, %v3732, 0.0
      %v3750 = vadd.f32 %v3748, %v3749
      %v3751 = vsel %vm2034, %v3734, 0.0
      %v3752 = vadd.f32 %v3750, %v3751
      %v3753 = vsel %vm2034, %v3736, 0.0
      %v3754 = vadd.f32 %v3752, %v3753
      %v3755 = vsel %vm2034, %v3738, 0.0
      %v3756 = vadd.f32 %v3754, %v3755
      %v3757 = vsel %vm2034, %v3740, 0.0
      %v3758 = vadd.f32 %v3756, %v3757
      %v3759 = vsel %vm2034, %v3742, 0.0
      %v3760 = vadd.f32 %v3758, %v3759
      %v3761 = vsel %vm2034, %v3727, 0.0
      %v3762 = vsel %vm2034, %v3729, 0.0
      %v3763 = vadd.f32 %v3761, %v3762
      %v3764 = vsel %vm2034, %v3731, 0.0
      %v3765 = vadd.f32 %v3763, %v3764
      %v3766 = vsel %vm2034, %v3733, 0.0
      %v3767 = vadd.f32 %v3765, %v3766
      %v3768 = vsel %vm2034, %v3735, 0.0
      %v3769 = vadd.f32 %v3767, %v3768
      %v3770 = vsel %vm2034, %v3737, 0.0
      %v3771 = vadd.f32 %v3769, %v3770
      %v3772 = vsel %vm2034, %v3739, 0.0
      %v3773 = vadd.f32 %v3771, %v3772
      %v3774 = vsel %vm2034, %v3741, 0.0
      %v3775 = vadd.f32 %v3773, %v3774
      %v3776 = vsel %vm2034, %v3743, 0.0
      %v3777 = vadd.f32 %v3775, %v3776
      %v3778 = vpack.c.bf16 %v3777, %v3760
      %v3779 = vld [vmem:[%s11] sm:$0xf]
      %v3780 = vld [vmem:[%s11 + $0x4] sm:$0xf]
      %v3781 = vld [vmem:[%s11 + $0x8] sm:$0xf]
      %v3782 = vld [vmem:[%s11 + $0xc] sm:$0xf]
      %v3783 = vld [vmem:[%s11 + $0x10] sm:$0xf]
      %v3784 = vld [vmem:[%s11 + $0x14] sm:$0xf]
      %v3785 = vld [vmem:[%s11 + $0x18] sm:$0xf]
      %v3786 = vld [vmem:[%s11 + $0x1c] sm:$0xf]
      %v3795 = vunpack.c.l.b16 %v3779
      %v3796 = vunpack.c.l.b16 %v3780
      %v3797 = vunpack.c.l.b16 %v3781
      %v3798 = vunpack.c.l.b16 %v3782
      %v3799 = vunpack.c.l.b16 %v3783
      %v3800 = vunpack.c.l.b16 %v3784
      %v3801 = vunpack.c.l.b16 %v3785
      %v3802 = vunpack.c.l.b16 %v3786
      %v3803 = vpack.c.b16 %v3796, %v3795
      %v3804 = vpack.c.b16 %v3798, %v3797
      %v3805 = vpack.c.b16 %v3800, %v3799
      %v3806 = vpack.c.b16 %v3802, %v3801
      %v3812 = vsel %vm2034, %v3778, 0
      %3814 = vmatprep.subr.bf16.mxu0 0
      %3815 = vmatpush1.bf16.msra.mxu0 %v3803
      %3816 = vmatprep.subr.bf16.mxu0 0
      %3817 = vmatpush1.bf16.msra.mxu0 %v3804
      %3818 = vmatprep.subr.bf16.mxu0 0
      %3819 = vmatpush1.bf16.msra.mxu0 %v3805
      %3820 = vmatprep.subr.bf16.mxu0 0
      %3821 = vmatpush1.bf16.msra.mxu0 %v3806
      %3822 = vmatprep.subr.bf16.mxu0 0
      %3823 = vmatpush1.bf16.msra.mxu0 0
      %3824 = vmatprep.subr.bf16.mxu0 0
      %3825 = vmatpush1.bf16.msra.mxu0 0
      %3826 = vmatprep.subr.bf16.mxu0 0
      %3827 = vmatpush1.bf16.msra.mxu0 0
      %3828 = vmatprep.subr.bf16.mxu0 0
      %3829 = vmatpush1.bf16.msra.mxu0 0
      %3830 = vmatprep.subr.bf16.mxu0 0
      %3831 = vmatpush1.bf16.msra.mxu0 0
      %3832 = vmatprep.subr.bf16.mxu0 0
      %3833 = vmatpush1.bf16.msra.mxu0 0
      %3834 = vmatprep.subr.bf16.mxu0 0
      %3835 = vmatpush1.bf16.msra.mxu0 0
      %3836 = vmatprep.subr.bf16.mxu0 0
      %3837 = vmatpush1.bf16.msra.mxu0 0
      %3838 = vmatprep.subr.bf16.mxu0 0
      %3839 = vmatpush1.bf16.msra.mxu0 0
      %3840 = vmatprep.subr.bf16.mxu0 0
      %3841 = vmatpush1.bf16.msra.mxu0 0
      %3842 = vmatprep.subr.bf16.mxu0 0
      %3843 = vmatpush1.bf16.msra.mxu0 0
      %3844 = vmatprep.subr.bf16.mxu0 0
      %3845 = vmatpush1.bf16.msra.mxu0 0
      %3846 = vmatprep.mubr.bf16.mxu0 0
      %3847 = vmatmul.mubr.bf16.gmra.mrb[0].mxu0 %v3812
      %v3848 = vpop.f32.mrb[0].mxu0
      %v3849 = vadd.f32 0.0, %v3848
      %v3850 = vpop.f32.mrb[0].mxu0
      %v3851 = vpop.f32.mrb[0].mxu0
      %v3852 = vadd.f32 0.0, %v3851
      %v3853 = vpop.f32.mrb[0].mxu0
      %3854 = vdwg.mxu0
      %v3855 = vadd.f32 %v3849, %v3852
      %v3856 = vrot.slane %v3855, 4
      %v3857 = vadd.f32 %v3855, %v3856
      %v3858 = vrot.slane %v3857, 2
      %v3859 = vadd.f32 %v3857, %v3858
      %v3860 = vrot.slane %v3859, 1
      %v3861 = vadd.f32 %v3859, %v3860
      %v3862 = vrcp.pop 16.0
      %v3863 = vmul.f32 %v3861, %v3862
      %v3864 = vsub.f32 %v3849, %v3863
      %v3865 = vsub.f32 %v3852, %v3863
      %v3866 = vmul.f32 %v3864, %v3864
      %v3867 = vmul.f32 %v3865, %v3865
      %v3868 = vadd.f32 %v3866, %v3867
      %v3869 = vrot.slane %v3868, 4
      %v3870 = vadd.f32 %v3868, %v3869
      %v3871 = vrot.slane %v3870, 2
      %v3872 = vadd.f32 %v3870, %v3871
      %v3873 = vrot.slane %v3872, 1
      %v3874 = vadd.f32 %v3872, %v3873
      %v3875 = vmul.f32 %v3874, %v3862
      %v3876 = vadd.f32 %v3875, 1e-05
      %v3877 = vrsqrt.pop %v3876
      %v3878 = vmul.f32 %v3864, %v3877
      %v3879 = vmul.f32 %v3865, %v3877
      %v3880 = vmax.f32 %v3878, 0.0
      %v3881 = vmax.f32 %v3879, 0.0
      %v3882 = vld [vmem:[%s9] sm:$0xf]
      %v3883 = vld [vmem:[%s9 + $0x4] sm:$0xf]
      %v3884 = vld [vmem:[%s9 + $0x8] sm:$0xf]
      %v3885 = vld [vmem:[%s9 + $0xc] sm:$0xf]
      %v3886 = vld [vmem:[%s9 + $0x10] sm:$0xf]
      %v3887 = vld [vmem:[%s9 + $0x14] sm:$0xf]
      %v3888 = vld [vmem:[%s9 + $0x18] sm:$0xf]
      %v3889 = vld [vmem:[%s9 + $0x1c] sm:$0xf]
      %v3890 = vld [vmem:[%s9 + $0x20] sm:$0xf]
      %v3891 = vld [vmem:[%s9 + $0x24] sm:$0xf]
      %v3892 = vld [vmem:[%s9 + $0x28] sm:$0xf]
      %v3893 = vld [vmem:[%s9 + $0x2c] sm:$0xf]
      %v3894 = vld [vmem:[%s9 + $0x30] sm:$0xf]
      %v3895 = vld [vmem:[%s9 + $0x34] sm:$0xf]
      %v3896 = vld [vmem:[%s9 + $0x38] sm:$0xf]
      %v3897 = vld [vmem:[%s9 + $0x3c] sm:$0xf]
      %v3898 = vld [vmem:[%s9 + $0x40] sm:$0xf]
      %v3899 = vld [vmem:[%s9 + $0x44] sm:$0xf]
      %v3900 = vpack.c.bf16 %v3881, %v3880
      %v3919 = vunpack.c.l.b16 %v3882
      %v3920 = vunpack.c.l.b16 %v3883
      %v3921 = vunpack.c.l.b16 %v3884
      %v3922 = vunpack.c.l.b16 %v3885
      %v3923 = vunpack.c.l.b16 %v3886
      %v3924 = vunpack.c.l.b16 %v3887
      %v3925 = vunpack.c.l.b16 %v3888
      %v3926 = vunpack.c.l.b16 %v3889
      %v3927 = vunpack.c.l.b16 %v3890
      %v3928 = vunpack.c.l.b16 %v3891
      %v3929 = vunpack.c.l.b16 %v3892
      %v3930 = vunpack.c.l.b16 %v3893
      %v3931 = vunpack.c.l.b16 %v3894
      %v3932 = vunpack.c.l.b16 %v3895
      %v3933 = vunpack.c.l.b16 %v3896
      %v3934 = vunpack.c.l.b16 %v3897
      %v3935 = vunpack.c.l.b16 %v3898
      %v3936 = vunpack.c.l.b16 %v3899
      %v3937 = vpack.c.b16 %v3920, %v3919
      %v3938 = vpack.c.b16 %v3922, %v3921
      %v3939 = vpack.c.b16 %v3924, %v3923
      %v3940 = vpack.c.b16 %v3926, %v3925
      %v3941 = vpack.c.b16 %v3928, %v3927
      %v3942 = vpack.c.b16 %v3930, %v3929
      %v3943 = vpack.c.b16 %v3932, %v3931
      %v3944 = vpack.c.b16 %v3934, %v3933
      %v3945 = vpack.c.b16 %v3936, %v3935
      %vm3946 = vcmask 130048
      %v3948 = vsel %vm3946, %v3937, 0
      %v3951 = vsel %vm3946, %v3938, 0
      %v3954 = vsel %vm3946, %v3939, 0
      %v3957 = vsel %vm3946, %v3940, 0
      %v3960 = vsel %vm3946, %v3941, 0
      %v3963 = vsel %vm3946, %v3942, 0
      %v3966 = vsel %vm3946, %v3943, 0
      %v3969 = vsel %vm3946, %v3944, 0
      %v3972 = vsel %vm3946, %v3945, 0
      %3974 = vmatprep.subr.bf16.mxu0 0
      %3975 = vmatpush1.bf16.msra.mxu0 %v3900
      %3976 = vmatprep.subr.bf16.mxu0 0
      %3977 = vmatpush1.bf16.msra.mxu0 0
      %3978 = vmatprep.subr.bf16.mxu0 0
      %3979 = vmatpush1.bf16.msra.mxu0 0
      %3980 = vmatprep.subr.bf16.mxu0 0
      %3981 = vmatpush1.bf16.msra.mxu0 0
      %3982 = vmatprep.subr.bf16.mxu0 0
      %3983 = vmatpush1.bf16.msra.mxu0 0
      %3984 = vmatprep.subr.bf16.mxu0 0
      %3985 = vmatpush1.bf16.msra.mxu0 0
      %3986 = vmatprep.subr.bf16.mxu0 0
      %3987 = vmatpush1.bf16.msra.mxu0 0
      %3988 = vmatprep.subr.bf16.mxu0 0
      %3989 = vmatpush1.bf16.msra.mxu0 0
      %3990 = vmatprep.subr.bf16.mxu0 0
      %3991 = vmatpush1.bf16.msra.mxu0 0
      %3992 = vmatprep.subr.bf16.mxu0 0
      %3993 = vmatpush1.bf16.msra.mxu0 0
      %3994 = vmatprep.subr.bf16.mxu0 0
      %3995 = vmatpush1.bf16.msra.mxu0 0
      %3996 = vmatprep.subr.bf16.mxu0 0
      %3997 = vmatpush1.bf16.msra.mxu0 0
      %3998 = vmatprep.subr.bf16.mxu0 0
      %3999 = vmatpush1.bf16.msra.mxu0 0
      %4000 = vmatprep.subr.bf16.mxu0 0
      %4001 = vmatpush1.bf16.msra.mxu0 0
      %4002 = vmatprep.subr.bf16.mxu0 0
      %4003 = vmatpush1.bf16.msra.mxu0 0
      %4004 = vmatprep.subr.bf16.mxu0 0
      %4005 = vmatpush1.bf16.msra.mxu0 0
      %4006 = vmatprep.mubr.bf16.mxu0 0
      %4007 = vmatmul.mubr.bf16.gmra.mrb[0].mxu0 %v3948
      %v4008 = vpop.f32.mrb[0].mxu0
      %v4009 = vadd.f32 0.0, %v4008
      %v4010 = vpop.f32.mrb[0].mxu0
      %v4011 = vpop.f32.mrb[0].mxu0
      %v4012 = vadd.f32 0.0, %v4011
      %v4013 = vpop.f32.mrb[0].mxu0
      %4014 = vmatprep.mubr.bf16.mxu0 0
      %4015 = vmatmul.mubr.bf16.gmra.mrb[0].mxu0 %v3951
      %v4016 = vpop.f32.mrb[0].mxu0
      %v4017 = vadd.f32 0.0, %v4016
      %v4018 = vpop.f32.mrb[0].mxu0
      %v4019 = vpop.f32.mrb[0].mxu0
      %v4020 = vadd.f32 0.0, %v4019
      %v4021 = vpop.f32.mrb[0].mxu0
      %4022 = vmatprep.mubr.bf16.mxu0 0
      %4023 = vmatmul.mubr.bf16.gmra.mrb[0].mxu0 %v3954
      %v4024 = vpop.f32.mrb[0].mxu0
      %v4025 = vadd.f32 0.0, %v4024
      %v4026 = vpop.f32.mrb[0].mxu0
      %v4027 = vpop.f32.mrb[0].mxu0
      %v4028 = vadd.f32 0.0, %v4027
      %v4029 = vpop.f32.mrb[0].mxu0
      %4030 = vmatprep.mubr.bf16.mxu0 0
      %4031 = vmatmul.mubr.bf16.gmra.mrb[0].mxu0 %v3957
      %v4032 = vpop.f32.mrb[0].mxu0
      %v4033 = vadd.f32 0.0, %v4032
      %v4034 = vpop.f32.mrb[0].mxu0
      %v4035 = vpop.f32.mrb[0].mxu0
      %v4036 = vadd.f32 0.0, %v4035
      %v4037 = vpop.f32.mrb[0].mxu0
      %4038 = vmatprep.mubr.bf16.mxu0 0
      %4039 = vmatmul.mubr.bf16.gmra.mrb[0].mxu0 %v3960
      %v4040 = vpop.f32.mrb[0].mxu0
      %v4041 = vadd.f32 0.0, %v4040
      %v4042 = vpop.f32.mrb[0].mxu0
      %v4043 = vpop.f32.mrb[0].mxu0
      %v4044 = vadd.f32 0.0, %v4043
      %v4045 = vpop.f32.mrb[0].mxu0
      %4046 = vmatprep.mubr.bf16.mxu0 0
      %4047 = vmatmul.mubr.bf16.gmra.mrb[0].mxu0 %v3963
      %v4048 = vpop.f32.mrb[0].mxu0
      %v4049 = vadd.f32 0.0, %v4048
      %v4050 = vpop.f32.mrb[0].mxu0
      %v4051 = vpop.f32.mrb[0].mxu0
      %v4052 = vadd.f32 0.0, %v4051
      %v4053 = vpop.f32.mrb[0].mxu0
      %4054 = vmatprep.mubr.bf16.mxu0 0
      %4055 = vmatmul.mubr.bf16.gmra.mrb[0].mxu0 %v3966
      %v4056 = vpop.f32.mrb[0].mxu0
      %v4057 = vadd.f32 0.0, %v4056
      %v4058 = vpop.f32.mrb[0].mxu0
      %v4059 = vpop.f32.mrb[0].mxu0
      %v4060 = vadd.f32 0.0, %v4059
      %v4061 = vpop.f32.mrb[0].mxu0
      %4062 = vmatprep.mubr.bf16.mxu0 0
      %4063 = vmatmul.mubr.bf16.gmra.mrb[0].mxu0 %v3969
      %v4064 = vpop.f32.mrb[0].mxu0
      %v4065 = vadd.f32 0.0, %v4064
      %v4066 = vpop.f32.mrb[0].mxu0
      %v4067 = vpop.f32.mrb[0].mxu0
      %v4068 = vadd.f32 0.0, %v4067
      %v4069 = vpop.f32.mrb[0].mxu0
      %4070 = vmatprep.mubr.bf16.mxu0 0
      %4071 = vmatmul.mubr.bf16.gmra.mrb[0].mxu0 %v3972
      %v4072 = vpop.f32.mrb[0].mxu0
      %v4073 = vadd.f32 0.0, %v4072
      %v4074 = vpop.f32.mrb[0].mxu0
      %v4075 = vpop.f32.mrb[0].mxu0
      %v4076 = vadd.f32 0.0, %v4075
      %v4077 = vpop.f32.mrb[0].mxu0
      %4078 = vdwg.mxu0
      %v4079 = vld [vmem:[%s12] sm:$0xff]
      %v4080 = vld [vmem:[%s12 + $0x8] sm:$0x1]
      %v4083 = vcombine.high %v4079, %v4079
      %v4085 = vunpack.c.l.s4 1966171168
      %v4086 = vunpack.c.0.s8 %v4085
      %v4087 = vlaneseq
      %v4088 = vshrl.u32 %v4087, 7
      %v4089 = vsub.s32 %v4086, %v4088
      %v4090 = vrot.slane %v4079, %v4089
      %v4092 = vunpack.c.l.s4 1966171168
      %v4093 = vunpack.c.0.s8 %v4092
      %v4094 = vlaneseq
      %v4095 = vshrl.u32 %v4094, 7
      %v4096 = vsub.s32 %v4093, %v4095
      %v4097 = vrot.slane %v4083, %v4096
      %v4098 = vcombine.high %v4090, %v4090
      %v4099 = vcombine.high %v4097, %v4097
      %v4101 = vunpack.c.l.s4 1966171168
      %v4102 = vunpack.c.0.s8 %v4101
      %v4103 = vlaneseq
      %v4104 = vshrl.u32 %v4103, 7
      %v4105 = vsub.s32 %v4102, %v4104
      %v4106 = vrot.slane %v4090, %v4105
      %v4108 = vunpack.c.l.s4 1966171168
      %v4109 = vunpack.c.0.s8 %v4108
      %v4110 = vlaneseq
      %v4111 = vshrl.u32 %v4110, 7
      %v4112 = vsub.s32 %v4109, %v4111
      %v4113 = vrot.slane %v4097, %v4112
      %v4115 = vunpack.c.l.s4 1966171168
      %v4116 = vunpack.c.0.s8 %v4115
      %v4117 = vlaneseq
      %v4118 = vshrl.u32 %v4117, 7
      %v4119 = vsub.s32 %v4116, %v4118
      %v4120 = vrot.slane %v4098, %v4119
      %v4122 = vunpack.c.l.s4 1966171168
      %v4123 = vunpack.c.0.s8 %v4122
      %v4124 = vlaneseq
      %v4125 = vshrl.u32 %v4124, 7
      %v4126 = vsub.s32 %v4123, %v4125
      %v4127 = vrot.slane %v4099, %v4126
      %v4128 = vcombine.high %v4106, %v4106
      %v4129 = vcombine.high %v4113, %v4113
      %v4130 = vcombine.high %v4120, %v4120
      %v4131 = vcombine.high %v4127, %v4127
      %v4133 = vunpack.c.l.s4 1966171168
      %v4134 = vunpack.c.0.s8 %v4133
      %v4135 = vlaneseq
      %v4136 = vshrl.u32 %v4135, 7
      %v4137 = vsub.s32 %v4134, %v4136
      %v4138 = vrot.slane %v4080, %v4137
      %v4140 = vunpack.c.l.s4 1966171168
      %v4141 = vunpack.c.0.s8 %v4140
      %v4142 = vlaneseq
      %v4143 = vshrl.u32 %v4142, 7
      %v4144 = vsub.s32 %v4141, %v4143
      %v4145 = vrot.slane %v4138, %v4144
      %v4146 = vlaneseq
      %v4147 = vshrl.u32 %v4146, 7
      %v4148 = vsub.s32 0, %v4147
      %v4149 = vrot.slane %v4106, %v4148
      %v4150 = vlaneseq
      %v4151 = vshrl.u32 %v4150, 7
      %v4152 = vsub.s32 0, %v4151
      %v4153 = vrot.slane %v4120, %v4152
      %v4154 = vlaneseq
      %v4155 = vshrl.u32 %v4154, 7
      %v4156 = vsub.s32 0, %v4155
      %v4157 = vrot.slane %v4128, %v4156
      %v4158 = vlaneseq
      %v4159 = vshrl.u32 %v4158, 7
      %v4160 = vsub.s32 0, %v4159
      %v4161 = vrot.slane %v4130, %v4160
      %v4162 = vlaneseq
      %v4163 = vshrl.u32 %v4162, 7
      %v4164 = vsub.s32 0, %v4163
      %v4165 = vrot.slane %v4113, %v4164
      %v4166 = vlaneseq
      %v4167 = vshrl.u32 %v4166, 7
      %v4168 = vsub.s32 0, %v4167
      %v4169 = vrot.slane %v4127, %v4168
      %v4170 = vlaneseq
      %v4171 = vshrl.u32 %v4170, 7
      %v4172 = vsub.s32 0, %v4171
      %v4173 = vrot.slane %v4129, %v4172
      %v4174 = vlaneseq
      %v4175 = vshrl.u32 %v4174, 7
      %v4176 = vsub.s32 0, %v4175
      %v4177 = vrot.slane %v4131, %v4176
      %v4178 = vlaneseq
      %v4179 = vshrl.u32 %v4178, 7
      %v4180 = vsub.s32 0, %v4179
      %v4181 = vrot.slane %v4145, %v4180
      %v4191 = vmul.f32 %v4009, %v4149
      %v4192 = vmul.f32 %v4012, %v4149
      %v4193 = vmul.f32 %v4017, %v4153
      %v4194 = vmul.f32 %v4020, %v4153
      %v4195 = vmul.f32 %v4025, %v4157
      %v4196 = vmul.f32 %v4028, %v4157
      %v4197 = vmul.f32 %v4033, %v4161
      %v4198 = vmul.f32 %v4036, %v4161
      %v4199 = vmul.f32 %v4041, %v4165
      %v4200 = vmul.f32 %v4044, %v4165
      %v4201 = vmul.f32 %v4049, %v4169
      %v4202 = vmul.f32 %v4052, %v4169
      %v4203 = vmul.f32 %v4057, %v4173
      %v4204 = vmul.f32 %v4060, %v4173
      %v4205 = vmul.f32 %v4065, %v4177
      %v4206 = vmul.f32 %v4068, %v4177
      %v4207 = vmul.f32 %v4073, %v4181
      %v4208 = vmul.f32 %v4076, %v4181
      %v4209 = vadd.f32 %v4191, %v4193
      %v4210 = vadd.f32 %v4209, %v4195
      %v4211 = vadd.f32 %v4210, %v4197
      %v4212 = vadd.f32 %v4211, %v4199
      %v4213 = vadd.f32 %v4212, %v4201
      %v4214 = vadd.f32 %v4213, %v4203
      %v4215 = vadd.f32 %v4214, %v4205
      %v4216 = vadd.f32 %v4215, %v4207
      %v4217 = vadd.f32 %v4192, %v4194
      %v4218 = vadd.f32 %v4217, %v4196
      %v4219 = vadd.f32 %v4218, %v4198
      %v4220 = vadd.f32 %v4219, %v4200
      %v4221 = vadd.f32 %v4220, %v4202
      %v4222 = vadd.f32 %v4221, %v4204
      %v4223 = vadd.f32 %v4222, %v4206
      %v4224 = vadd.f32 %v4223, %v4208
      %v4225 = vpack.c.bf16 %v3579, %v3576
      %v4226 = vld [vmem:[%s14] sm:$0xf]
      %v4227 = vld [vmem:[%s14 + $0x4] sm:$0xf]
      %v4228 = vld [vmem:[%s14 + $0x8] sm:$0xf]
      %v4229 = vld [vmem:[%s14 + $0xc] sm:$0xf]
      %v4230 = vld [vmem:[%s14 + $0x10] sm:$0xf]
      %v4231 = vld [vmem:[%s14 + $0x14] sm:$0xf]
      %v4232 = vld [vmem:[%s14 + $0x18] sm:$0xf]
      %v4233 = vld [vmem:[%s14 + $0x1c] sm:$0xf]
      %v4242 = vunpack.c.l.b16 %v4226
      %v4243 = vunpack.c.l.b16 %v4227
      %v4244 = vunpack.c.l.b16 %v4228
      %v4245 = vunpack.c.l.b16 %v4229
      %v4246 = vunpack.c.l.b16 %v4230
      %v4247 = vunpack.c.l.b16 %v4231
      %v4248 = vunpack.c.l.b16 %v4232
      %v4249 = vunpack.c.l.b16 %v4233
      %v4250 = vpack.c.b16 %v4243, %v4242
      %v4251 = vpack.c.b16 %v4245, %v4244
      %v4252 = vpack.c.b16 %v4247, %v4246
      %v4253 = vpack.c.b16 %v4249, %v4248
      %v4259 = vsel %vm2034, %v4225, 0
      %4261 = vmatprep.subr.bf16.mxu0 0
      %4262 = vmatpush1.bf16.msra.mxu0 %v4250
      %4263 = vmatprep.subr.bf16.mxu0 0
      %4264 = vmatpush1.bf16.msra.mxu0 %v4251
      %4265 = vmatprep.subr.bf16.mxu0 0
      %4266 = vmatpush1.bf16.msra.mxu0 %v4252
      %4267 = vmatprep.subr.bf16.mxu0 0
      %4268 = vmatpush1.bf16.msra.mxu0 %v4253
      %4269 = vmatprep.subr.bf16.mxu0 0
      %4270 = vmatpush1.bf16.msra.mxu0 0
      %4271 = vmatprep.subr.bf16.mxu0 0
      %4272 = vmatpush1.bf16.msra.mxu0 0
      %4273 = vmatprep.subr.bf16.mxu0 0
      %4274 = vmatpush1.bf16.msra.mxu0 0
      %4275 = vmatprep.subr.bf16.mxu0 0
      %4276 = vmatpush1.bf16.msra.mxu0 0
      %4277 = vmatprep.subr.bf16.mxu0 0
      %4278 = vmatpush1.bf16.msra.mxu0 0
      %4279 = vmatprep.subr.bf16.mxu0 0
      %4280 = vmatpush1.bf16.msra.mxu0 0
      %4281 = vmatprep.subr.bf16.mxu0 0
      %4282 = vmatpush1.bf16.msra.mxu0 0
      %4283 = vmatprep.subr.bf16.mxu0 0
      %4284 = vmatpush1.bf16.msra.mxu0 0
      %4285 = vmatprep.subr.bf16.mxu0 0
      %4286 = vmatpush1.bf16.msra.mxu0 0
      %4287 = vmatprep.subr.bf16.mxu0 0
      %4288 = vmatpush1.bf16.msra.mxu0 0
      %4289 = vmatprep.subr.bf16.mxu0 0
      %4290 = vmatpush1.bf16.msra.mxu0 0
      %4291 = vmatprep.subr.bf16.mxu0 0
      %4292 = vmatpush1.bf16.msra.mxu0 0
      %4293 = vmatprep.mubr.bf16.mxu0 0
      %4294 = vmatmul.mubr.bf16.gmra.mrb[0].mxu0 %v4259
      %v4295 = vpop.f32.mrb[0].mxu0
      %v4296 = vadd.f32 0.0, %v4295
      %v4297 = vpop.f32.mrb[0].mxu0
      %v4298 = vpop.f32.mrb[0].mxu0
      %v4299 = vadd.f32 0.0, %v4298
      %v4300 = vpop.f32.mrb[0].mxu0
      %4301 = vdwg.mxu0
      %v4302 = vpack.c.bf16 %v4224, %v4216
      %v4303 = vld [vmem:[%s13] sm:$0xf]
      %v4304 = vld [vmem:[%s13 + $0x4] sm:$0xf]
      %v4305 = vld [vmem:[%s13 + $0x8] sm:$0xf]
      %v4306 = vld [vmem:[%s13 + $0xc] sm:$0xf]
      %v4307 = vld [vmem:[%s13 + $0x10] sm:$0xf]
      %v4308 = vld [vmem:[%s13 + $0x14] sm:$0xf]
      %v4309 = vld [vmem:[%s13 + $0x18] sm:$0xf]
      %v4310 = vld [vmem:[%s13 + $0x1c] sm:$0xf]
      %v4311 = vld [vmem:[%s13 + $0x20] sm:$0xf]
      %v4312 = vld [vmem:[%s13 + $0x24] sm:$0xf]
      %v4313 = vld [vmem:[%s13 + $0x28] sm:$0xf]
      %v4314 = vld [vmem:[%s13 + $0x2c] sm:$0xf]
      %v4315 = vld [vmem:[%s13 + $0x30] sm:$0xf]
      %v4316 = vld [vmem:[%s13 + $0x34] sm:$0xf]
      %v4317 = vld [vmem:[%s13 + $0x38] sm:$0xf]
      %v4318 = vld [vmem:[%s13 + $0x3c] sm:$0xf]
      %v4335 = vunpack.c.l.b16 %v4303
      %v4336 = vunpack.c.l.b16 %v4304
      %v4337 = vunpack.c.l.b16 %v4305
      %v4338 = vunpack.c.l.b16 %v4306
      %v4339 = vunpack.c.l.b16 %v4307
      %v4340 = vunpack.c.l.b16 %v4308
      %v4341 = vunpack.c.l.b16 %v4309
      %v4342 = vunpack.c.l.b16 %v4310
      %v4343 = vunpack.c.l.b16 %v4311
      %v4344 = vunpack.c.l.b16 %v4312
      %v4345 = vunpack.c.l.b16 %v4313
      %v4346 = vunpack.c.l.b16 %v4314
      %v4347 = vunpack.c.l.b16 %v4315
      %v4348 = vunpack.c.l.b16 %v4316
      %v4349 = vunpack.c.l.b16 %v4317
      %v4350 = vunpack.c.l.b16 %v4318
      %v4351 = vpack.c.b16 %v4336, %v4335
      %v4352 = vpack.c.b16 %v4338, %v4337
      %v4353 = vpack.c.b16 %v4340, %v4339
      %v4354 = vpack.c.b16 %v4342, %v4341
      %v4355 = vpack.c.b16 %v4344, %v4343
      %v4356 = vpack.c.b16 %v4346, %v4345
      %v4357 = vpack.c.b16 %v4348, %v4347
      %v4358 = vpack.c.b16 %v4350, %v4349
      %4367 = vmatprep.subr.bf16.mxu0 0
      %4368 = vmatpush1.bf16.msra.mxu0 %v4351
      %4369 = vmatprep.subr.bf16.mxu0 0
      %4370 = vmatpush1.bf16.msra.mxu0 %v4352
      %4371 = vmatprep.subr.bf16.mxu0 0
      %4372 = vmatpush1.bf16.msra.mxu0 %v4353
      %4373 = vmatprep.subr.bf16.mxu0 0
      %4374 = vmatpush1.bf16.msra.mxu0 %v4354
      %4375 = vmatprep.subr.bf16.mxu0 0
      %4376 = vmatpush1.bf16.msra.mxu0 %v4355
      %4377 = vmatprep.subr.bf16.mxu0 0
      %4378 = vmatpush1.bf16.msra.mxu0 %v4356
      %4379 = vmatprep.subr.bf16.mxu0 0
      %4380 = vmatpush1.bf16.msra.mxu0 %v4357
      %4381 = vmatprep.subr.bf16.mxu0 0
      %4382 = vmatpush1.bf16.msra.mxu0 %v4358
      %4383 = vmatprep.subr.bf16.mxu0 0
      %4384 = vmatpush1.bf16.msra.mxu0 0
      %4385 = vmatprep.subr.bf16.mxu0 0
      %4386 = vmatpush1.bf16.msra.mxu0 0
      %4387 = vmatprep.subr.bf16.mxu0 0
      %4388 = vmatpush1.bf16.msra.mxu0 0
      %4389 = vmatprep.subr.bf16.mxu0 0
      %4390 = vmatpush1.bf16.msra.mxu0 0
      %4391 = vmatprep.subr.bf16.mxu0 0
      %4392 = vmatpush1.bf16.msra.mxu0 0
      %4393 = vmatprep.subr.bf16.mxu0 0
      %4394 = vmatpush1.bf16.msra.mxu0 0
      %4395 = vmatprep.subr.bf16.mxu0 0
      %4396 = vmatpush1.bf16.msra.mxu0 0
      %4397 = vmatprep.subr.bf16.mxu0 0
      %4398 = vmatpush1.bf16.msra.mxu0 0
      %4399 = vmatprep.mubr.bf16.mxu0 0
      %4400 = vmatmul.mubr.bf16.gmra.mrb[0].mxu0 %v4302
      %v4401 = vpop.f32.mrb[0].mxu0
      %v4402 = vadd.f32 0.0, %v4401
      %v4403 = vpop.f32.mrb[0].mxu0
      %v4404 = vpop.f32.mrb[0].mxu0
      %v4405 = vadd.f32 0.0, %v4404
      %v4406 = vpop.f32.mrb[0].mxu0
      %4407 = vdwg.mxu0
      %v4408 = vadd.f32 %v4402, %v4405
      %v4409 = vrot.slane %v4408, 4
      %v4410 = vadd.f32 %v4408, %v4409
      %v4411 = vrot.slane %v4410, 2
      %v4412 = vadd.f32 %v4410, %v4411
      %v4413 = vrot.slane %v4412, 1
      %v4414 = vadd.f32 %v4412, %v4413
      %v4415 = vmul.f32 %v4414, %v3862
      %v4416 = vsub.f32 %v4402, %v4415
      %v4417 = vsub.f32 %v4405, %v4415
      %v4418 = vmul.f32 %v4416, %v4416
      %v4419 = vmul.f32 %v4417, %v4417
      %v4420 = vadd.f32 %v4418, %v4419
      %v4421 = vrot.slane %v4420, 4
      %v4422 = vadd.f32 %v4420, %v4421
      %v4423 = vrot.slane %v4422, 2
      %v4424 = vadd.f32 %v4422, %v4423
      %v4425 = vrot.slane %v4424, 1
      %v4426 = vadd.f32 %v4424, %v4425
      %v4427 = vmul.f32 %v4426, %v3862
      %v4428 = vadd.f32 %v4427, 1e-05
      %v4429 = vrsqrt.pop %v4428
      %v4430 = vmul.f32 %v4416, %v4429
      %v4431 = vmul.f32 %v4417, %v4429
      %v4432 = vadd.f32 %v4430, %v4296
      %v4433 = vadd.f32 %v4431, %v4299
      %v4434 = vmax.f32 %v4432, 0.0
      %v4435 = vmax.f32 %v4433, 0.0
      %v4436 = vld [vmem:[%s15] sm:$0xf]
      %v4437 = vld [vmem:[%s15 + $0x4] sm:$0xf]
      %v4438 = vld [vmem:[%s15 + $0x8] sm:$0xf]
      %v4439 = vld [vmem:[%s15 + $0xc] sm:$0xf]
      %v4440 = vld [vmem:[%s15 + $0x10] sm:$0x3]
      %v4441 = vpack.c.bf16 %v4435, %v4434
      %v4447 = vunpack.c.l.b16 %v4436
      %v4448 = vunpack.c.l.b16 %v4437
      %v4449 = vunpack.c.l.b16 %v4438
      %v4450 = vunpack.c.l.b16 %v4439
      %v4451 = vunpack.c.l.b16 %v4440
      %v4452 = vpack.c.b16 %v4448, %v4447
      %v4453 = vpack.c.b16 %v4450, %v4449
      %v4454 = vpack.c.b16 %v4451, %v4451
      %v4456 = vsel %vm3946, %v4452, 0
      %v4459 = vsel %vm3946, %v4453, 0
      %v4462 = vsel %vm3946, %v4454, 0
      %4464 = vmatprep.subr.bf16.mxu0 0
      %4465 = vmatpush1.bf16.msra.mxu0 %v4441
      %4466 = vmatprep.subr.bf16.mxu0 0
      %4467 = vmatpush1.bf16.msra.mxu0 0
      %4468 = vmatprep.subr.bf16.mxu0 0
      %4469 = vmatpush1.bf16.msra.mxu0 0
      %4470 = vmatprep.subr.bf16.mxu0 0
      %4471 = vmatpush1.bf16.msra.mxu0 0
      %4472 = vmatprep.subr.bf16.mxu0 0
      %4473 = vmatpush1.bf16.msra.mxu0 0
      %4474 = vmatprep.subr.bf16.mxu0 0
      %4475 = vmatpush1.bf16.msra.mxu0 0
      %4476 = vmatprep.subr.bf16.mxu0 0
      %4477 = vmatpush1.bf16.msra.mxu0 0
      %4478 = vmatprep.subr.bf16.mxu0 0
      %4479 = vmatpush1.bf16.msra.mxu0 0
      %4480 = vmatprep.subr.bf16.mxu0 0
      %4481 = vmatpush1.bf16.msra.mxu0 0
      %4482 = vmatprep.subr.bf16.mxu0 0
      %4483 = vmatpush1.bf16.msra.mxu0 0
      %4484 = vmatprep.subr.bf16.mxu0 0
      %4485 = vmatpush1.bf16.msra.mxu0 0
      %4486 = vmatprep.subr.bf16.mxu0 0
      %4487 = vmatpush1.bf16.msra.mxu0 0
      %4488 = vmatprep.subr.bf16.mxu0 0
      %4489 = vmatpush1.bf16.msra.mxu0 0
      %4490 = vmatprep.subr.bf16.mxu0 0
      %4491 = vmatpush1.bf16.msra.mxu0 0
      %4492 = vmatprep.subr.bf16.mxu0 0
      %4493 = vmatpush1.bf16.msra.mxu0 0
      %4494 = vmatprep.subr.bf16.mxu0 0
      %4495 = vmatpush1.bf16.msra.mxu0 0
      %4496 = vmatprep.mubr.bf16.mxu0 0
      %4497 = vmatmul.mubr.bf16.gmra.mrb[0].mxu0 %v4456
      %v4498 = vpop.f32.mrb[0].mxu0
      %v4499 = vadd.f32 0.0, %v4498
      %v4500 = vpop.f32.mrb[0].mxu0
      %v4501 = vpop.f32.mrb[0].mxu0
      %v4502 = vadd.f32 0.0, %v4501
      %v4503 = vpop.f32.mrb[0].mxu0
      %4504 = vmatprep.mubr.bf16.mxu0 0
      %4505 = vmatmul.mubr.bf16.gmra.mrb[0].mxu0 %v4459
      %v4506 = vpop.f32.mrb[0].mxu0
      %v4507 = vadd.f32 0.0, %v4506
      %v4508 = vpop.f32.mrb[0].mxu0
      %v4509 = vpop.f32.mrb[0].mxu0
      %v4510 = vadd.f32 0.0, %v4509
      %v4511 = vpop.f32.mrb[0].mxu0
      %4512 = vmatprep.mubr.bf16.mxu0 0
      %4513 = vmatmul.mubr.bf16.gmra.mrb[0].mxu0 %v4462
      %v4514 = vpop.f32.mrb[0].mxu0
      %v4515 = vadd.f32 0.0, %v4514
      %v4516 = vpop.f32.mrb[0].mxu0
      %v4517 = vpop.f32.mrb[0].mxu0
      %v4518 = vpop.f32.mrb[0].mxu0
      %4519 = vdwg.mxu0
      %v4520 = vld [vmem:[%s17] sm:$0xff]
      %v4521 = vld [vmem:[%s17 + $0x8] sm:$0x1]
      %v4522 = vlaneseq
      %v4523 = vshrl.u32 %v4522, 7
      %v4524 = vsub.s32 0, %v4523
      %v4525 = vrot.slane %v4520, %v4524
      %v4526 = vmul.f32 %v4499, %v4525
      %v4527 = vlaneseq
      %v4528 = vshrl.u32 %v4527, 7
      %v4529 = vsub.s32 1, %v4528
      %v4530 = vrot.slane %v4520, %v4529
      %v4531 = vmul.f32 %v4499, %v4530
      %v4533 = vrot.slane %v4531, 4
      %v4535 = vadd.f32 %v4526, %v4533
      %v4536 = vlaneseq
      %v4537 = vshrl.u32 %v4536, 7
      %v4538 = vsub.s32 2, %v4537
      %v4539 = vrot.slane %v4520, %v4538
      %v4540 = vmul.f32 %v4502, %v4539
      %v4541 = vadd.f32 %v4535, %v4540
      %v4542 = vlaneseq
      %v4543 = vshrl.u32 %v4542, 7
      %v4544 = vsub.s32 3, %v4543
      %v4545 = vrot.slane %v4520, %v4544
      %v4546 = vmul.f32 %v4502, %v4545
      %v4548 = vrot.slane %v4546, 4
      %v4550 = vadd.f32 %v4541, %v4548
      %v4551 = vlaneseq
      %v4552 = vshrl.u32 %v4551, 7
      %v4553 = vsub.s32 4, %v4552
      %v4554 = vrot.slane %v4520, %v4553
      %v4555 = vmul.f32 %v4507, %v4554
      %v4556 = vadd.f32 %v4550, %v4555
      %v4557 = vlaneseq
      %v4558 = vshrl.u32 %v4557, 7
      %v4559 = vsub.s32 5, %v4558
      %v4560 = vrot.slane %v4520, %v4559
      %v4561 = vmul.f32 %v4507, %v4560
      %v4563 = vrot.slane %v4561, 4
      %v4565 = vadd.f32 %v4556, %v4563
      %v4566 = vlaneseq
      %v4567 = vshrl.u32 %v4566, 7
      %v4568 = vsub.s32 6, %v4567
      %v4569 = vrot.slane %v4520, %v4568
      %v4570 = vmul.f32 %v4510, %v4569
      %v4571 = vadd.f32 %v4565, %v4570
      %v4572 = vlaneseq
      %v4573 = vshrl.u32 %v4572, 7
      %v4574 = vsub.s32 7, %v4573
      %v4575 = vrot.slane %v4520, %v4574
      %v4576 = vmul.f32 %v4510, %v4575
      %v4578 = vrot.slane %v4576, 4
      %v4580 = vadd.f32 %v4571, %v4578
      %v4581 = vlaneseq
      %v4582 = vshrl.u32 %v4581, 7
      %v4583 = vsub.s32 0, %v4582
      %v4584 = vrot.slane %v4521, %v4583
      %v4585 = vmul.f32 %v4515, %v4584
      %v4586 = vadd.f32 %v4580, %v4585
      %v4587 = vpack.c.bf16 %v4586, %v4586
      %v4588 = vld [vmem:[%s18] sm:$0xff]
      %v4589 = vld [vmem:[%s18 + $0x8] sm:$0xff]
      %v4590 = vld [vmem:[%s18 + $0x10] sm:$0xff]
      %v4591 = vld [vmem:[%s18 + $0x18] sm:$0xff]
      %v4592 = vld [vmem:[%s18 + $0x20] sm:$0xff]
      %v4593 = vld [vmem:[%s18 + $0x28] sm:$0xff]
      %v4594 = vld [vmem:[%s18 + $0x30] sm:$0xff]
      %v4595 = vld [vmem:[%s18 + $0x38] sm:$0xff]
      %v4596 = vld [vmem:[%s18 + $0x40] sm:$0xff]
      %v4597 = vld [vmem:[%s18 + $0x48] sm:$0xff]
      %v4598 = vld [vmem:[%s18 + $0x50] sm:$0xff]
      %v4599 = vld [vmem:[%s18 + $0x58] sm:$0xff]
      %v4600 = vld [vmem:[%s18 + $0x60] sm:$0xff]
      %v4601 = vld [vmem:[%s18 + $0x68] sm:$0xff]
      %v4602 = vld [vmem:[%s18 + $0x70] sm:$0xff]
      %v4603 = vld [vmem:[%s18 + $0x78] sm:$0xff]
      %v4620 = vunpack.c.l.b16 %v4588
      %v4621 = vunpack.c.h.b16 %v4588
      %v4622 = vunpack.c.l.b16 %v4589
      %v4623 = vunpack.c.h.b16 %v4589
      %v4624 = vunpack.c.l.b16 %v4590
      %v4625 = vunpack.c.h.b16 %v4590
      %v4626 = vunpack.c.l.b16 %v4591
      %v4627 = vunpack.c.h.b16 %v4591
      %v4628 = vunpack.c.l.b16 %v4592
      %v4629 = vunpack.c.h.b16 %v4592
      %v4630 = vunpack.c.l.b16 %v4593
      %v4631 = vunpack.c.h.b16 %v4593
      %v4632 = vunpack.c.l.b16 %v4594
      %v4633 = vunpack.c.h.b16 %v4594
      %v4634 = vunpack.c.l.b16 %v4595
      %v4635 = vunpack.c.h.b16 %v4595
      %v4636 = vunpack.c.l.b16 %v4596
      %v4637 = vunpack.c.h.b16 %v4596
      %v4638 = vunpack.c.l.b16 %v4597
      %v4639 = vunpack.c.h.b16 %v4597
      %v4640 = vunpack.c.l.b16 %v4598
      %v4641 = vunpack.c.h.b16 %v4598
      %v4642 = vunpack.c.l.b16 %v4599
      %v4643 = vunpack.c.h.b16 %v4599
      %v4644 = vunpack.c.l.b16 %v4600
      %v4645 = vunpack.c.h.b16 %v4600
      %v4646 = vunpack.c.l.b16 %v4601
      %v4647 = vunpack.c.h.b16 %v4601
      %v4648 = vunpack.c.l.b16 %v4602
      %v4649 = vunpack.c.h.b16 %v4602
      %v4650 = vunpack.c.l.b16 %v4603
      %v4651 = vunpack.c.h.b16 %v4603
      %v4652 = vpack.c.b16 %v4622, %v4620
      %v4653 = vpack.c.b16 %v4623, %v4621
      %v4654 = vpack.c.b16 %v4626, %v4624
      %v4655 = vpack.c.b16 %v4627, %v4625
      %v4656 = vpack.c.b16 %v4630, %v4628
      %v4657 = vpack.c.b16 %v4631, %v4629
      %v4658 = vpack.c.b16 %v4634, %v4632
      %v4659 = vpack.c.b16 %v4635, %v4633
      %v4660 = vpack.c.b16 %v4638, %v4636
      %v4661 = vpack.c.b16 %v4639, %v4637
      %v4662 = vpack.c.b16 %v4642, %v4640
      %v4663 = vpack.c.b16 %v4643, %v4641
      %v4664 = vpack.c.b16 %v4646, %v4644
      %v4665 = vpack.c.b16 %v4647, %v4645
      %v4666 = vpack.c.b16 %v4650, %v4648
      %v4667 = vpack.c.b16 %v4651, %v4649
      %4684 = vmatprep.subr.bf16.mxu0 %v4653
      %4685 = vmatpush1.bf16.msra.mxu0 %v4652
      %4686 = vmatprep.subr.bf16.mxu0 %v4655
      %4687 = vmatpush1.bf16.msra.mxu0 %v4654
      %4688 = vmatprep.subr.bf16.mxu0 %v4657
      %4689 = vmatpush1.bf16.msra.mxu0 %v4656
      %4690 = vmatprep.subr.bf16.mxu0 %v4659
      %4691 = vmatpush1.bf16.msra.mxu0 %v4658
      %4692 = vmatprep.subr.bf16.mxu0 %v4661
      %4693 = vmatpush1.bf16.msra.mxu0 %v4660
      %4694 = vmatprep.subr.bf16.mxu0 %v4663
      %4695 = vmatpush1.bf16.msra.mxu0 %v4662
      %4696 = vmatprep.subr.bf16.mxu0 %v4665
      %4697 = vmatpush1.bf16.msra.mxu0 %v4664
      %4698 = vmatprep.subr.bf16.mxu0 %v4667
      %4699 = vmatpush1.bf16.msra.mxu0 %v4666
      %4700 = vmatprep.subr.bf16.mxu0 0
      %4701 = vmatpush1.bf16.msra.mxu0 0
      %4702 = vmatprep.subr.bf16.mxu0 0
      %4703 = vmatpush1.bf16.msra.mxu0 0
      %4704 = vmatprep.subr.bf16.mxu0 0
      %4705 = vmatpush1.bf16.msra.mxu0 0
      %4706 = vmatprep.subr.bf16.mxu0 0
      %4707 = vmatpush1.bf16.msra.mxu0 0
      %4708 = vmatprep.subr.bf16.mxu0 0
      %4709 = vmatpush1.bf16.msra.mxu0 0
      %4710 = vmatprep.subr.bf16.mxu0 0
      %4711 = vmatpush1.bf16.msra.mxu0 0
      %4712 = vmatprep.subr.bf16.mxu0 0
      %4713 = vmatpush1.bf16.msra.mxu0 0
      %4714 = vmatprep.subr.bf16.mxu0 0
      %4715 = vmatpush1.bf16.msra.mxu0 0
      %4716 = vmatprep.mubr.bf16.mxu0 0
      %4717 = vmatmul.mubr.bf16.gmra.mrb[0].mxu0 %v4587
      %v4718 = vpop.f32.mrb[0].mxu0
      %v4719 = vadd.f32 0.0, %v4718
      %v4720 = vpop.f32.mrb[0].mxu0
      %v4721 = vadd.f32 0.0, %v4720
      %v4722 = vpop.f32.mrb[0].mxu0
      %v4723 = vpop.f32.mrb[0].mxu0
      %4724 = vdwg.mxu0
      %vm4725 = vcmask 1043456
      %v4726 = vsel %vm4725, %v4719, 0.0
      %v4727 = vrot.slane %v4726, 4
      %v4728 = vadd.f32 %v4726, %v4727
      %v4729 = vrot.slane %v4728, 2
      %v4730 = vadd.f32 %v4728, %v4729
      %v4731 = vrot.slane %v4730, 1
      %v4732 = vadd.f32 %v4730, %v4731
      %v4733 = vsel %vm4725, %v4721, 0.0
      %v4734 = vrot.slane %v4733, 4
      %v4735 = vadd.f32 %v4733, %v4734
      %v4736 = vrot.slane %v4735, 2
      %v4737 = vadd.f32 %v4735, %v4736
      %v4738 = vrot.slane %v4737, 1
      %v4739 = vadd.f32 %v4737, %v4738
      %v4740 = vrcp.pop 4.0
      %v4741 = vmul.f32 %v4732, %v4740
      %v4742 = vmul.f32 %v4739, %v4740
      %v4743 = vsub.f32 %v4719, %v4741
      %v4744 = vsub.f32 %v4721, %v4742
      %v4745 = vmul.f32 %v4743, %v4743
      %v4746 = vmul.f32 %v4744, %v4744
      %v4747 = vsel %vm4725, %v4745, 0.0
      %v4748 = vrot.slane %v4747, 4
      %v4749 = vadd.f32 %v4747, %v4748
      %v4750 = vrot.slane %v4749, 2
      %v4751 = vadd.f32 %v4749, %v4750
      %v4752 = vrot.slane %v4751, 1
      %v4753 = vadd.f32 %v4751, %v4752
      %v4754 = vsel %vm4725, %v4746, 0.0
      %v4755 = vrot.slane %v4754, 4
      %v4756 = vadd.f32 %v4754, %v4755
      %v4757 = vrot.slane %v4756, 2
      %v4758 = vadd.f32 %v4756, %v4757
      %v4759 = vrot.slane %v4758, 1
      %v4760 = vadd.f32 %v4758, %v4759
      %v4761 = vmul.f32 %v4753, %v4740
      %v4762 = vmul.f32 %v4760, %v4740
      %v4763 = vadd.f32 %v4761, 1e-05
      %v4764 = vadd.f32 %v4762, 1e-05
      %v4765 = vrsqrt.pop %v4763
      %v4766 = vrsqrt.pop %v4764
      %v4767 = vmul.f32 %v4743, %v4765
      %v4768 = vmul.f32 %v4744, %v4766
      %v4769 = vmax.f32 %v4767, 0.0
      %v4770 = vmax.f32 %v4768, 0.0
      %v4771 = vld [vmem:[%s16] sm:$0xf]
      %v4772 = vld [vmem:[%s16 + $0x4] sm:$0xf]
      %v4773 = vld [vmem:[%s16 + $0x8] sm:$0xf]
      %v4774 = vld [vmem:[%s16 + $0xc] sm:$0xf]
      %v4775 = vld [vmem:[%s16 + $0x10] sm:$0x3]
      %v4776 = vpack.c.bf16 %v4769, %v4769
      %v4777 = vpack.c.bf16 %v4770, %v4770
      %v4783 = vunpack.c.l.b16 %v4771
      %v4784 = vunpack.c.l.b16 %v4772
      %v4785 = vunpack.c.l.b16 %v4773
      %v4786 = vunpack.c.l.b16 %v4774
      %v4787 = vunpack.c.l.b16 %v4775
      %v4788 = vpack.c.b16 %v4784, %v4783
      %v4789 = vpack.c.b16 %v4786, %v4785
      %v4790 = vpack.c.b16 %v4787, %v4787
      %vm4791 = vcmask 31744
      %v4793 = vsel %vm4791, %v4788, 0
      %v4796 = vsel %vm4791, %v4789, 0
      %v4799 = vsel %vm4791, %v4790, 0
      %vm4801 = vcmask 1041408
      %v4803 = vsel %vm4801, %v4776, 0
      %v4806 = vsel %vm4801, %v4777, 0
      %4808 = vmatprep.subr.bf16.mxu0 %v4806
      %4809 = vmatpush1.bf16.msra.mxu0 %v4803
      %4810 = vmatprep.subr.bf16.mxu0 0
      %4811 = vmatpush1.bf16.msra.mxu0 0
      %4812 = vmatprep.subr.bf16.mxu0 0
      %4813 = vmatpush1.bf16.msra.mxu0 0
      %4814 = vmatprep.subr.bf16.mxu0 0
      %4815 = vmatpush1.bf16.msra.mxu0 0
      %4816 = vmatprep.subr.bf16.mxu0 0
      %4817 = vmatpush1.bf16.msra.mxu0 0
      %4818 = vmatprep.subr.bf16.mxu0 0
      %4819 = vmatpush1.bf16.msra.mxu0 0
      %4820 = vmatprep.subr.bf16.mxu0 0
      %4821 = vmatpush1.bf16.msra.mxu0 0
      %4822 = vmatprep.subr.bf16.mxu0 0
      %4823 = vmatpush1.bf16.msra.mxu0 0
      %4824 = vmatprep.subr.bf16.mxu0 0
      %4825 = vmatpush1.bf16.msra.mxu0 0
      %4826 = vmatprep.subr.bf16.mxu0 0
      %4827 = vmatpush1.bf16.msra.mxu0 0
      %4828 = vmatprep.subr.bf16.mxu0 0
      %4829 = vmatpush1.bf16.msra.mxu0 0
      %4830 = vmatprep.subr.bf16.mxu0 0
      %4831 = vmatpush1.bf16.msra.mxu0 0
      %4832 = vmatprep.subr.bf16.mxu0 0
      %4833 = vmatpush1.bf16.msra.mxu0 0
      %4834 = vmatprep.subr.bf16.mxu0 0
      %4835 = vmatpush1.bf16.msra.mxu0 0
      %4836 = vmatprep.subr.bf16.mxu0 0
      %4837 = vmatpush1.bf16.msra.mxu0 0
      %4838 = vmatprep.subr.bf16.mxu0 0
      %4839 = vmatpush1.bf16.msra.mxu0 0
      %4840 = vmatprep.mubr.bf16.mxu0 0
      %4841 = vmatmul.mubr.bf16.gmra.mrb[0].mxu0 %v4793
      %v4842 = vpop.f32.mrb[0].mxu0
      %v4843 = vadd.f32 0.0, %v4842
      %v4844 = vpop.f32.mrb[0].mxu0
      %v4845 = vadd.f32 0.0, %v4844
      %v4846 = vpop.f32.mrb[0].mxu0
      %v4847 = vadd.f32 0.0, %v4846
      %v4848 = vpop.f32.mrb[0].mxu0
      %v4849 = vadd.f32 0.0, %v4848
      %4850 = vmatprep.mubr.bf16.mxu0 0
      %4851 = vmatmul.mubr.bf16.gmra.mrb[0].mxu0 %v4796
      %v4852 = vpop.f32.mrb[0].mxu0
      %v4853 = vadd.f32 0.0, %v4852
      %v4854 = vpop.f32.mrb[0].mxu0
      %v4855 = vadd.f32 0.0, %v4854
      %v4856 = vpop.f32.mrb[0].mxu0
      %v4857 = vadd.f32 0.0, %v4856
      %v4858 = vpop.f32.mrb[0].mxu0
      %v4859 = vadd.f32 0.0, %v4858
      %4860 = vmatprep.mubr.bf16.mxu0 0
      %4861 = vmatmul.mubr.bf16.gmra.mrb[0].mxu0 %v4799
      %v4862 = vpop.f32.mrb[0].mxu0
      %v4863 = vadd.f32 0.0, %v4862
      %v4864 = vpop.f32.mrb[0].mxu0
      %v4865 = vadd.f32 0.0, %v4864
      %v4866 = vpop.f32.mrb[0].mxu0
      %v4867 = vpop.f32.mrb[0].mxu0
      %4868 = vdwg.mxu0
      %v4869 = vld [vmem:[%s19] sm:$0xff]
      %v4870 = vld [vmem:[%s19 + $0x8] sm:$0xff]
      %v4871 = vld [vmem:[%s19 + $0x10] sm:$0x1]
      %v4872 = vld [vmem:[%s19 + $0x18] sm:$0x1]
      %v4873 = vlaneseq
      %v4874 = vshrl.u32 %v4873, 7
      %v4875 = vsub.s32 0, %v4874
      %v4876 = vrot.slane %v4869, %v4875
      %v4877 = vlaneseq
      %v4878 = vshrl.u32 %v4877, 7
      %v4879 = vsub.s32 0, %v4878
      %v4880 = vrot.slane %v4870, %v4879
      %v4881 = vmul.f32 %v4843, %v4876
      %v4882 = vmul.f32 %v4845, %v4880
      %v4883 = vlaneseq
      %v4884 = vshrl.u32 %v4883, 7
      %v4885 = vsub.s32 1, %v4884
      %v4886 = vrot.slane %v4869, %v4885
      %v4887 = vlaneseq
      %v4888 = vshrl.u32 %v4887, 7
      %v4889 = vsub.s32 1, %v4888
      %v4890 = vrot.slane %v4870, %v4889
      %v4891 = vmul.f32 %v4843, %v4886
      %v4892 = vmul.f32 %v4845, %v4890
      %v4895 = vrot.slane %v4891, 4
      %v4896 = vrot.slane %v4892, 4
      %v4899 = vadd.f32 %v4881, %v4895
      %v4900 = vadd.f32 %v4882, %v4896
      %v4901 = vlaneseq
      %v4902 = vshrl.u32 %v4901, 7
      %v4903 = vsub.s32 2, %v4902
      %v4904 = vrot.slane %v4869, %v4903
      %v4905 = vlaneseq
      %v4906 = vshrl.u32 %v4905, 7
      %v4907 = vsub.s32 2, %v4906
      %v4908 = vrot.slane %v4870, %v4907
      %v4909 = vmul.f32 %v4847, %v4904
      %v4910 = vmul.f32 %v4849, %v4908
      %v4911 = vadd.f32 %v4899, %v4909
      %v4912 = vadd.f32 %v4900, %v4910
      %v4913 = vlaneseq
      %v4914 = vshrl.u32 %v4913, 7
      %v4915 = vsub.s32 3, %v4914
      %v4916 = vrot.slane %v4869, %v4915
      %v4917 = vlaneseq
      %v4918 = vshrl.u32 %v4917, 7
      %v4919 = vsub.s32 3, %v4918
      %v4920 = vrot.slane %v4870, %v4919
      %v4921 = vmul.f32 %v4847, %v4916
      %v4922 = vmul.f32 %v4849, %v4920
      %v4925 = vrot.slane %v4921, 4
      %v4926 = vrot.slane %v4922, 4
      %v4929 = vadd.f32 %v4911, %v4925
      %v4930 = vadd.f32 %v4912, %v4926
      %v4931 = vlaneseq
      %v4932 = vshrl.u32 %v4931, 7
      %v4933 = vsub.s32 4, %v4932
      %v4934 = vrot.slane %v4869, %v4933
      %v4935 = vlaneseq
      %v4936 = vshrl.u32 %v4935, 7
      %v4937 = vsub.s32 4, %v4936
      %v4938 = vrot.slane %v4870, %v4937
      %v4939 = vmul.f32 %v4853, %v4934
      %v4940 = vmul.f32 %v4855, %v4938
      %v4941 = vadd.f32 %v4929, %v4939
      %v4942 = vadd.f32 %v4930, %v4940
      %v4943 = vlaneseq
      %v4944 = vshrl.u32 %v4943, 7
      %v4945 = vsub.s32 5, %v4944
      %v4946 = vrot.slane %v4869, %v4945
      %v4947 = vlaneseq
      %v4948 = vshrl.u32 %v4947, 7
      %v4949 = vsub.s32 5, %v4948
      %v4950 = vrot.slane %v4870, %v4949
      %v4951 = vmul.f32 %v4853, %v4946
      %v4952 = vmul.f32 %v4855, %v4950
      %v4955 = vrot.slane %v4951, 4
      %v4956 = vrot.slane %v4952, 4
      %v4959 = vadd.f32 %v4941, %v4955
      %v4960 = vadd.f32 %v4942, %v4956
      %v4961 = vlaneseq
      %v4962 = vshrl.u32 %v4961, 7
      %v4963 = vsub.s32 6, %v4962
      %v4964 = vrot.slane %v4869, %v4963
      %v4965 = vlaneseq
      %v4966 = vshrl.u32 %v4965, 7
      %v4967 = vsub.s32 6, %v4966
      %v4968 = vrot.slane %v4870, %v4967
      %v4969 = vmul.f32 %v4857, %v4964
      %v4970 = vmul.f32 %v4859, %v4968
      %v4971 = vadd.f32 %v4959, %v4969
      %v4972 = vadd.f32 %v4960, %v4970
      %v4973 = vlaneseq
      %v4974 = vshrl.u32 %v4973, 7
      %v4975 = vsub.s32 7, %v4974
      %v4976 = vrot.slane %v4869, %v4975
      %v4977 = vlaneseq
      %v4978 = vshrl.u32 %v4977, 7
      %v4979 = vsub.s32 7, %v4978
      %v4980 = vrot.slane %v4870, %v4979
      %v4981 = vmul.f32 %v4857, %v4976
      %v4982 = vmul.f32 %v4859, %v4980
      %v4985 = vrot.slane %v4981, 4
      %v4986 = vrot.slane %v4982, 4
      %v4989 = vadd.f32 %v4971, %v4985
      %v4990 = vadd.f32 %v4972, %v4986
      %v4991 = vlaneseq
      %v4992 = vshrl.u32 %v4991, 7
      %v4993 = vsub.s32 0, %v4992
      %v4994 = vrot.slane %v4871, %v4993
      %v4995 = vlaneseq
      %v4996 = vshrl.u32 %v4995, 7
      %v4997 = vsub.s32 0, %v4996
      %v4998 = vrot.slane %v4872, %v4997
      %v4999 = vmul.f32 %v4863, %v4994
      %v5000 = vmul.f32 %v4865, %v4998
      %v5001 = vadd.f32 %v4989, %v4999
      %v5002 = vadd.f32 %v4990, %v5000
      %v5003 = vpack.c.bf16 %v4507, %v4507
      %v5004 = vld [vmem:[%s21] sm:$0xff]
      %v5005 = vld [vmem:[%s21 + $0x8] sm:$0xff]
      %v5006 = vld [vmem:[%s21 + $0x10] sm:$0xff]
      %v5007 = vld [vmem:[%s21 + $0x18] sm:$0xff]
      %v5008 = vld [vmem:[%s21 + $0x20] sm:$0xff]
      %v5009 = vld [vmem:[%s21 + $0x28] sm:$0xff]
      %v5010 = vld [vmem:[%s21 + $0x30] sm:$0xff]
      %v5011 = vld [vmem:[%s21 + $0x38] sm:$0xff]
      %v5012 = vld [vmem:[%s21 + $0x40] sm:$0xff]
      %v5013 = vld [vmem:[%s21 + $0x48] sm:$0xff]
      %v5014 = vld [vmem:[%s21 + $0x50] sm:$0xff]
      %v5015 = vld [vmem:[%s21 + $0x58] sm:$0xff]
      %v5016 = vld [vmem:[%s21 + $0x60] sm:$0xff]
      %v5017 = vld [vmem:[%s21 + $0x68] sm:$0xff]
      %v5018 = vld [vmem:[%s21 + $0x70] sm:$0xff]
      %v5019 = vld [vmem:[%s21 + $0x78] sm:$0xff]
      %v5036 = vunpack.c.l.b16 %v5004
      %v5037 = vunpack.c.h.b16 %v5004
      %v5038 = vunpack.c.l.b16 %v5005
      %v5039 = vunpack.c.h.b16 %v5005
      %v5040 = vunpack.c.l.b16 %v5006
      %v5041 = vunpack.c.h.b16 %v5006
      %v5042 = vunpack.c.l.b16 %v5007
      %v5043 = vunpack.c.h.b16 %v5007
      %v5044 = vunpack.c.l.b16 %v5008
      %v5045 = vunpack.c.h.b16 %v5008
      %v5046 = vunpack.c.l.b16 %v5009
      %v5047 = vunpack.c.h.b16 %v5009
      %v5048 = vunpack.c.l.b16 %v5010
      %v5049 = vunpack.c.h.b16 %v5010
      %v5050 = vunpack.c.l.b16 %v5011
      %v5051 = vunpack.c.h.b16 %v5011
      %v5052 = vunpack.c.l.b16 %v5012
      %v5053 = vunpack.c.h.b16 %v5012
      %v5054 = vunpack.c.l.b16 %v5013
      %v5055 = vunpack.c.h.b16 %v5013
      %v5056 = vunpack.c.l.b16 %v5014
      %v5057 = vunpack.c.h.b16 %v5014
      %v5058 = vunpack.c.l.b16 %v5015
      %v5059 = vunpack.c.h.b16 %v5015
      %v5060 = vunpack.c.l.b16 %v5016
      %v5061 = vunpack.c.h.b16 %v5016
      %v5062 = vunpack.c.l.b16 %v5017
      %v5063 = vunpack.c.h.b16 %v5017
      %v5064 = vunpack.c.l.b16 %v5018
      %v5065 = vunpack.c.h.b16 %v5018
      %v5066 = vunpack.c.l.b16 %v5019
      %v5067 = vunpack.c.h.b16 %v5019
      %v5068 = vpack.c.b16 %v5038, %v5036
      %v5069 = vpack.c.b16 %v5039, %v5037
      %v5070 = vpack.c.b16 %v5042, %v5040
      %v5071 = vpack.c.b16 %v5043, %v5041
      %v5072 = vpack.c.b16 %v5046, %v5044
      %v5073 = vpack.c.b16 %v5047, %v5045
      %v5074 = vpack.c.b16 %v5050, %v5048
      %v5075 = vpack.c.b16 %v5051, %v5049
      %v5076 = vpack.c.b16 %v5054, %v5052
      %v5077 = vpack.c.b16 %v5055, %v5053
      %v5078 = vpack.c.b16 %v5058, %v5056
      %v5079 = vpack.c.b16 %v5059, %v5057
      %v5080 = vpack.c.b16 %v5062, %v5060
      %v5081 = vpack.c.b16 %v5063, %v5061
      %v5082 = vpack.c.b16 %v5066, %v5064
      %v5083 = vpack.c.b16 %v5067, %v5065
      %5100 = vmatprep.subr.bf16.mxu0 %v5069
      %5101 = vmatpush1.bf16.msra.mxu0 %v5068
      %5102 = vmatprep.subr.bf16.mxu0 %v5071
      %5103 = vmatpush1.bf16.msra.mxu0 %v5070
      %5104 = vmatprep.subr.bf16.mxu0 %v5073
      %5105 = vmatpush1.bf16.msra.mxu0 %v5072
      %5106 = vmatprep.subr.bf16.mxu0 %v5075
      %5107 = vmatpush1.bf16.msra.mxu0 %v5074
      %5108 = vmatprep.subr.bf16.mxu0 %v5077
      %5109 = vmatpush1.bf16.msra.mxu0 %v5076
      %5110 = vmatprep.subr.bf16.mxu0 %v5079
      %5111 = vmatpush1.bf16.msra.mxu0 %v5078
      %5112 = vmatprep.subr.bf16.mxu0 %v5081
      %5113 = vmatpush1.bf16.msra.mxu0 %v5080
      %5114 = vmatprep.subr.bf16.mxu0 %v5083
      %5115 = vmatpush1.bf16.msra.mxu0 %v5082
      %5116 = vmatprep.subr.bf16.mxu0 0
      %5117 = vmatpush1.bf16.msra.mxu0 0
      %5118 = vmatprep.subr.bf16.mxu0 0
      %5119 = vmatpush1.bf16.msra.mxu0 0
      %5120 = vmatprep.subr.bf16.mxu0 0
      %5121 = vmatpush1.bf16.msra.mxu0 0
      %5122 = vmatprep.subr.bf16.mxu0 0
      %5123 = vmatpush1.bf16.msra.mxu0 0
      %5124 = vmatprep.subr.bf16.mxu0 0
      %5125 = vmatpush1.bf16.msra.mxu0 0
      %5126 = vmatprep.subr.bf16.mxu0 0
      %5127 = vmatpush1.bf16.msra.mxu0 0
      %5128 = vmatprep.subr.bf16.mxu0 0
      %5129 = vmatpush1.bf16.msra.mxu0 0
      %5130 = vmatprep.subr.bf16.mxu0 0
      %5131 = vmatpush1.bf16.msra.mxu0 0
      %5132 = vmatprep.mubr.bf16.mxu0 0
      %5133 = vmatmul.mubr.bf16.gmra.mrb[0].mxu0 %v5003
      %v5134 = vpop.f32.mrb[0].mxu0
      %v5135 = vadd.f32 0.0, %v5134
      %v5136 = vpop.f32.mrb[0].mxu0
      %v5137 = vadd.f32 0.0, %v5136
      %v5138 = vpop.f32.mrb[0].mxu0
      %v5139 = vpop.f32.mrb[0].mxu0
      %5140 = vdwg.mxu0
      %v5141 = vpack.c.bf16 %v5001, %v5001
      %v5142 = vpack.c.bf16 %v5002, %v5002
      %v5143 = vld [vmem:[%s20] sm:$0xff]
      %v5144 = vld [vmem:[%s20 + $0x8] sm:$0xff]
      %v5145 = vld [vmem:[%s20 + $0x10] sm:$0xff]
      %v5146 = vld [vmem:[%s20 + $0x18] sm:$0xff]
      %v5147 = vld [vmem:[%s20 + $0x20] sm:$0xff]
      %v5148 = vld [vmem:[%s20 + $0x28] sm:$0xff]
      %v5149 = vld [vmem:[%s20 + $0x30] sm:$0xff]
      %v5150 = vld [vmem:[%s20 + $0x38] sm:$0xff]
      %v5151 = vld [vmem:[%s20 + $0x40] sm:$0xff]
      %v5152 = vld [vmem:[%s20 + $0x48] sm:$0xff]
      %v5153 = vld [vmem:[%s20 + $0x50] sm:$0xff]
      %v5154 = vld [vmem:[%s20 + $0x58] sm:$0xff]
      %v5155 = vld [vmem:[%s20 + $0x60] sm:$0xff]
      %v5156 = vld [vmem:[%s20 + $0x68] sm:$0xff]
      %v5157 = vld [vmem:[%s20 + $0x70] sm:$0xff]
      %v5158 = vld [vmem:[%s20 + $0x78] sm:$0xff]
      %v5159 = vld [vmem:[%s20 + $0x80] sm:$0xff]
      %v5160 = vld [vmem:[%s20 + $0x88] sm:$0xff]
      %v5161 = vld [vmem:[%s20 + $0x90] sm:$0xff]
      %v5162 = vld [vmem:[%s20 + $0x98] sm:$0xff]
      %v5163 = vld [vmem:[%s20 + $0xa0] sm:$0xff]
      %v5164 = vld [vmem:[%s20 + $0xa8] sm:$0xff]
      %v5165 = vld [vmem:[%s20 + $0xb0] sm:$0xff]
      %v5166 = vld [vmem:[%s20 + $0xb8] sm:$0xff]
      %v5167 = vld [vmem:[%s20 + $0xc0] sm:$0xff]
      %v5168 = vld [vmem:[%s20 + $0xc8] sm:$0xff]
      %v5169 = vld [vmem:[%s20 + $0xd0] sm:$0xff]
      %v5170 = vld [vmem:[%s20 + $0xd8] sm:$0xff]
      %v5171 = vld [vmem:[%s20 + $0xe0] sm:$0xff]
      %v5172 = vld [vmem:[%s20 + $0xe8] sm:$0xff]
      %v5173 = vld [vmem:[%s20 + $0xf0] sm:$0xff]
      %v5174 = vld [vmem:[%s20 + $0xf8] sm:$0xff]
      %v5207 = vunpack.c.l.b16 %v5143
      %v5208 = vunpack.c.h.b16 %v5143
      %v5209 = vunpack.c.l.b16 %v5144
      %v5210 = vunpack.c.h.b16 %v5144
      %v5211 = vunpack.c.l.b16 %v5145
      %v5212 = vunpack.c.h.b16 %v5145
      %v5213 = vunpack.c.l.b16 %v5146
      %v5214 = vunpack.c.h.b16 %v5146
      %v5215 = vunpack.c.l.b16 %v5147
      %v5216 = vunpack.c.h.b16 %v5147
      %v5217 = vunpack.c.l.b16 %v5148
      %v5218 = vunpack.c.h.b16 %v5148
      %v5219 = vunpack.c.l.b16 %v5149
      %v5220 = vunpack.c.h.b16 %v5149
      %v5221 = vunpack.c.l.b16 %v5150
      %v5222 = vunpack.c.h.b16 %v5150
      %v5223 = vunpack.c.l.b16 %v5151
      %v5224 = vunpack.c.h.b16 %v5151
      %v5225 = vunpack.c.l.b16 %v5152
      %v5226 = vunpack.c.h.b16 %v5152
      %v5227 = vunpack.c.l.b16 %v5153
      %v5228 = vunpack.c.h.b16 %v5153
      %v5229 = vunpack.c.l.b16 %v5154
      %v5230 = vunpack.c.h.b16 %v5154
      %v5231 = vunpack.c.l.b16 %v5155
      %v5232 = vunpack.c.h.b16 %v5155
      %v5233 = vunpack.c.l.b16 %v5156
      %v5234 = vunpack.c.h.b16 %v5156
      %v5235 = vunpack.c.l.b16 %v5157
      %v5236 = vunpack.c.h.b16 %v5157
      %v5237 = vunpack.c.l.b16 %v5158
      %v5238 = vunpack.c.h.b16 %v5158
      %v5239 = vunpack.c.l.b16 %v5159
      %v5240 = vunpack.c.h.b16 %v5159
      %v5241 = vunpack.c.l.b16 %v5160
      %v5242 = vunpack.c.h.b16 %v5160
      %v5243 = vunpack.c.l.b16 %v5161
      %v5244 = vunpack.c.h.b16 %v5161
      %v5245 = vunpack.c.l.b16 %v5162
      %v5246 = vunpack.c.h.b16 %v5162
      %v5247 = vunpack.c.l.b16 %v5163
      %v5248 = vunpack.c.h.b16 %v5163
      %v5249 = vunpack.c.l.b16 %v5164
      %v5250 = vunpack.c.h.b16 %v5164
      %v5251 = vunpack.c.l.b16 %v5165
      %v5252 = vunpack.c.h.b16 %v5165
      %v5253 = vunpack.c.l.b16 %v5166
      %v5254 = vunpack.c.h.b16 %v5166
      %v5255 = vunpack.c.l.b16 %v5167
      %v5256 = vunpack.c.h.b16 %v5167
      %v5257 = vunpack.c.l.b16 %v5168
      %v5258 = vunpack.c.h.b16 %v5168
      %v5259 = vunpack.c.l.b16 %v5169
      %v5260 = vunpack.c.h.b16 %v5169
      %v5261 = vunpack.c.l.b16 %v5170
      %v5262 = vunpack.c.h.b16 %v5170
      %v5263 = vunpack.c.l.b16 %v5171
      %v5264 = vunpack.c.h.b16 %v5171
      %v5265 = vunpack.c.l.b16 %v5172
      %v5266 = vunpack.c.h.b16 %v5172
      %v5267 = vunpack.c.l.b16 %v5173
      %v5268 = vunpack.c.h.b16 %v5173
      %v5269 = vunpack.c.l.b16 %v5174
      %v5270 = vunpack.c.h.b16 %v5174
      %v5271 = vpack.c.b16 %v5209, %v5207
      %v5272 = vpack.c.b16 %v5210, %v5208
      %v5273 = vpack.c.b16 %v5213, %v5211
      %v5274 = vpack.c.b16 %v5214, %v5212
      %v5275 = vpack.c.b16 %v5217, %v5215
      %v5276 = vpack.c.b16 %v5218, %v5216
      %v5277 = vpack.c.b16 %v5221, %v5219
      %v5278 = vpack.c.b16 %v5222, %v5220
      %v5279 = vpack.c.b16 %v5225, %v5223
      %v5280 = vpack.c.b16 %v5226, %v5224
      %v5281 = vpack.c.b16 %v5229, %v5227
      %v5282 = vpack.c.b16 %v5230, %v5228
      %v5283 = vpack.c.b16 %v5233, %v5231
      %v5284 = vpack.c.b16 %v5234, %v5232
      %v5285 = vpack.c.b16 %v5237, %v5235
      %v5286 = vpack.c.b16 %v5238, %v5236
      %v5287 = vpack.c.b16 %v5241, %v5239
      %v5288 = vpack.c.b16 %v5242, %v5240
      %v5289 = vpack.c.b16 %v5245, %v5243
      %v5290 = vpack.c.b16 %v5246, %v5244
      %v5291 = vpack.c.b16 %v5249, %v5247
      %v5292 = vpack.c.b16 %v5250, %v5248
      %v5293 = vpack.c.b16 %v5253, %v5251
      %v5294 = vpack.c.b16 %v5254, %v5252
      %v5295 = vpack.c.b16 %v5257, %v5255
      %v5296 = vpack.c.b16 %v5258, %v5256
      %v5297 = vpack.c.b16 %v5261, %v5259
      %v5298 = vpack.c.b16 %v5262, %v5260
      %v5299 = vpack.c.b16 %v5265, %v5263
      %v5300 = vpack.c.b16 %v5266, %v5264
      %v5301 = vpack.c.b16 %v5269, %v5267
      %v5302 = vpack.c.b16 %v5270, %v5268
      %5335 = vmatprep.subr.bf16.mxu0 %v5272
      %5336 = vmatpush1.bf16.msra.mxu0 %v5271
      %5337 = vmatprep.subr.bf16.mxu0 %v5274
      %5338 = vmatpush1.bf16.msra.mxu0 %v5273
      %5339 = vmatprep.subr.bf16.mxu0 %v5276
      %5340 = vmatpush1.bf16.msra.mxu0 %v5275
      %5341 = vmatprep.subr.bf16.mxu0 %v5278
      %5342 = vmatpush1.bf16.msra.mxu0 %v5277
      %5343 = vmatprep.subr.bf16.mxu0 %v5280
      %5344 = vmatpush1.bf16.msra.mxu0 %v5279
      %5345 = vmatprep.subr.bf16.mxu0 %v5282
      %5346 = vmatpush1.bf16.msra.mxu0 %v5281
      %5347 = vmatprep.subr.bf16.mxu0 %v5284
      %5348 = vmatpush1.bf16.msra.mxu0 %v5283
      %5349 = vmatprep.subr.bf16.mxu0 %v5286
      %5350 = vmatpush1.bf16.msra.mxu0 %v5285
      %5351 = vmatprep.subr.bf16.mxu0 %v5288
      %5352 = vmatpush1.bf16.msra.mxu0 %v5287
      %5353 = vmatprep.subr.bf16.mxu0 %v5290
      %5354 = vmatpush1.bf16.msra.mxu0 %v5289
      %5355 = vmatprep.subr.bf16.mxu0 %v5292
      %5356 = vmatpush1.bf16.msra.mxu0 %v5291
      %5357 = vmatprep.subr.bf16.mxu0 %v5294
      %5358 = vmatpush1.bf16.msra.mxu0 %v5293
      %5359 = vmatprep.subr.bf16.mxu0 %v5296
      %5360 = vmatpush1.bf16.msra.mxu0 %v5295
      %5361 = vmatprep.subr.bf16.mxu0 %v5298
      %5362 = vmatpush1.bf16.msra.mxu0 %v5297
      %5363 = vmatprep.subr.bf16.mxu0 %v5300
      %5364 = vmatpush1.bf16.msra.mxu0 %v5299
      %5365 = vmatprep.subr.bf16.mxu0 %v5302
      %5366 = vmatpush1.bf16.msra.mxu0 %v5301
      %5367 = vmatprep.mubr.bf16.mxu0 %v5142
      %5368 = vmatmul.mubr.bf16.gmra.mrb[0].mxu0 %v5141
      %v5369 = vpop.f32.mrb[0].mxu0
      %v5370 = vadd.f32 0.0, %v5369
      %v5371 = vpop.f32.mrb[0].mxu0
      %v5372 = vadd.f32 0.0, %v5371
      %v5373 = vpop.f32.mrb[0].mxu0
      %v5374 = vpop.f32.mrb[0].mxu0
      %5375 = vdwg.mxu0
      %v5376 = vsel %vm4725, %v5370, 0.0
      %v5377 = vrot.slane %v5376, 4
      %v5378 = vadd.f32 %v5376, %v5377
      %v5379 = vrot.slane %v5378, 2
      %v5380 = vadd.f32 %v5378, %v5379
      %v5381 = vrot.slane %v5380, 1
      %v5382 = vadd.f32 %v5380, %v5381
      %v5383 = vsel %vm4725, %v5372, 0.0
      %v5384 = vrot.slane %v5383, 4
      %v5385 = vadd.f32 %v5383, %v5384
      %v5386 = vrot.slane %v5385, 2
      %v5387 = vadd.f32 %v5385, %v5386
      %v5388 = vrot.slane %v5387, 1
      %v5389 = vadd.f32 %v5387, %v5388
      %v5390 = vmul.f32 %v5382, %v4740
      %v5391 = vmul.f32 %v5389, %v4740
      %v5392 = vsub.f32 %v5370, %v5390
      %v5393 = vsub.f32 %v5372, %v5391
      %v5394 = vmul.f32 %v5392, %v5392
      %v5395 = vmul.f32 %v5393, %v5393
      %v5396 = vsel %vm4725, %v5394, 0.0
      %v5397 = vrot.slane %v5396, 4
      %v5398 = vadd.f32 %v5396, %v5397
      %v5399 = vrot.slane %v5398, 2
      %v5400 = vadd.f32 %v5398, %v5399
      %v5401 = vrot.slane %v5400, 1
      %v5402 = vadd.f32 %v5400, %v5401
      %v5403 = vsel %vm4725, %v5395, 0.0
      %v5404 = vrot.slane %v5403, 4
      %v5405 = vadd.f32 %v5403, %v5404
      %v5406 = vrot.slane %v5405, 2
      %v5407 = vadd.f32 %v5405, %v5406
      %v5408 = vrot.slane %v5407, 1
      %v5409 = vadd.f32 %v5407, %v5408
      %v5410 = vmul.f32 %v5402, %v4740
      %v5411 = vmul.f32 %v5409, %v4740
      %v5412 = vadd.f32 %v5410, 1e-05
      %v5413 = vadd.f32 %v5411, 1e-05
      %v5414 = vrsqrt.pop %v5412
      %v5415 = vrsqrt.pop %v5413
      %v5416 = vmul.f32 %v5392, %v5414
      %v5417 = vmul.f32 %v5393, %v5415
      %v5418 = vadd.f32 %v5416, %v5135
      %v5419 = vadd.f32 %v5417, %v5137
      %v5420 = vmax.f32 %v5418, 0.0
      %v5421 = vmax.f32 %v5419, 0.0
      %v5422 = vsel %vm4725, %v5420, 0.0
      %v5423 = vrot.slane %v5422, 4
      %v5424 = vadd.f32 %v5422, %v5423
      %v5425 = vrot.slane %v5424, 2
      %v5426 = vadd.f32 %v5424, %v5425
      %v5427 = vrot.slane %v5426, 1
      %v5428 = vadd.f32 %v5426, %v5427
      %v5429 = vsel %vm4725, %v5421, 0.0
      %v5430 = vrot.slane %v5429, 4
      %v5431 = vadd.f32 %v5429, %v5430
      %v5432 = vrot.slane %v5431, 2
      %v5433 = vadd.f32 %v5431, %v5432
      %v5434 = vrot.slane %v5433, 1
      %v5435 = vadd.f32 %v5433, %v5434
      %v5436 = vmul.f32 %v5428, %v4740
      %v5437 = vmul.f32 %v5435, %v4740
      %v5438 = vpack.c.bf16 %v5436, %v5436
      %v5439 = vpack.c.bf16 %v5437, %v5437
      %v5440 = vld [vmem:[%s22] sm:$0xf]
      %v5441 = vld [vmem:[%s22 + $0x4] sm:$0xf]
      %v5442 = vld [vmem:[%s22 + $0x8] sm:$0xf]
      %v5443 = vld [vmem:[%s22 + $0xc] sm:$0xf]
      %v5444 = vld [vmem:[%s22 + $0x10] sm:$0xf]
      %v5445 = vld [vmem:[%s22 + $0x14] sm:$0xf]
      %v5446 = vld [vmem:[%s22 + $0x18] sm:$0xf]
      %v5447 = vld [vmem:[%s22 + $0x1c] sm:$0xf]
      %v5448 = vld [vmem:[%s22 + $0x20] sm:$0xf]
      %v5449 = vld [vmem:[%s22 + $0x24] sm:$0xf]
      %v5450 = vld [vmem:[%s22 + $0x28] sm:$0xf]
      %v5451 = vld [vmem:[%s22 + $0x2c] sm:$0xf]
      %v5452 = vld [vmem:[%s22 + $0x30] sm:$0xf]
      %v5453 = vld [vmem:[%s22 + $0x34] sm:$0xf]
      %v5454 = vld [vmem:[%s22 + $0x38] sm:$0xf]
      %v5455 = vld [vmem:[%s22 + $0x3c] sm:$0xf]
      %v5456 = vld [vmem:[%s22 + $0x40] sm:$0xf]
      %v5457 = vld [vmem:[%s22 + $0x44] sm:$0xf]
      %v5458 = vld [vmem:[%s22 + $0x48] sm:$0xf]
      %v5459 = vld [vmem:[%s22 + $0x4c] sm:$0xf]
      %v5460 = vld [vmem:[%s22 + $0x50] sm:$0xf]
      %v5461 = vld [vmem:[%s22 + $0x54] sm:$0xf]
      %v5462 = vld [vmem:[%s22 + $0x58] sm:$0xf]
      %v5463 = vld [vmem:[%s22 + $0x5c] sm:$0xf]
      %v5464 = vld [vmem:[%s22 + $0x60] sm:$0xf]
      %v5465 = vld [vmem:[%s22 + $0x64] sm:$0xf]
      %v5466 = vld [vmem:[%s22 + $0x68] sm:$0xf]
      %v5467 = vld [vmem:[%s22 + $0x6c] sm:$0xf]
      %v5468 = vld [vmem:[%s22 + $0x70] sm:$0xf]
      %v5469 = vld [vmem:[%s22 + $0x74] sm:$0xf]
      %v5470 = vld [vmem:[%s22 + $0x78] sm:$0xf]
      %v5471 = vld [vmem:[%s22 + $0x7c] sm:$0xf]
      %v5472 = vld [vmem:[%s23] sm:$0x1]
      %v5505 = vunpack.c.l.b16 %v5440
      %v5506 = vunpack.c.l.b16 %v5441
      %v5507 = vunpack.c.l.b16 %v5442
      %v5508 = vunpack.c.l.b16 %v5443
      %v5509 = vunpack.c.l.b16 %v5444
      %v5510 = vunpack.c.l.b16 %v5445
      %v5511 = vunpack.c.l.b16 %v5446
      %v5512 = vunpack.c.l.b16 %v5447
      %v5513 = vunpack.c.l.b16 %v5448
      %v5514 = vunpack.c.l.b16 %v5449
      %v5515 = vunpack.c.l.b16 %v5450
      %v5516 = vunpack.c.l.b16 %v5451
      %v5517 = vunpack.c.l.b16 %v5452
      %v5518 = vunpack.c.l.b16 %v5453
      %v5519 = vunpack.c.l.b16 %v5454
      %v5520 = vunpack.c.l.b16 %v5455
      %v5521 = vunpack.c.l.b16 %v5456
      %v5522 = vunpack.c.l.b16 %v5457
      %v5523 = vunpack.c.l.b16 %v5458
      %v5524 = vunpack.c.l.b16 %v5459
      %v5525 = vunpack.c.l.b16 %v5460
      %v5526 = vunpack.c.l.b16 %v5461
      %v5527 = vunpack.c.l.b16 %v5462
      %v5528 = vunpack.c.l.b16 %v5463
      %v5529 = vunpack.c.l.b16 %v5464
      %v5530 = vunpack.c.l.b16 %v5465
      %v5531 = vunpack.c.l.b16 %v5466
      %v5532 = vunpack.c.l.b16 %v5467
      %v5533 = vunpack.c.l.b16 %v5468
      %v5534 = vunpack.c.l.b16 %v5469
      %v5535 = vunpack.c.l.b16 %v5470
      %v5536 = vunpack.c.l.b16 %v5471
      %v5537 = vpack.c.b16 %v5506, %v5505
      %v5538 = vpack.c.b16 %v5508, %v5507
      %v5539 = vpack.c.b16 %v5510, %v5509
      %v5540 = vpack.c.b16 %v5512, %v5511
      %v5541 = vpack.c.b16 %v5514, %v5513
      %v5542 = vpack.c.b16 %v5516, %v5515
      %v5543 = vpack.c.b16 %v5518, %v5517
      %v5544 = vpack.c.b16 %v5520, %v5519
      %v5545 = vpack.c.b16 %v5522, %v5521
      %v5546 = vpack.c.b16 %v5524, %v5523
      %v5547 = vpack.c.b16 %v5526, %v5525
      %v5548 = vpack.c.b16 %v5528, %v5527
      %v5549 = vpack.c.b16 %v5530, %v5529
      %v5550 = vpack.c.b16 %v5532, %v5531
      %v5551 = vpack.c.b16 %v5534, %v5533
      %v5552 = vpack.c.b16 %v5536, %v5535
      %5569 = vmatprep.subr.bf16.mxu0 0
      %5570 = vmatpush1.bf16.msra.mxu0 %v5537
      %5571 = vmatprep.subr.bf16.mxu0 0
      %5572 = vmatpush1.bf16.msra.mxu0 %v5538
      %5573 = vmatprep.subr.bf16.mxu0 0
      %5574 = vmatpush1.bf16.msra.mxu0 %v5539
      %5575 = vmatprep.subr.bf16.mxu0 0
      %5576 = vmatpush1.bf16.msra.mxu0 %v5540
      %5577 = vmatprep.subr.bf16.mxu0 0
      %5578 = vmatpush1.bf16.msra.mxu0 %v5541
      %5579 = vmatprep.subr.bf16.mxu0 0
      %5580 = vmatpush1.bf16.msra.mxu0 %v5542
      %5581 = vmatprep.subr.bf16.mxu0 0
      %5582 = vmatpush1.bf16.msra.mxu0 %v5543
      %5583 = vmatprep.subr.bf16.mxu0 0
      %5584 = vmatpush1.bf16.msra.mxu0 %v5544
      %5585 = vmatprep.subr.bf16.mxu0 0
      %5586 = vmatpush1.bf16.msra.mxu0 %v5545
      %5587 = vmatprep.subr.bf16.mxu0 0
      %5588 = vmatpush1.bf16.msra.mxu0 %v5546
      %5589 = vmatprep.subr.bf16.mxu0 0
      %5590 = vmatpush1.bf16.msra.mxu0 %v5547
      %5591 = vmatprep.subr.bf16.mxu0 0
      %5592 = vmatpush1.bf16.msra.mxu0 %v5548
      %5593 = vmatprep.subr.bf16.mxu0 0
      %5594 = vmatpush1.bf16.msra.mxu0 %v5549
      %5595 = vmatprep.subr.bf16.mxu0 0
      %5596 = vmatpush1.bf16.msra.mxu0 %v5550
      %5597 = vmatprep.subr.bf16.mxu0 0
      %5598 = vmatpush1.bf16.msra.mxu0 %v5551
      %5599 = vmatprep.subr.bf16.mxu0 0
      %5600 = vmatpush1.bf16.msra.mxu0 %v5552
      %5601 = vmatprep.mubr.bf16.mxu0 %v5439
      %5602 = vmatmul.mubr.bf16.gmra.mrb[0].mxu0 %v5438
      %v5603 = vpop.f32.mrb[0].mxu0
      %v5604 = vadd.f32 %v5472, %v5603
      %v5605 = vpop.f32.mrb[0].mxu0
      %v5606 = vpop.f32.mrb[0].mxu0
      %v5607 = vpop.f32.mrb[0].mxu0
      %5608 = vdwg.mxu0
      %vm5609 = vcmask 516096
      %5610 = vst.msk [vmem:[%s733] sm:$0x1] %vm5609, %v5604
      %p5611 = scmp.lt.s32.totalorder %s35, 1
      %s5612 = scalar_select %p5611, %s35, 1
      %s5613 = scalar_lea.vmem %s24, %s5612
      // Predicated region
      $region117: #{soft_sensor_forward.1} parent=115 // pred_check
        %p5614 = pneg %p562
      $region118: #{soft_sensor_forward.1} parent=115 // pred_check_branch
        %5616 = sbr.rel (%p5614) target = $region120
      $region119: #{soft_sensor_forward.1} parent=115 // pred_region
        _
      $region120: #{soft_sensor_forward.1} parent=115 // pred_fallthru
        _
    $region116: #{soft_sensor_forward.1} parent=5 // pred_fallthru
      _
    %p5617 = scmp.le.s32.totalorder 2, %s30
    // Predicated region
    $region121: #{soft_sensor_forward.1} parent=5 // pred_check
      %p5618 = pneg %p5617
    $region122: #{soft_sensor_forward.1} parent=5 // pred_check_branch
      %5620 = sbr.rel (%p5618) target = $region124
    $region123: #{soft_sensor_forward.1} parent=5 // pred_region
      %s5621 = ssub.s32 %s30, 2
      // Predicated region
      $region125: #{soft_sensor_forward.1} parent=123 // pred_check
        %p5622 = pneg %p568
      $region126: #{soft_sensor_forward.1} parent=123 // pred_check_branch
        %5624 = sbr.rel (%p5622) target = $region128
      $region127: #{soft_sensor_forward.1} parent=123 // pred_region
        %p5625 = scmp.lt.s32.totalorder %s36, 1
        %s5626 = scalar_select %p5625, %s36, 1
        %s5627 = scalar_lea.vmem %s24, %s5626
      $region128: #{soft_sensor_forward.1} parent=123 // pred_fallthru
        _
    $region124: #{soft_sensor_forward.1} parent=5 // pred_fallthru
      _
  $region6: #{soft_sensor_forward.1} parent=0 // loop_footer
    %s34 = sadd.s32 1, %s30
  $region7: #{soft_sensor_forward.1} parent=0 // loop_footer_branch
    %29 = sbr.rel target = $region3
  $region8: #{soft_sensor_forward.1} parent=0 // loop_exit
    _

</llo_original>
